<compile_context>
chip_gen: v7x
topology: tpu7x:2x2x1
jax: 0.10.0
libtpu: 0.0.40
codegen_flags: <defaults>
</compile_context>

<pallas_src>
import functools

import jax
import jax.numpy as jnp
from jax.experimental import pallas as pl


# ----------------------------------------------------------------------------
# Single fused kernel: GRU recurrence + actor + critic + argmax/log-prob.
# ----------------------------------------------------------------------------
def policy_kernel(obs_ref, h0_ref, wih_ref, whh_ref, bih_ref, bhh_ref,
                  wa_h_ref, wa_e_ref, wa_coord_ref, ba_ref,
                  wc_h_ref, wc_e_ref, wc_coord_ref, bc_ref,
                  value_ref, action_ref, alp_ref,
                  *, I0, I1, H, W, C):
    T, N, D = obs_ref.shape
    IH = I0 * H
    A = ba_ref.shape[-1]

    obs = obs_ref[...]                       # (T, N, D) — tiny, load once
    h = h0_ref[0]                            # (N, IH) stacked hidden (stream i at cols i*H:(i+1)*H)
    wih = wih_ref[...]                       # (I0*W, 3*IH) block-diagonal
    whh = whh_ref[...]                       # (IH, 3*IH)   block-diagonal
    bih = bih_ref[...]                       # (1, 3*IH)
    bhh = bhh_ref[...]                       # (1, 3*IH)
    wa_h = wa_h_ref[...]                     # (IH, A)
    wa_e = wa_e_ref[...]                     # (I1, A)
    wa_coord = wa_coord_ref[...]             # (1, A)
    ba = ba_ref[...]                         # (1, A)
    wc_h = wc_h_ref[...]                     # (IH, 1)  sum over coords of base critic rows
    wc_e = wc_e_ref[...]                     # (I1, 1)
    wc_coord = wc_coord_ref[...]             # (C, 1)
    bc = bc_ref[...]                         # (1, 1)

    ids = jax.lax.broadcasted_iota(jnp.int32, (N, A), 1)

    # T is a small trace-time constant: the loop fully unrolls, every slice and
    # store below uses static offsets, and the per-timestep input projections
    # (no sequential dependency) are free to schedule ahead of the recurrence.
    # TODO(synk): for bit-level f32 parity with PyTorch over long T, consider
    # precision=HIGHEST on the recurrence dot (default MXU f32 passes used here).
    for t in range(T):
        obs_t = obs[t]                               # (N, D)
        x_t = obs_t[:, :I0 * W]                      # (N, I0*W)  stacked per-stream windows
        extra_t = obs_t[:, I0 * W:I0 * W + I1]       # (N, I1)
        coords_t = obs_t[:, D - C:]                  # (N, C)

        # ---- stacked single-layer GRU step for all I0 streams at once ------
        gi = jnp.dot(x_t, wih, preferred_element_type=jnp.float32) + bih   # (N, 3*IH)
        gh = jnp.dot(h, whh, preferred_element_type=jnp.float32) + bhh     # (N, 3*IH)
        r = jax.nn.sigmoid(gi[:, :IH] + gh[:, :IH])
        z = jax.nn.sigmoid(gi[:, IH:2 * IH] + gh[:, IH:2 * IH])
        n = jnp.tanh(gi[:, 2 * IH:] + r * gh[:, 2 * IH:])
        h = (1.0 - z) * n + z * h                    # (N, IH) == concat of per-stream outputs

        # ---- critic: Linear(C*F -> 1) with the replicated base folded out --
        value_ref[t] = (jnp.dot(h, wc_h, preferred_element_type=jnp.float32)
                        + jnp.dot(extra_t, wc_e, preferred_element_type=jnp.float32)
                        + jnp.dot(coords_t, wc_coord, preferred_element_type=jnp.float32)
                        + bc)                        # (N, 1)

        # ---- actor: shared-base logits once, rank-1 coordinate update per c -
        logits_base = (jnp.dot(h, wa_h, preferred_element_type=jnp.float32)
                       + jnp.dot(extra_t, wa_e, preferred_element_type=jnp.float32)
                       + ba)                         # (N, A)
        for c in range(C):
            logits = logits_base + coords_t[:, c:c + 1] * wa_coord          # (N, A)
            m = jnp.max(logits, axis=-1, keepdims=True)
            lse = jnp.log(jnp.sum(jnp.exp(logits - m), axis=-1, keepdims=True))
            # deterministic action = argmax (first-max tie-break, like torch)
            sel = jnp.where(logits == m, ids, jnp.int32(A))
            action_ref[c, t] = jnp.min(sel, axis=-1, keepdims=True)          # (N, 1) int32
            # log-prob at the mode: logits[argmax] - logsumexp = -lse
            alp_ref[c, t] = -lse                                             # (N, 1)


def policy_forward(params, observations, rnn_hidden_states, *, I0, I1, H, W, C):
    T, N, _D = observations.shape
    kernel = functools.partial(policy_kernel, I0=I0, I1=I1, H=H, W=W, C=C)
    return pl.pallas_call(
        kernel,
        out_shape=(jax.ShapeDtypeStruct((T, N, 1), jnp.float32),      # value
                   jax.ShapeDtypeStruct((C, T, N, 1), jnp.int32),     # action
                   jax.ShapeDtypeStruct((C, T, N, 1), jnp.float32)),  # action_log_probs
    )(observations, rnn_hidden_states,
      params["wih_blk"], params["whh_blk"], params["bih_blk"], params["bhh_blk"],
      params["wa_h"], params["wa_e"], params["wa_coord"], params["ba"],
      params["wc_h"], params["wc_e"], params["wc_coord"], params["bc"])


# ----------------------------------------------------------------------------
# Parameter initialization (deterministic, in-script).  Per-stream PyTorch GRU
# weights (gate order r, z, n; U(-1/sqrt(H), 1/sqrt(H))) are assembled into
# block-diagonal stacked matrices so one matmul drives all I0 streams.
# ----------------------------------------------------------------------------
def init_params(key, coord_size, input_size, action_space, hidden_size, window_size):
    I0, I1 = input_size
    H, W, C, A = hidden_size, window_size, coord_size, action_space
    IH = I0 * H
    F = IH + I1 + 1
    bound = 1.0 / (H ** 0.5)
    ks = jax.random.split(key, 4 * I0 + 2)

    def u(k, shape):
        return jax.random.uniform(k, shape, jnp.float32, -bound, bound)

    wih_blk = jnp.zeros((I0 * W, 3 * IH), jnp.float32)
    whh_blk = jnp.zeros((IH, 3 * IH), jnp.float32)
    bih_blk = jnp.zeros((1, 3 * IH), jnp.float32)
    bhh_blk = jnp.zeros((1, 3 * IH), jnp.float32)
    ki = 0
    for i in range(I0):
        wih_i = u(ks[ki], (3 * H, W)); ki += 1     # PyTorch weight_ih_l0: (3H, W)
        whh_i = u(ks[ki], (3 * H, H)); ki += 1     # weight_hh_l0: (3H, H)
        bih_i = u(ks[ki], (3 * H,)); ki += 1
        bhh_i = u(ks[ki], (3 * H,)); ki += 1
        for g in range(3):  # gate order r, z, n
            col = slice(g * IH + i * H, g * IH + (i + 1) * H)
            wih_blk = wih_blk.at[i * W:(i + 1) * W, col].set(wih_i[g * H:(g + 1) * H, :].T)
            whh_blk = whh_blk.at[i * H:(i + 1) * H, col].set(whh_i[g * H:(g + 1) * H, :].T)
            bih_blk = bih_blk.at[0, col].set(bih_i[g * H:(g + 1) * H])
            bhh_blk = bhh_blk.at[0, col].set(bhh_i[g * H:(g + 1) * H])

    # Actor (Categorical) linear: F -> A, shared across coordinates.
    wa_full_t = 0.01 * jax.random.normal(ks[ki], (F, A), jnp.float32); ki += 1
    # Critic: orthogonal (1, C*F) weight == unit-norm row; zero bias.
    v = jax.random.normal(ks[ki], (C * F,), jnp.float32)
    v = v / jnp.linalg.norm(v)
    wcm = v.reshape(C, F)                       # row c = critic weights for coord c's features
    wc_base_sum = jnp.sum(wcm[:, :F - 1], axis=0)

    return {
        "wih_blk": wih_blk, "whh_blk": whh_blk, "bih_blk": bih_blk, "bhh_blk": bhh_blk,
        "wa_h": wa_full_t[:IH],                         # (IH, A)
        "wa_e": wa_full_t[IH:IH + I1],                  # (I1, A)
        "wa_coord": wa_full_t[F - 1:F],                 # (1, A)
        "ba": jnp.zeros((1, A), jnp.float32),
        "wc_h": wc_base_sum[:IH].reshape(IH, 1),        # (IH, 1)
        "wc_e": wc_base_sum[IH:].reshape(I1, 1),        # (I1, 1)
        "wc_coord": wcm[:, F - 1].reshape(C, 1),        # (C, 1)
        "bc": jnp.zeros((1, 1), jnp.float32),
    }


# ----------------------------------------------------------------------------
# Policy.act (deterministic path).
# ----------------------------------------------------------------------------
@functools.partial(jax.jit, static_argnames=("coord_size", "input_size",
                                             "hidden_size", "window_size"))
def policy_act(params, observations, rnn_hidden_states, *, coord_size, input_size,
               hidden_size, window_size):
    I0, I1 = input_size
    T, N, _D = observations.shape
    value_tn, action_ctn, alp_ctn = policy_forward(
        params, observations, rnn_hidden_states,
        I0=I0, I1=I1, H=hidden_size, W=window_size, C=coord_size)
    # Contiguous leading-dim merges only (metadata-level reshapes).
    value = value_tn.reshape(T * N, 1)
    action = action_ctn.reshape(coord_size, T * N, 1)
    action_log_probs = alp_ctn.reshape(coord_size, T * N, 1)
    # TODO(synk): stochastic distribution.sample() path (deterministic=False) not implemented.
    # BasicNet returns the *original* rnn_hidden_states (as in the PyTorch code).
    return value, action, action_log_probs, rnn_hidden_states


if __name__ == "__main__":
    coord_size = 3
    input_size = (2, 3)
    action_space = 5
    hidden_size = 32
    window_size = 4
    T, N = 6, 2
    D = input_size[0] * window_size + input_size[1] + coord_size  # 14

    key = jax.random.PRNGKey(0)
    k_obs, k_hid, k_par = jax.random.split(key, 3)
    observations = jax.random.normal(k_obs, (T, N, D), jnp.float32)
    rnn_hidden_states = jax.random.normal(
        k_hid, (1, N, input_size[0] * hidden_size), jnp.float32)
    params = init_params(k_par, coord_size, input_size, action_space,
                         hidden_size, window_size)

    value, action, action_log_probs, rnn_out = policy_act(
        params, observations, rnn_hidden_states,
        coord_size=coord_size, input_size=input_size,
        hidden_size=hidden_size, window_size=window_size)

    jax.block_until_ready((value, action, action_log_probs, rnn_out))
    assert value.shape == (T * N, 1)
    assert action.shape == (coord_size, T * N, 1)
    assert action_log_probs.shape == (coord_size, T * N, 1)
    assert rnn_out.shape == rnn_hidden_states.shape
    print("KERNEL_OK")
</pallas_src>

<mosaic_0001>
module attributes {stable_mosaic.version = 11 : i64} {
  func.func @policy_kernel(%arg0: memref<6x2x14xf32, #tpu.memory_space<vmem>>, %arg1: memref<1x2x64xf32, #tpu.memory_space<vmem>>, %arg2: memref<8x192xf32, #tpu.memory_space<vmem>>, %arg3: memref<64x192xf32, #tpu.memory_space<vmem>>, %arg4: memref<1x192xf32, #tpu.memory_space<vmem>>, %arg5: memref<1x192xf32, #tpu.memory_space<vmem>>, %arg6: memref<64x5xf32, #tpu.memory_space<vmem>>, %arg7: memref<3x5xf32, #tpu.memory_space<vmem>>, %arg8: memref<1x5xf32, #tpu.memory_space<vmem>>, %arg9: memref<1x5xf32, #tpu.memory_space<vmem>>, %arg10: memref<64x1xf32, #tpu.memory_space<vmem>>, %arg11: memref<3x1xf32, #tpu.memory_space<vmem>>, %arg12: memref<3x1xf32, #tpu.memory_space<vmem>>, %arg13: memref<1x1xf32, #tpu.memory_space<vmem>>, %arg14: memref<6x2x1xf32, #tpu.memory_space<vmem>>, %arg15: memref<3x6x2x1xi32, #tpu.memory_space<vmem>>, %arg16: memref<3x6x2x1xf32, #tpu.memory_space<vmem>>) attributes {dimension_semantics = [], scalar_prefetch = 0 : i64, scratch_operands = 0 : i64, tpu.core_type = #tpu.core_type<tc>} {
    %c0 = arith.constant 0 : index
    %c0_0 = arith.constant 0 : index
    %c0_1 = arith.constant 0 : index
    %0 = vector.load %arg0[%c0, %c0_0, %c0_1] : memref<6x2x14xf32, #tpu.memory_space<vmem>>, vector<6x2x14xf32>
    %c0_2 = arith.constant 0 : index
    %c0_3 = arith.constant 0 : index
    %c0_4 = arith.constant 0 : index
    %1 = vector.load %arg1[%c0_2, %c0_3, %c0_4] : memref<1x2x64xf32, #tpu.memory_space<vmem>>, vector<1x2x64xf32>
    %2 = vector.shape_cast %1 : vector<1x2x64xf32> to vector<2x64xf32>
    %c0_5 = arith.constant 0 : index
    %c0_6 = arith.constant 0 : index
    %3 = vector.load %arg2[%c0_5, %c0_6] : memref<8x192xf32, #tpu.memory_space<vmem>>, vector<8x192xf32>
    %c0_7 = arith.constant 0 : index
    %c0_8 = arith.constant 0 : index
    %4 = vector.load %arg3[%c0_7, %c0_8] : memref<64x192xf32, #tpu.memory_space<vmem>>, vector<64x192xf32>
    %c0_9 = arith.constant 0 : index
    %c0_10 = arith.constant 0 : index
    %5 = vector.load %arg4[%c0_9, %c0_10] : memref<1x192xf32, #tpu.memory_space<vmem>>, vector<1x192xf32>
    %c0_11 = arith.constant 0 : index
    %c0_12 = arith.constant 0 : index
    %6 = vector.load %arg5[%c0_11, %c0_12] : memref<1x192xf32, #tpu.memory_space<vmem>>, vector<1x192xf32>
    %c0_13 = arith.constant 0 : index
    %c0_14 = arith.constant 0 : index
    %7 = vector.load %arg6[%c0_13, %c0_14] : memref<64x5xf32, #tpu.memory_space<vmem>>, vector<64x5xf32>
    %c0_15 = arith.constant 0 : index
    %c0_16 = arith.constant 0 : index
    %8 = vector.load %arg7[%c0_15, %c0_16] : memref<3x5xf32, #tpu.memory_space<vmem>>, vector<3x5xf32>
    %c0_17 = arith.constant 0 : index
    %c0_18 = arith.constant 0 : index
    %9 = vector.load %arg8[%c0_17, %c0_18] : memref<1x5xf32, #tpu.memory_space<vmem>>, vector<1x5xf32>
    %c0_19 = arith.constant 0 : index
    %c0_20 = arith.constant 0 : index
    %10 = vector.load %arg9[%c0_19, %c0_20] : memref<1x5xf32, #tpu.memory_space<vmem>>, vector<1x5xf32>
    %c0_21 = arith.constant 0 : index
    %c0_22 = arith.constant 0 : index
    %11 = vector.load %arg10[%c0_21, %c0_22] : memref<64x1xf32, #tpu.memory_space<vmem>>, vector<64x1xf32>
    %c0_23 = arith.constant 0 : index
    %c0_24 = arith.constant 0 : index
    %12 = vector.load %arg11[%c0_23, %c0_24] : memref<3x1xf32, #tpu.memory_space<vmem>>, vector<3x1xf32>
    %c0_25 = arith.constant 0 : index
    %c0_26 = arith.constant 0 : index
    %13 = vector.load %arg12[%c0_25, %c0_26] : memref<3x1xf32, #tpu.memory_space<vmem>>, vector<3x1xf32>
    %c0_27 = arith.constant 0 : index
    %c0_28 = arith.constant 0 : index
    %14 = vector.load %arg13[%c0_27, %c0_28] : memref<1x1xf32, #tpu.memory_space<vmem>>, vector<1x1xf32>
    %15 = tpu.iota {dimensions = array<i32: 1>} : vector<2x5xi32>
    %16 = vector.extract_strided_slice %0 {offsets = [0, 0, 0], sizes = [1, 2, 14], strides = [1, 1, 1]} : vector<6x2x14xf32> to vector<1x2x14xf32>
    %17 = vector.shape_cast %16 : vector<1x2x14xf32> to vector<2x14xf32>
    %18 = vector.extract_strided_slice %17 {offsets = [0, 0], sizes = [2, 8], strides = [1, 1]} : vector<2x14xf32> to vector<2x8xf32>
    %19 = vector.extract_strided_slice %17 {offsets = [0, 8], sizes = [2, 3], strides = [1, 1]} : vector<2x14xf32> to vector<2x3xf32>
    %20 = vector.extract_strided_slice %17 {offsets = [0, 11], sizes = [2, 3], strides = [1, 1]} : vector<2x14xf32> to vector<2x3xf32>
    %cst = arith.constant dense<0.000000e+00> : vector<2x192xf32>
    %21 = tpu.matmul %18, %3, %cst {dimension_numbers = #tpu.dot_dimension_numbers<[1], [0], [0], [1], [0, 0, 1, 1], [], []>} : vector<2x8xf32>, vector<8x192xf32>, vector<2x192xf32> -> vector<2x192xf32>
    %22 = vector.broadcast %5 : vector<1x192xf32> to vector<2x192xf32>
    %23 = arith.addf %21, %22 : vector<2x192xf32>
    %cst_29 = arith.constant dense<0.000000e+00> : vector<2x192xf32>
    %24 = tpu.matmul %2, %4, %cst_29 {dimension_numbers = #tpu.dot_dimension_numbers<[1], [0], [0], [1], [0, 0, 1, 1], [], []>} : vector<2x64xf32>, vector<64x192xf32>, vector<2x192xf32> -> vector<2x192xf32>
    %25 = vector.broadcast %6 : vector<1x192xf32> to vector<2x192xf32>
    %26 = arith.addf %24, %25 : vector<2x192xf32>
    %27 = vector.extract_strided_slice %23 {offsets = [0, 0], sizes = [2, 64], strides = [1, 1]} : vector<2x192xf32> to vector<2x64xf32>
    %28 = vector.extract_strided_slice %26 {offsets = [0, 0], sizes = [2, 64], strides = [1, 1]} : vector<2x192xf32> to vector<2x64xf32>
    %29 = arith.addf %27, %28 : vector<2x64xf32>
    %30 = arith.negf %29 : vector<2x64xf32>
    %31 = math.exp %30 : vector<2x64xf32>
    %cst_30 = arith.constant 1.000000e+00 : f32
    %32 = vector.broadcast %cst_30 : f32 to vector<2x64xf32>
    %33 = arith.addf %32, %31 : vector<2x64xf32>
    %34 = arith.divf %32, %33 : vector<2x64xf32>
    %35 = vector.extract_strided_slice %23 {offsets = [0, 64], sizes = [2, 64], strides = [1, 1]} : vector<2x192xf32> to vector<2x64xf32>
    %36 = vector.extract_strided_slice %26 {offsets = [0, 64], sizes = [2, 64], strides = [1, 1]} : vector<2x192xf32> to vector<2x64xf32>
    %37 = arith.addf %35, %36 : vector<2x64xf32>
    %38 = arith.negf %37 : vector<2x64xf32>
    %39 = math.exp %38 : vector<2x64xf32>
    %cst_31 = arith.constant 1.000000e+00 : f32
    %40 = vector.broadcast %cst_31 : f32 to vector<2x64xf32>
    %41 = arith.addf %40, %39 : vector<2x64xf32>
    %42 = arith.divf %40, %41 : vector<2x64xf32>
    %43 = vector.extract_strided_slice %23 {offsets = [0, 128], sizes = [2, 64], strides = [1, 1]} : vector<2x192xf32> to vector<2x64xf32>
    %44 = vector.extract_strided_slice %26 {offsets = [0, 128], sizes = [2, 64], strides = [1, 1]} : vector<2x192xf32> to vector<2x64xf32>
    %45 = arith.mulf %34, %44 : vector<2x64xf32>
    %46 = arith.addf %43, %45 : vector<2x64xf32>
    %47 = math.tanh %46 : vector<2x64xf32>
    %cst_32 = arith.constant 1.000000e+00 : f32
    %48 = vector.broadcast %cst_32 : f32 to vector<2x64xf32>
    %49 = arith.subf %48, %42 : vector<2x64xf32>
    %50 = arith.mulf %49, %47 : vector<2x64xf32>
    %51 = arith.mulf %42, %2 : vector<2x64xf32>
    %52 = arith.addf %50, %51 : vector<2x64xf32>
    %cst_33 = arith.constant dense<0.000000e+00> : vector<2x1xf32>
    %53 = tpu.matmul %52, %11, %cst_33 {dimension_numbers = #tpu.dot_dimension_numbers<[1], [0], [0], [1], [0, 0, 1, 1], [], []>} : vector<2x64xf32>, vector<64x1xf32>, vector<2x1xf32> -> vector<2x1xf32>
    %cst_34 = arith.constant dense<0.000000e+00> : vector<2x1xf32>
    %54 = tpu.matmul %19, %12, %cst_34 {dimension_numbers = #tpu.dot_dimension_numbers<[1], [0], [0], [1], [0, 0, 1, 1], [], []>} : vector<2x3xf32>, vector<3x1xf32>, vector<2x1xf32> -> vector<2x1xf32>
    %55 = arith.addf %53, %54 : vector<2x1xf32>
    %cst_35 = arith.constant dense<0.000000e+00> : vector<2x1xf32>
    %56 = tpu.matmul %20, %13, %cst_35 {dimension_numbers = #tpu.dot_dimension_numbers<[1], [0], [0], [1], [0, 0, 1, 1], [], []>} : vector<2x3xf32>, vector<3x1xf32>, vector<2x1xf32> -> vector<2x1xf32>
    %57 = arith.addf %55, %56 : vector<2x1xf32>
    %58 = vector.broadcast %14 : vector<1x1xf32> to vector<2x1xf32>
    %59 = arith.addf %57, %58 : vector<2x1xf32>
    %c0_36 = arith.constant 0 : index
    %c0_37 = arith.constant 0 : index
    %c0_38 = arith.constant 0 : index
    %60 = vector.load %arg14[%c0_36, %c0_37, %c0_38] : memref<6x2x1xf32, #tpu.memory_space<vmem>>, vector<1x2x1xf32>
    %61 = vector.shape_cast %60 : vector<1x2x1xf32> to vector<2x1xf32>
    %62 = vector.shape_cast %59 : vector<2x1xf32> to vector<1x2x1xf32>
    tpu.vector_store %arg14[%c0_36, %c0_37, %c0_38], %62 {strides = array<i32>} : memref<6x2x1xf32, #tpu.memory_space<vmem>>, vector<1x2x1xf32>,
    %cst_39 = arith.constant dense<0.000000e+00> : vector<2x5xf32>
    %63 = tpu.matmul %52, %7, %cst_39 {dimension_numbers = #tpu.dot_dimension_numbers<[1], [0], [0], [1], [0, 0, 1, 1], [], []>} : vector<2x64xf32>, vector<64x5xf32>, vector<2x5xf32> -> vector<2x5xf32>
    %cst_40 = arith.constant dense<0.000000e+00> : vector<2x5xf32>
    %64 = tpu.matmul %19, %8, %cst_40 {dimension_numbers = #tpu.dot_dimension_numbers<[1], [0], [0], [1], [0, 0, 1, 1], [], []>} : vector<2x3xf32>, vector<3x5xf32>, vector<2x5xf32> -> vector<2x5xf32>
    %65 = arith.addf %63, %64 : vector<2x5xf32>
    %66 = vector.broadcast %10 : vector<1x5xf32> to vector<2x5xf32>
    %67 = arith.addf %65, %66 : vector<2x5xf32>
    %68 = vector.extract_strided_slice %20 {offsets = [0, 0], sizes = [2, 1], strides = [1, 1]} : vector<2x3xf32> to vector<2x1xf32>
    %69 = vector.broadcast %68 : vector<2x1xf32> to vector<2x5xf32>
    %70 = vector.broadcast %9 : vector<1x5xf32> to vector<2x5xf32>
    %71 = arith.mulf %69, %70 : vector<2x5xf32>
    %72 = arith.addf %67, %71 : vector<2x5xf32>
    %cst_41 = arith.constant dense<0xFF800000> : vector<2xf32>
    %73 = vector.multi_reduction <maximumf>, %72, %cst_41 [1] : vector<2x5xf32> to vector<2xf32>
    %74 = vector.shape_cast %73 : vector<2xf32> to vector<2x1xf32>
    %75 = vector.broadcast %74 : vector<2x1xf32> to vector<2x5xf32>
    %76 = arith.subf %72, %75 : vector<2x5xf32>
    %77 = math.exp %76 : vector<2x5xf32>
    %cst_42 = arith.constant dense<0.000000e+00> : vector<2xf32>
    %78 = vector.multi_reduction <add>, %77, %cst_42 [1] : vector<2x5xf32> to vector<2xf32>
    %79 = vector.shape_cast %78 : vector<2xf32> to vector<2x1xf32>
    %80 = math.log %79 : vector<2x1xf32>
    %81 = vector.broadcast %74 : vector<2x1xf32> to vector<2x5xf32>
    %82 = arith.cmpf oeq, %72, %81 : vector<2x5xf32>
    %c5_i32 = arith.constant 5 : i32
    %83 = vector.broadcast %c5_i32 : i32 to vector<2x5xi32>
    %84 = arith.select %82, %15, %83 : vector<2x5xi1>, vector<2x5xi32>
    %cst_43 = arith.constant dense<2147483647> : vector<2xi32>
    %85 = vector.multi_reduction <minsi>, %84, %cst_43 [1] : vector<2x5xi32> to vector<2xi32>
    %86 = vector.shape_cast %85 : vector<2xi32> to vector<2x1xi32>
    %c0_44 = arith.constant 0 : index
    %c0_45 = arith.constant 0 : index
    %c0_46 = arith.constant 0 : index
    %c0_47 = arith.constant 0 : index
    %87 = vector.load %arg15[%c0_44, %c0_45, %c0_46, %c0_47] : memref<3x6x2x1xi32, #tpu.memory_space<vmem>>, vector<1x1x2x1xi32>
    %88 = vector.shape_cast %87 : vector<1x1x2x1xi32> to vector<2x1xi32>
    %89 = vector.shape_cast %86 : vector<2x1xi32> to vector<1x1x2x1xi32>
    tpu.vector_store %arg15[%c0_44, %c0_45, %c0_46, %c0_47], %89 {strides = array<i32>} : memref<3x6x2x1xi32, #tpu.memory_space<vmem>>, vector<1x1x2x1xi32>,
    %cst_48 = arith.constant 0.000000e+00 : f32
    %90 = vector.broadcast %cst_48 : f32 to vector<2x1xf32>
    %91 = arith.subf %90, %80 : vector<2x1xf32>
    %c0_49 = arith.constant 0 : index
    %c0_50 = arith.constant 0 : index
    %c0_51 = arith.constant 0 : index
    %c0_52 = arith.constant 0 : index
    %92 = vector.load %arg16[%c0_49, %c0_50, %c0_51, %c0_52] : memref<3x6x2x1xf32, #tpu.memory_space<vmem>>, vector<1x1x2x1xf32>
    %93 = vector.shape_cast %92 : vector<1x1x2x1xf32> to vector<2x1xf32>
    %94 = vector.shape_cast %91 : vector<2x1xf32> to vector<1x1x2x1xf32>
    tpu.vector_store %arg16[%c0_49, %c0_50, %c0_51, %c0_52], %94 {strides = array<i32>} : memref<3x6x2x1xf32, #tpu.memory_space<vmem>>, vector<1x1x2x1xf32>,
    %95 = vector.extract_strided_slice %20 {offsets = [0, 1], sizes = [2, 1], strides = [1, 1]} : vector<2x3xf32> to vector<2x1xf32>
    %96 = vector.broadcast %95 : vector<2x1xf32> to vector<2x5xf32>
    %97 = vector.broadcast %9 : vector<1x5xf32> to vector<2x5xf32>
    %98 = arith.mulf %96, %97 : vector<2x5xf32>
    %99 = arith.addf %67, %98 : vector<2x5xf32>
    %cst_53 = arith.constant dense<0xFF800000> : vector<2xf32>
    %100 = vector.multi_reduction <maximumf>, %99, %cst_53 [1] : vector<2x5xf32> to vector<2xf32>
    %101 = vector.shape_cast %100 : vector<2xf32> to vector<2x1xf32>
    %102 = vector.broadcast %101 : vector<2x1xf32> to vector<2x5xf32>
    %103 = arith.subf %99, %102 : vector<2x5xf32>
    %104 = math.exp %103 : vector<2x5xf32>
    %cst_54 = arith.constant dense<0.000000e+00> : vector<2xf32>
    %105 = vector.multi_reduction <add>, %104, %cst_54 [1] : vector<2x5xf32> to vector<2xf32>
    %106 = vector.shape_cast %105 : vector<2xf32> to vector<2x1xf32>
    %107 = math.log %106 : vector<2x1xf32>
    %108 = vector.broadcast %101 : vector<2x1xf32> to vector<2x5xf32>
    %109 = arith.cmpf oeq, %99, %108 : vector<2x5xf32>
    %c5_i32_55 = arith.constant 5 : i32
    %110 = vector.broadcast %c5_i32_55 : i32 to vector<2x5xi32>
    %111 = arith.select %109, %15, %110 : vector<2x5xi1>, vector<2x5xi32>
    %cst_56 = arith.constant dense<2147483647> : vector<2xi32>
    %112 = vector.multi_reduction <minsi>, %111, %cst_56 [1] : vector<2x5xi32> to vector<2xi32>
    %113 = vector.shape_cast %112 : vector<2xi32> to vector<2x1xi32>
    %c1 = arith.constant 1 : index
    %c0_57 = arith.constant 0 : index
    %c0_58 = arith.constant 0 : index
    %c0_59 = arith.constant 0 : index
    %114 = vector.load %arg15[%c1, %c0_57, %c0_58, %c0_59] : memref<3x6x2x1xi32, #tpu.memory_space<vmem>>, vector<1x1x2x1xi32>
    %115 = vector.shape_cast %114 : vector<1x1x2x1xi32> to vector<2x1xi32>
    %116 = vector.shape_cast %113 : vector<2x1xi32> to vector<1x1x2x1xi32>
    tpu.vector_store %arg15[%c1, %c0_57, %c0_58, %c0_59], %116 {strides = array<i32>} : memref<3x6x2x1xi32, #tpu.memory_space<vmem>>, vector<1x1x2x1xi32>,
    %cst_60 = arith.constant 0.000000e+00 : f32
    %117 = vector.broadcast %cst_60 : f32 to vector<2x1xf32>
    %118 = arith.subf %117, %107 : vector<2x1xf32>
    %c1_61 = arith.constant 1 : index
    %c0_62 = arith.constant 0 : index
    %c0_63 = arith.constant 0 : index
    %c0_64 = arith.constant 0 : index
    %119 = vector.load %arg16[%c1_61, %c0_62, %c0_63, %c0_64] : memref<3x6x2x1xf32, #tpu.memory_space<vmem>>, vector<1x1x2x1xf32>
    %120 = vector.shape_cast %119 : vector<1x1x2x1xf32> to vector<2x1xf32>
    %121 = vector.shape_cast %118 : vector<2x1xf32> to vector<1x1x2x1xf32>
    tpu.vector_store %arg16[%c1_61, %c0_62, %c0_63, %c0_64], %121 {strides = array<i32>} : memref<3x6x2x1xf32, #tpu.memory_space<vmem>>, vector<1x1x2x1xf32>,
    %122 = vector.extract_strided_slice %20 {offsets = [0, 2], sizes = [2, 1], strides = [1, 1]} : vector<2x3xf32> to vector<2x1xf32>
    %123 = vector.broadcast %122 : vector<2x1xf32> to vector<2x5xf32>
    %124 = vector.broadcast %9 : vector<1x5xf32> to vector<2x5xf32>
    %125 = arith.mulf %123, %124 : vector<2x5xf32>
    %126 = arith.addf %67, %125 : vector<2x5xf32>
    %cst_65 = arith.constant dense<0xFF800000> : vector<2xf32>
    %127 = vector.multi_reduction <maximumf>, %126, %cst_65 [1] : vector<2x5xf32> to vector<2xf32>
    %128 = vector.shape_cast %127 : vector<2xf32> to vector<2x1xf32>
    %129 = vector.broadcast %128 : vector<2x1xf32> to vector<2x5xf32>
    %130 = arith.subf %126, %129 : vector<2x5xf32>
    %131 = math.exp %130 : vector<2x5xf32>
    %cst_66 = arith.constant dense<0.000000e+00> : vector<2xf32>
    %132 = vector.multi_reduction <add>, %131, %cst_66 [1] : vector<2x5xf32> to vector<2xf32>
    %133 = vector.shape_cast %132 : vector<2xf32> to vector<2x1xf32>
    %134 = math.log %133 : vector<2x1xf32>
    %135 = vector.broadcast %128 : vector<2x1xf32> to vector<2x5xf32>
    %136 = arith.cmpf oeq, %126, %135 : vector<2x5xf32>
    %c5_i32_67 = arith.constant 5 : i32
    %137 = vector.broadcast %c5_i32_67 : i32 to vector<2x5xi32>
    %138 = arith.select %136, %15, %137 : vector<2x5xi1>, vector<2x5xi32>
    %cst_68 = arith.constant dense<2147483647> : vector<2xi32>
    %139 = vector.multi_reduction <minsi>, %138, %cst_68 [1] : vector<2x5xi32> to vector<2xi32>
    %140 = vector.shape_cast %139 : vector<2xi32> to vector<2x1xi32>
    %c2 = arith.constant 2 : index
    %c0_69 = arith.constant 0 : index
    %c0_70 = arith.constant 0 : index
    %c0_71 = arith.constant 0 : index
    %141 = vector.load %arg15[%c2, %c0_69, %c0_70, %c0_71] : memref<3x6x2x1xi32, #tpu.memory_space<vmem>>, vector<1x1x2x1xi32>
    %142 = vector.shape_cast %141 : vector<1x1x2x1xi32> to vector<2x1xi32>
    %143 = vector.shape_cast %140 : vector<2x1xi32> to vector<1x1x2x1xi32>
    tpu.vector_store %arg15[%c2, %c0_69, %c0_70, %c0_71], %143 {strides = array<i32>} : memref<3x6x2x1xi32, #tpu.memory_space<vmem>>, vector<1x1x2x1xi32>,
    %cst_72 = arith.constant 0.000000e+00 : f32
    %144 = vector.broadcast %cst_72 : f32 to vector<2x1xf32>
    %145 = arith.subf %144, %134 : vector<2x1xf32>
    %c2_73 = arith.constant 2 : index
    %c0_74 = arith.constant 0 : index
    %c0_75 = arith.constant 0 : index
    %c0_76 = arith.constant 0 : index
    %146 = vector.load %arg16[%c2_73, %c0_74, %c0_75, %c0_76] : memref<3x6x2x1xf32, #tpu.memory_space<vmem>>, vector<1x1x2x1xf32>
    %147 = vector.shape_cast %146 : vector<1x1x2x1xf32> to vector<2x1xf32>
    %148 = vector.shape_cast %145 : vector<2x1xf32> to vector<1x1x2x1xf32>
    tpu.vector_store %arg16[%c2_73, %c0_74, %c0_75, %c0_76], %148 {strides = array<i32>} : memref<3x6x2x1xf32, #tpu.memory_space<vmem>>, vector<1x1x2x1xf32>,
    %149 = vector.extract_strided_slice %0 {offsets = [1, 0, 0], sizes = [1, 2, 14], strides = [1, 1, 1]} : vector<6x2x14xf32> to vector<1x2x14xf32>
    %150 = vector.shape_cast %149 : vector<1x2x14xf32> to vector<2x14xf32>
    %151 = vector.extract_strided_slice %150 {offsets = [0, 0], sizes = [2, 8], strides = [1, 1]} : vector<2x14xf32> to vector<2x8xf32>
    %152 = vector.extract_strided_slice %150 {offsets = [0, 8], sizes = [2, 3], strides = [1, 1]} : vector<2x14xf32> to vector<2x3xf32>
    %153 = vector.extract_strided_slice %150 {offsets = [0, 11], sizes = [2, 3], strides = [1, 1]} : vector<2x14xf32> to vector<2x3xf32>
    %cst_77 = arith.constant dense<0.000000e+00> : vector<2x192xf32>
    %154 = tpu.matmul %151, %3, %cst_77 {dimension_numbers = #tpu.dot_dimension_numbers<[1], [0], [0], [1], [0, 0, 1, 1], [], []>} : vector<2x8xf32>, vector<8x192xf32>, vector<2x192xf32> -> vector<2x192xf32>
    %155 = vector.broadcast %5 : vector<1x192xf32> to vector<2x192xf32>
    %156 = arith.addf %154, %155 : vector<2x192xf32>
    %cst_78 = arith.constant dense<0.000000e+00> : vector<2x192xf32>
    %157 = tpu.matmul %52, %4, %cst_78 {dimension_numbers = #tpu.dot_dimension_numbers<[1], [0], [0], [1], [0, 0, 1, 1], [], []>} : vector<2x64xf32>, vector<64x192xf32>, vector<2x192xf32> -> vector<2x192xf32>
    %158 = vector.broadcast %6 : vector<1x192xf32> to vector<2x192xf32>
    %159 = arith.addf %157, %158 : vector<2x192xf32>
    %160 = vector.extract_strided_slice %156 {offsets = [0, 0], sizes = [2, 64], strides = [1, 1]} : vector<2x192xf32> to vector<2x64xf32>
    %161 = vector.extract_strided_slice %159 {offsets = [0, 0], sizes = [2, 64], strides = [1, 1]} : vector<2x192xf32> to vector<2x64xf32>
    %162 = arith.addf %160, %161 : vector<2x64xf32>
    %163 = arith.negf %162 : vector<2x64xf32>
    %164 = math.exp %163 : vector<2x64xf32>
    %cst_79 = arith.constant 1.000000e+00 : f32
    %165 = vector.broadcast %cst_79 : f32 to vector<2x64xf32>
    %166 = arith.addf %165, %164 : vector<2x64xf32>
    %167 = arith.divf %165, %166 : vector<2x64xf32>
    %168 = vector.extract_strided_slice %156 {offsets = [0, 64], sizes = [2, 64], strides = [1, 1]} : vector<2x192xf32> to vector<2x64xf32>
    %169 = vector.extract_strided_slice %159 {offsets = [0, 64], sizes = [2, 64], strides = [1, 1]} : vector<2x192xf32> to vector<2x64xf32>
    %170 = arith.addf %168, %169 : vector<2x64xf32>
    %171 = arith.negf %170 : vector<2x64xf32>
    %172 = math.exp %171 : vector<2x64xf32>
    %cst_80 = arith.constant 1.000000e+00 : f32
    %173 = vector.broadcast %cst_80 : f32 to vector<2x64xf32>
    %174 = arith.addf %173, %172 : vector<2x64xf32>
    %175 = arith.divf %173, %174 : vector<2x64xf32>
    %176 = vector.extract_strided_slice %156 {offsets = [0, 128], sizes = [2, 64], strides = [1, 1]} : vector<2x192xf32> to vector<2x64xf32>
    %177 = vector.extract_strided_slice %159 {offsets = [0, 128], sizes = [2, 64], strides = [1, 1]} : vector<2x192xf32> to vector<2x64xf32>
    %178 = arith.mulf %167, %177 : vector<2x64xf32>
    %179 = arith.addf %176, %178 : vector<2x64xf32>
    %180 = math.tanh %179 : vector<2x64xf32>
    %cst_81 = arith.constant 1.000000e+00 : f32
    %181 = vector.broadcast %cst_81 : f32 to vector<2x64xf32>
    %182 = arith.subf %181, %175 : vector<2x64xf32>
    %183 = arith.mulf %182, %180 : vector<2x64xf32>
    %184 = arith.mulf %175, %52 : vector<2x64xf32>
    %185 = arith.addf %183, %184 : vector<2x64xf32>
    %cst_82 = arith.constant dense<0.000000e+00> : vector<2x1xf32>
    %186 = tpu.matmul %185, %11, %cst_82 {dimension_numbers = #tpu.dot_dimension_numbers<[1], [0], [0], [1], [0, 0, 1, 1], [], []>} : vector<2x64xf32>, vector<64x1xf32>, vector<2x1xf32> -> vector<2x1xf32>
    %cst_83 = arith.constant dense<0.000000e+00> : vector<2x1xf32>
    %187 = tpu.matmul %152, %12, %cst_83 {dimension_numbers = #tpu.dot_dimension_numbers<[1], [0], [0], [1], [0, 0, 1, 1], [], []>} : vector<2x3xf32>, vector<3x1xf32>, vector<2x1xf32> -> vector<2x1xf32>
    %188 = arith.addf %186, %187 : vector<2x1xf32>
    %cst_84 = arith.constant dense<0.000000e+00> : vector<2x1xf32>
    %189 = tpu.matmul %153, %13, %cst_84 {dimension_numbers = #tpu.dot_dimension_numbers<[1], [0], [0], [1], [0, 0, 1, 1], [], []>} : vector<2x3xf32>, vector<3x1xf32>, vector<2x1xf32> -> vector<2x1xf32>
    %190 = arith.addf %188, %189 : vector<2x1xf32>
    %191 = vector.broadcast %14 : vector<1x1xf32> to vector<2x1xf32>
    %192 = arith.addf %190, %191 : vector<2x1xf32>
    %c1_85 = arith.constant 1 : index
    %c0_86 = arith.constant 0 : index
    %c0_87 = arith.constant 0 : index
    %193 = vector.load %arg14[%c1_85, %c0_86, %c0_87] : memref<6x2x1xf32, #tpu.memory_space<vmem>>, vector<1x2x1xf32>
    %194 = vector.shape_cast %193 : vector<1x2x1xf32> to vector<2x1xf32>
    %195 = vector.shape_cast %192 : vector<2x1xf32> to vector<1x2x1xf32>
    tpu.vector_store %arg14[%c1_85, %c0_86, %c0_87], %195 {strides = array<i32>} : memref<6x2x1xf32, #tpu.memory_space<vmem>>, vector<1x2x1xf32>,
    %cst_88 = arith.constant dense<0.000000e+00> : vector<2x5xf32>
    %196 = tpu.matmul %185, %7, %cst_88 {dimension_numbers = #tpu.dot_dimension_numbers<[1], [0], [0], [1], [0, 0, 1, 1], [], []>} : vector<2x64xf32>, vector<64x5xf32>, vector<2x5xf32> -> vector<2x5xf32>
    %cst_89 = arith.constant dense<0.000000e+00> : vector<2x5xf32>
    %197 = tpu.matmul %152, %8, %cst_89 {dimension_numbers = #tpu.dot_dimension_numbers<[1], [0], [0], [1], [0, 0, 1, 1], [], []>} : vector<2x3xf32>, vector<3x5xf32>, vector<2x5xf32> -> vector<2x5xf32>
    %198 = arith.addf %196, %197 : vector<2x5xf32>
    %199 = vector.broadcast %10 : vector<1x5xf32> to vector<2x5xf32>
    %200 = arith.addf %198, %199 : vector<2x5xf32>
    %201 = vector.extract_strided_slice %153 {offsets = [0, 0], sizes = [2, 1], strides = [1, 1]} : vector<2x3xf32> to vector<2x1xf32>
    %202 = vector.broadcast %201 : vector<2x1xf32> to vector<2x5xf32>
    %203 = vector.broadcast %9 : vector<1x5xf32> to vector<2x5xf32>
    %204 = arith.mulf %202, %203 : vector<2x5xf32>
    %205 = arith.addf %200, %204 : vector<2x5xf32>
    %cst_90 = arith.constant dense<0xFF800000> : vector<2xf32>
    %206 = vector.multi_reduction <maximumf>, %205, %cst_90 [1] : vector<2x5xf32> to vector<2xf32>
    %207 = vector.shape_cast %206 : vector<2xf32> to vector<2x1xf32>
    %208 = vector.broadcast %207 : vector<2x1xf32> to vector<2x5xf32>
    %209 = arith.subf %205, %208 : vector<2x5xf32>
    %210 = math.exp %209 : vector<2x5xf32>
    %cst_91 = arith.constant dense<0.000000e+00> : vector<2xf32>
    %211 = vector.multi_reduction <add>, %210, %cst_91 [1] : vector<2x5xf32> to vector<2xf32>
    %212 = vector.shape_cast %211 : vector<2xf32> to vector<2x1xf32>
    %213 = math.log %212 : vector<2x1xf32>
    %214 = vector.broadcast %207 : vector<2x1xf32> to vector<2x5xf32>
    %215 = arith.cmpf oeq, %205, %214 : vector<2x5xf32>
    %c5_i32_92 = arith.constant 5 : i32
    %216 = vector.broadcast %c5_i32_92 : i32 to vector<2x5xi32>
    %217 = arith.select %215, %15, %216 : vector<2x5xi1>, vector<2x5xi32>
    %cst_93 = arith.constant dense<2147483647> : vector<2xi32>
    %218 = vector.multi_reduction <minsi>, %217, %cst_93 [1] : vector<2x5xi32> to vector<2xi32>
    %219 = vector.shape_cast %218 : vector<2xi32> to vector<2x1xi32>
    %c0_94 = arith.constant 0 : index
    %c1_95 = arith.constant 1 : index
    %c0_96 = arith.constant 0 : index
    %c0_97 = arith.constant 0 : index
    %220 = vector.load %arg15[%c0_94, %c1_95, %c0_96, %c0_97] : memref<3x6x2x1xi32, #tpu.memory_space<vmem>>, vector<1x1x2x1xi32>
    %221 = vector.shape_cast %220 : vector<1x1x2x1xi32> to vector<2x1xi32>
    %222 = vector.shape_cast %219 : vector<2x1xi32> to vector<1x1x2x1xi32>
    tpu.vector_store %arg15[%c0_94, %c1_95, %c0_96, %c0_97], %222 {strides = array<i32>} : memref<3x6x2x1xi32, #tpu.memory_space<vmem>>, vector<1x1x2x1xi32>,
    %cst_98 = arith.constant 0.000000e+00 : f32
    %223 = vector.broadcast %cst_98 : f32 to vector<2x1xf32>
    %224 = arith.subf %223, %213 : vector<2x1xf32>
    %c0_99 = arith.constant 0 : index
    %c1_100 = arith.constant 1 : index
    %c0_101 = arith.constant 0 : index
    %c0_102 = arith.constant 0 : index
    %225 = vector.load %arg16[%c0_99, %c1_100, %c0_101, %c0_102] : memref<3x6x2x1xf32, #tpu.memory_space<vmem>>, vector<1x1x2x1xf32>
    %226 = vector.shape_cast %225 : vector<1x1x2x1xf32> to vector<2x1xf32>
    %227 = vector.shape_cast %224 : vector<2x1xf32> to vector<1x1x2x1xf32>
    tpu.vector_store %arg16[%c0_99, %c1_100, %c0_101, %c0_102], %227 {strides = array<i32>} : memref<3x6x2x1xf32, #tpu.memory_space<vmem>>, vector<1x1x2x1xf32>,
    %228 = vector.extract_strided_slice %153 {offsets = [0, 1], sizes = [2, 1], strides = [1, 1]} : vector<2x3xf32> to vector<2x1xf32>
    %229 = vector.broadcast %228 : vector<2x1xf32> to vector<2x5xf32>
    %230 = vector.broadcast %9 : vector<1x5xf32> to vector<2x5xf32>
    %231 = arith.mulf %229, %230 : vector<2x5xf32>
    %232 = arith.addf %200, %231 : vector<2x5xf32>
    %cst_103 = arith.constant dense<0xFF800000> : vector<2xf32>
    %233 = vector.multi_reduction <maximumf>, %232, %cst_103 [1] : vector<2x5xf32> to vector<2xf32>
    %234 = vector.shape_cast %233 : vector<2xf32> to vector<2x1xf32>
    %235 = vector.broadcast %234 : vector<2x1xf32> to vector<2x5xf32>
    %236 = arith.subf %232, %235 : vector<2x5xf32>
    %237 = math.exp %236 : vector<2x5xf32>
    %cst_104 = arith.constant dense<0.000000e+00> : vector<2xf32>
    %238 = vector.multi_reduction <add>, %237, %cst_104 [1] : vector<2x5xf32> to vector<2xf32>
    %239 = vector.shape_cast %238 : vector<2xf32> to vector<2x1xf32>
    %240 = math.log %239 : vector<2x1xf32>
    %241 = vector.broadcast %234 : vector<2x1xf32> to vector<2x5xf32>
    %242 = arith.cmpf oeq, %232, %241 : vector<2x5xf32>
    %c5_i32_105 = arith.constant 5 : i32
    %243 = vector.broadcast %c5_i32_105 : i32 to vector<2x5xi32>
    %244 = arith.select %242, %15, %243 : vector<2x5xi1>, vector<2x5xi32>
    %cst_106 = arith.constant dense<2147483647> : vector<2xi32>
    %245 = vector.multi_reduction <minsi>, %244, %cst_106 [1] : vector<2x5xi32> to vector<2xi32>
    %246 = vector.shape_cast %245 : vector<2xi32> to vector<2x1xi32>
    %c1_107 = arith.constant 1 : index
    %c1_108 = arith.constant 1 : index
    %c0_109 = arith.constant 0 : index
    %c0_110 = arith.constant 0 : index
    %247 = vector.load %arg15[%c1_107, %c1_108, %c0_109, %c0_110] : memref<3x6x2x1xi32, #tpu.memory_space<vmem>>, vector<1x1x2x1xi32>
    %248 = vector.shape_cast %247 : vector<1x1x2x1xi32> to vector<2x1xi32>
    %249 = vector.shape_cast %246 : vector<2x1xi32> to vector<1x1x2x1xi32>
    tpu.vector_store %arg15[%c1_107, %c1_108, %c0_109, %c0_110], %249 {strides = array<i32>} : memref<3x6x2x1xi32, #tpu.memory_space<vmem>>, vector<1x1x2x1xi32>,
    %cst_111 = arith.constant 0.000000e+00 : f32
    %250 = vector.broadcast %cst_111 : f32 to vector<2x1xf32>
    %251 = arith.subf %250, %240 : vector<2x1xf32>
    %c1_112 = arith.constant 1 : index
    %c1_113 = arith.constant 1 : index
    %c0_114 = arith.constant 0 : index
    %c0_115 = arith.constant 0 : index
    %252 = vector.load %arg16[%c1_112, %c1_113, %c0_114, %c0_115] : memref<3x6x2x1xf32, #tpu.memory_space<vmem>>, vector<1x1x2x1xf32>
    %253 = vector.shape_cast %252 : vector<1x1x2x1xf32> to vector<2x1xf32>
    %254 = vector.shape_cast %251 : vector<2x1xf32> to vector<1x1x2x1xf32>
    tpu.vector_store %arg16[%c1_112, %c1_113, %c0_114, %c0_115], %254 {strides = array<i32>} : memref<3x6x2x1xf32, #tpu.memory_space<vmem>>, vector<1x1x2x1xf32>,
    %255 = vector.extract_strided_slice %153 {offsets = [0, 2], sizes = [2, 1], strides = [1, 1]} : vector<2x3xf32> to vector<2x1xf32>
    %256 = vector.broadcast %255 : vector<2x1xf32> to vector<2x5xf32>
    %257 = vector.broadcast %9 : vector<1x5xf32> to vector<2x5xf32>
    %258 = arith.mulf %256, %257 : vector<2x5xf32>
    %259 = arith.addf %200, %258 : vector<2x5xf32>
    %cst_116 = arith.constant dense<0xFF800000> : vector<2xf32>
    %260 = vector.multi_reduction <maximumf>, %259, %cst_116 [1] : vector<2x5xf32> to vector<2xf32>
    %261 = vector.shape_cast %260 : vector<2xf32> to vector<2x1xf32>
    %262 = vector.broadcast %261 : vector<2x1xf32> to vector<2x5xf32>
    %263 = arith.subf %259, %262 : vector<2x5xf32>
    %264 = math.exp %263 : vector<2x5xf32>
    %cst_117 = arith.constant dense<0.000000e+00> : vector<2xf32>
    %265 = vector.multi_reduction <add>, %264, %cst_117 [1] : vector<2x5xf32> to vector<2xf32>
    %266 = vector.shape_cast %265 : vector<2xf32> to vector<2x1xf32>
    %267 = math.log %266 : vector<2x1xf32>
    %268 = vector.broadcast %261 : vector<2x1xf32> to vector<2x5xf32>
    %269 = arith.cmpf oeq, %259, %268 : vector<2x5xf32>
    %c5_i32_118 = arith.constant 5 : i32
    %270 = vector.broadcast %c5_i32_118 : i32 to vector<2x5xi32>
    %271 = arith.select %269, %15, %270 : vector<2x5xi1>, vector<2x5xi32>
    %cst_119 = arith.constant dense<2147483647> : vector<2xi32>
    %272 = vector.multi_reduction <minsi>, %271, %cst_119 [1] : vector<2x5xi32> to vector<2xi32>
    %273 = vector.shape_cast %272 : vector<2xi32> to vector<2x1xi32>
    %c2_120 = arith.constant 2 : index
    %c1_121 = arith.constant 1 : index
    %c0_122 = arith.constant 0 : index
    %c0_123 = arith.constant 0 : index
    %274 = vector.load %arg15[%c2_120, %c1_121, %c0_122, %c0_123] : memref<3x6x2x1xi32, #tpu.memory_space<vmem>>, vector<1x1x2x1xi32>
    %275 = vector.shape_cast %274 : vector<1x1x2x1xi32> to vector<2x1xi32>
    %276 = vector.shape_cast %273 : vector<2x1xi32> to vector<1x1x2x1xi32>
    tpu.vector_store %arg15[%c2_120, %c1_121, %c0_122, %c0_123], %276 {strides = array<i32>} : memref<3x6x2x1xi32, #tpu.memory_space<vmem>>, vector<1x1x2x1xi32>,
    %cst_124 = arith.constant 0.000000e+00 : f32
    %277 = vector.broadcast %cst_124 : f32 to vector<2x1xf32>
    %278 = arith.subf %277, %267 : vector<2x1xf32>
    %c2_125 = arith.constant 2 : index
    %c1_126 = arith.constant 1 : index
    %c0_127 = arith.constant 0 : index
    %c0_128 = arith.constant 0 : index
    %279 = vector.load %arg16[%c2_125, %c1_126, %c0_127, %c0_128] : memref<3x6x2x1xf32, #tpu.memory_space<vmem>>, vector<1x1x2x1xf32>
    %280 = vector.shape_cast %279 : vector<1x1x2x1xf32> to vector<2x1xf32>
    %281 = vector.shape_cast %278 : vector<2x1xf32> to vector<1x1x2x1xf32>
    tpu.vector_store %arg16[%c2_125, %c1_126, %c0_127, %c0_128], %281 {strides = array<i32>} : memref<3x6x2x1xf32, #tpu.memory_space<vmem>>, vector<1x1x2x1xf32>,
    %282 = vector.extract_strided_slice %0 {offsets = [2, 0, 0], sizes = [1, 2, 14], strides = [1, 1, 1]} : vector<6x2x14xf32> to vector<1x2x14xf32>
    %283 = vector.shape_cast %282 : vector<1x2x14xf32> to vector<2x14xf32>
    %284 = vector.extract_strided_slice %283 {offsets = [0, 0], sizes = [2, 8], strides = [1, 1]} : vector<2x14xf32> to vector<2x8xf32>
    %285 = vector.extract_strided_slice %283 {offsets = [0, 8], sizes = [2, 3], strides = [1, 1]} : vector<2x14xf32> to vector<2x3xf32>
    %286 = vector.extract_strided_slice %283 {offsets = [0, 11], sizes = [2, 3], strides = [1, 1]} : vector<2x14xf32> to vector<2x3xf32>
    %cst_129 = arith.constant dense<0.000000e+00> : vector<2x192xf32>
    %287 = tpu.matmul %284, %3, %cst_129 {dimension_numbers = #tpu.dot_dimension_numbers<[1], [0], [0], [1], [0, 0, 1, 1], [], []>} : vector<2x8xf32>, vector<8x192xf32>, vector<2x192xf32> -> vector<2x192xf32>
    %288 = vector.broadcast %5 : vector<1x192xf32> to vector<2x192xf32>
    %289 = arith.addf %287, %288 : vector<2x192xf32>
    %cst_130 = arith.constant dense<0.000000e+00> : vector<2x192xf32>
    %290 = tpu.matmul %185, %4, %cst_130 {dimension_numbers = #tpu.dot_dimension_numbers<[1], [0], [0], [1], [0, 0, 1, 1], [], []>} : vector<2x64xf32>, vector<64x192xf32>, vector<2x192xf32> -> vector<2x192xf32>
    %291 = vector.broadcast %6 : vector<1x192xf32> to vector<2x192xf32>
    %292 = arith.addf %290, %291 : vector<2x192xf32>
    %293 = vector.extract_strided_slice %289 {offsets = [0, 0], sizes = [2, 64], strides = [1, 1]} : vector<2x192xf32> to vector<2x64xf32>
    %294 = vector.extract_strided_slice %292 {offsets = [0, 0], sizes = [2, 64], strides = [1, 1]} : vector<2x192xf32> to vector<2x64xf32>
    %295 = arith.addf %293, %294 : vector<2x64xf32>
    %296 = arith.negf %295 : vector<2x64xf32>
    %297 = math.exp %296 : vector<2x64xf32>
    %cst_131 = arith.constant 1.000000e+00 : f32
    %298 = vector.broadcast %cst_131 : f32 to vector<2x64xf32>
    %299 = arith.addf %298, %297 : vector<2x64xf32>
    %300 = arith.divf %298, %299 : vector<2x64xf32>
    %301 = vector.extract_strided_slice %289 {offsets = [0, 64], sizes = [2, 64], strides = [1, 1]} : vector<2x192xf32> to vector<2x64xf32>
    %302 = vector.extract_strided_slice %292 {offsets = [0, 64], sizes = [2, 64], strides = [1, 1]} : vector<2x192xf32> to vector<2x64xf32>
    %303 = arith.addf %301, %302 : vector<2x64xf32>
    %304 = arith.negf %303 : vector<2x64xf32>
    %305 = math.exp %304 : vector<2x64xf32>
    %cst_132 = arith.constant 1.000000e+00 : f32
    %306 = vector.broadcast %cst_132 : f32 to vector<2x64xf32>
    %307 = arith.addf %306, %305 : vector<2x64xf32>
    %308 = arith.divf %306, %307 : vector<2x64xf32>
    %309 = vector.extract_strided_slice %289 {offsets = [0, 128], sizes = [2, 64], strides = [1, 1]} : vector<2x192xf32> to vector<2x64xf32>
    %310 = vector.extract_strided_slice %292 {offsets = [0, 128], sizes = [2, 64], strides = [1, 1]} : vector<2x192xf32> to vector<2x64xf32>
    %311 = arith.mulf %300, %310 : vector<2x64xf32>
    %312 = arith.addf %309, %311 : vector<2x64xf32>
    %313 = math.tanh %312 : vector<2x64xf32>
    %cst_133 = arith.constant 1.000000e+00 : f32
    %314 = vector.broadcast %cst_133 : f32 to vector<2x64xf32>
    %315 = arith.subf %314, %308 : vector<2x64xf32>
    %316 = arith.mulf %315, %313 : vector<2x64xf32>
    %317 = arith.mulf %308, %185 : vector<2x64xf32>
    %318 = arith.addf %316, %317 : vector<2x64xf32>
    %cst_134 = arith.constant dense<0.000000e+00> : vector<2x1xf32>
    %319 = tpu.matmul %318, %11, %cst_134 {dimension_numbers = #tpu.dot_dimension_numbers<[1], [0], [0], [1], [0, 0, 1, 1], [], []>} : vector<2x64xf32>, vector<64x1xf32>, vector<2x1xf32> -> vector<2x1xf32>
    %cst_135 = arith.constant dense<0.000000e+00> : vector<2x1xf32>
    %320 = tpu.matmul %285, %12, %cst_135 {dimension_numbers = #tpu.dot_dimension_numbers<[1], [0], [0], [1], [0, 0, 1, 1], [], []>} : vector<2x3xf32>, vector<3x1xf32>, vector<2x1xf32> -> vector<2x1xf32>
    %321 = arith.addf %319, %320 : vector<2x1xf32>
    %cst_136 = arith.constant dense<0.000000e+00> : vector<2x1xf32>
    %322 = tpu.matmul %286, %13, %cst_136 {dimension_numbers = #tpu.dot_dimension_numbers<[1], [0], [0], [1], [0, 0, 1, 1], [], []>} : vector<2x3xf32>, vector<3x1xf32>, vector<2x1xf32> -> vector<2x1xf32>
    %323 = arith.addf %321, %322 : vector<2x1xf32>
    %324 = vector.broadcast %14 : vector<1x1xf32> to vector<2x1xf32>
    %325 = arith.addf %323, %324 : vector<2x1xf32>
    %c2_137 = arith.constant 2 : index
    %c0_138 = arith.constant 0 : index
    %c0_139 = arith.constant 0 : index
    %326 = vector.load %arg14[%c2_137, %c0_138, %c0_139] : memref<6x2x1xf32, #tpu.memory_space<vmem>>, vector<1x2x1xf32>
    %327 = vector.shape_cast %326 : vector<1x2x1xf32> to vector<2x1xf32>
    %328 = vector.shape_cast %325 : vector<2x1xf32> to vector<1x2x1xf32>
    tpu.vector_store %arg14[%c2_137, %c0_138, %c0_139], %328 {strides = array<i32>} : memref<6x2x1xf32, #tpu.memory_space<vmem>>, vector<1x2x1xf32>,
    %cst_140 = arith.constant dense<0.000000e+00> : vector<2x5xf32>
    %329 = tpu.matmul %318, %7, %cst_140 {dimension_numbers = #tpu.dot_dimension_numbers<[1], [0], [0], [1], [0, 0, 1, 1], [], []>} : vector<2x64xf32>, vector<64x5xf32>, vector<2x5xf32> -> vector<2x5xf32>
    %cst_141 = arith.constant dense<0.000000e+00> : vector<2x5xf32>
    %330 = tpu.matmul %285, %8, %cst_141 {dimension_numbers = #tpu.dot_dimension_numbers<[1], [0], [0], [1], [0, 0, 1, 1], [], []>} : vector<2x3xf32>, vector<3x5xf32>, vector<2x5xf32> -> vector<2x5xf32>
    %331 = arith.addf %329, %330 : vector<2x5xf32>
    %332 = vector.broadcast %10 : vector<1x5xf32> to vector<2x5xf32>
    %333 = arith.addf %331, %332 : vector<2x5xf32>
    %334 = vector.extract_strided_slice %286 {offsets = [0, 0], sizes = [2, 1], strides = [1, 1]} : vector<2x3xf32> to vector<2x1xf32>
    %335 = vector.broadcast %334 : vector<2x1xf32> to vector<2x5xf32>
    %336 = vector.broadcast %9 : vector<1x5xf32> to vector<2x5xf32>
    %337 = arith.mulf %335, %336 : vector<2x5xf32>
    %338 = arith.addf %333, %337 : vector<2x5xf32>
    %cst_142 = arith.constant dense<0xFF800000> : vector<2xf32>
    %339 = vector.multi_reduction <maximumf>, %338, %cst_142 [1] : vector<2x5xf32> to vector<2xf32>
    %340 = vector.shape_cast %339 : vector<2xf32> to vector<2x1xf32>
    %341 = vector.broadcast %340 : vector<2x1xf32> to vector<2x5xf32>
    %342 = arith.subf %338, %341 : vector<2x5xf32>
    %343 = math.exp %342 : vector<2x5xf32>
    %cst_143 = arith.constant dense<0.000000e+00> : vector<2xf32>
    %344 = vector.multi_reduction <add>, %343, %cst_143 [1] : vector<2x5xf32> to vector<2xf32>
    %345 = vector.shape_cast %344 : vector<2xf32> to vector<2x1xf32>
    %346 = math.log %345 : vector<2x1xf32>
    %347 = vector.broadcast %340 : vector<2x1xf32> to vector<2x5xf32>
    %348 = arith.cmpf oeq, %338, %347 : vector<2x5xf32>
    %c5_i32_144 = arith.constant 5 : i32
    %349 = vector.broadcast %c5_i32_144 : i32 to vector<2x5xi32>
    %350 = arith.select %348, %15, %349 : vector<2x5xi1>, vector<2x5xi32>
    %cst_145 = arith.constant dense<2147483647> : vector<2xi32>
    %351 = vector.multi_reduction <minsi>, %350, %cst_145 [1] : vector<2x5xi32> to vector<2xi32>
    %352 = vector.shape_cast %351 : vector<2xi32> to vector<2x1xi32>
    %c0_146 = arith.constant 0 : index
    %c2_147 = arith.constant 2 : index
    %c0_148 = arith.constant 0 : index
    %c0_149 = arith.constant 0 : index
    %353 = vector.load %arg15[%c0_146, %c2_147, %c0_148, %c0_149] : memref<3x6x2x1xi32, #tpu.memory_space<vmem>>, vector<1x1x2x1xi32>
    %354 = vector.shape_cast %353 : vector<1x1x2x1xi32> to vector<2x1xi32>
    %355 = vector.shape_cast %352 : vector<2x1xi32> to vector<1x1x2x1xi32>
    tpu.vector_store %arg15[%c0_146, %c2_147, %c0_148, %c0_149], %355 {strides = array<i32>} : memref<3x6x2x1xi32, #tpu.memory_space<vmem>>, vector<1x1x2x1xi32>,
    %cst_150 = arith.constant 0.000000e+00 : f32
    %356 = vector.broadcast %cst_150 : f32 to vector<2x1xf32>
    %357 = arith.subf %356, %346 : vector<2x1xf32>
    %c0_151 = arith.constant 0 : index
    %c2_152 = arith.constant 2 : index
    %c0_153 = arith.constant 0 : index
    %c0_154 = arith.constant 0 : index
    %358 = vector.load %arg16[%c0_151, %c2_152, %c0_153, %c0_154] : memref<3x6x2x1xf32, #tpu.memory_space<vmem>>, vector<1x1x2x1xf32>
    %359 = vector.shape_cast %358 : vector<1x1x2x1xf32> to vector<2x1xf32>
    %360 = vector.shape_cast %357 : vector<2x1xf32> to vector<1x1x2x1xf32>
    tpu.vector_store %arg16[%c0_151, %c2_152, %c0_153, %c0_154], %360 {strides = array<i32>} : memref<3x6x2x1xf32, #tpu.memory_space<vmem>>, vector<1x1x2x1xf32>,
    %361 = vector.extract_strided_slice %286 {offsets = [0, 1], sizes = [2, 1], strides = [1, 1]} : vector<2x3xf32> to vector<2x1xf32>
    %362 = vector.broadcast %361 : vector<2x1xf32> to vector<2x5xf32>
    %363 = vector.broadcast %9 : vector<1x5xf32> to vector<2x5xf32>
    %364 = arith.mulf %362, %363 : vector<2x5xf32>
    %365 = arith.addf %333, %364 : vector<2x5xf32>
    %cst_155 = arith.constant dense<0xFF800000> : vector<2xf32>
    %366 = vector.multi_reduction <maximumf>, %365, %cst_155 [1] : vector<2x5xf32> to vector<2xf32>
    %367 = vector.shape_cast %366 : vector<2xf32> to vector<2x1xf32>
    %368 = vector.broadcast %367 : vector<2x1xf32> to vector<2x5xf32>
    %369 = arith.subf %365, %368 : vector<2x5xf32>
    %370 = math.exp %369 : vector<2x5xf32>
    %cst_156 = arith.constant dense<0.000000e+00> : vector<2xf32>
    %371 = vector.multi_reduction <add>, %370, %cst_156 [1] : vector<2x5xf32> to vector<2xf32>
    %372 = vector.shape_cast %371 : vector<2xf32> to vector<2x1xf32>
    %373 = math.log %372 : vector<2x1xf32>
    %374 = vector.broadcast %367 : vector<2x1xf32> to vector<2x5xf32>
    %375 = arith.cmpf oeq, %365, %374 : vector<2x5xf32>
    %c5_i32_157 = arith.constant 5 : i32
    %376 = vector.broadcast %c5_i32_157 : i32 to vector<2x5xi32>
    %377 = arith.select %375, %15, %376 : vector<2x5xi1>, vector<2x5xi32>
    %cst_158 = arith.constant dense<2147483647> : vector<2xi32>
    %378 = vector.multi_reduction <minsi>, %377, %cst_158 [1] : vector<2x5xi32> to vector<2xi32>
    %379 = vector.shape_cast %378 : vector<2xi32> to vector<2x1xi32>
    %c1_159 = arith.constant 1 : index
    %c2_160 = arith.constant 2 : index
    %c0_161 = arith.constant 0 : index
    %c0_162 = arith.constant 0 : index
    %380 = vector.load %arg15[%c1_159, %c2_160, %c0_161, %c0_162] : memref<3x6x2x1xi32, #tpu.memory_space<vmem>>, vector<1x1x2x1xi32>
    %381 = vector.shape_cast %380 : vector<1x1x2x1xi32> to vector<2x1xi32>
    %382 = vector.shape_cast %379 : vector<2x1xi32> to vector<1x1x2x1xi32>
    tpu.vector_store %arg15[%c1_159, %c2_160, %c0_161, %c0_162], %382 {strides = array<i32>} : memref<3x6x2x1xi32, #tpu.memory_space<vmem>>, vector<1x1x2x1xi32>,
    %cst_163 = arith.constant 0.000000e+00 : f32
    %383 = vector.broadcast %cst_163 : f32 to vector<2x1xf32>
    %384 = arith.subf %383, %373 : vector<2x1xf32>
    %c1_164 = arith.constant 1 : index
    %c2_165 = arith.constant 2 : index
    %c0_166 = arith.constant 0 : index
    %c0_167 = arith.constant 0 : index
    %385 = vector.load %arg16[%c1_164, %c2_165, %c0_166, %c0_167] : memref<3x6x2x1xf32, #tpu.memory_space<vmem>>, vector<1x1x2x1xf32>
    %386 = vector.shape_cast %385 : vector<1x1x2x1xf32> to vector<2x1xf32>
    %387 = vector.shape_cast %384 : vector<2x1xf32> to vector<1x1x2x1xf32>
    tpu.vector_store %arg16[%c1_164, %c2_165, %c0_166, %c0_167], %387 {strides = array<i32>} : memref<3x6x2x1xf32, #tpu.memory_space<vmem>>, vector<1x1x2x1xf32>,
    %388 = vector.extract_strided_slice %286 {offsets = [0, 2], sizes = [2, 1], strides = [1, 1]} : vector<2x3xf32> to vector<2x1xf32>
    %389 = vector.broadcast %388 : vector<2x1xf32> to vector<2x5xf32>
    %390 = vector.broadcast %9 : vector<1x5xf32> to vector<2x5xf32>
    %391 = arith.mulf %389, %390 : vector<2x5xf32>
    %392 = arith.addf %333, %391 : vector<2x5xf32>
    %cst_168 = arith.constant dense<0xFF800000> : vector<2xf32>
    %393 = vector.multi_reduction <maximumf>, %392, %cst_168 [1] : vector<2x5xf32> to vector<2xf32>
    %394 = vector.shape_cast %393 : vector<2xf32> to vector<2x1xf32>
    %395 = vector.broadcast %394 : vector<2x1xf32> to vector<2x5xf32>
    %396 = arith.subf %392, %395 : vector<2x5xf32>
    %397 = math.exp %396 : vector<2x5xf32>
    %cst_169 = arith.constant dense<0.000000e+00> : vector<2xf32>
    %398 = vector.multi_reduction <add>, %397, %cst_169 [1] : vector<2x5xf32> to vector<2xf32>
    %399 = vector.shape_cast %398 : vector<2xf32> to vector<2x1xf32>
    %400 = math.log %399 : vector<2x1xf32>
    %401 = vector.broadcast %394 : vector<2x1xf32> to vector<2x5xf32>
    %402 = arith.cmpf oeq, %392, %401 : vector<2x5xf32>
    %c5_i32_170 = arith.constant 5 : i32
    %403 = vector.broadcast %c5_i32_170 : i32 to vector<2x5xi32>
    %404 = arith.select %402, %15, %403 : vector<2x5xi1>, vector<2x5xi32>
    %cst_171 = arith.constant dense<2147483647> : vector<2xi32>
    %405 = vector.multi_reduction <minsi>, %404, %cst_171 [1] : vector<2x5xi32> to vector<2xi32>
    %406 = vector.shape_cast %405 : vector<2xi32> to vector<2x1xi32>
    %c2_172 = arith.constant 2 : index
    %c2_173 = arith.constant 2 : index
    %c0_174 = arith.constant 0 : index
    %c0_175 = arith.constant 0 : index
    %407 = vector.load %arg15[%c2_172, %c2_173, %c0_174, %c0_175] : memref<3x6x2x1xi32, #tpu.memory_space<vmem>>, vector<1x1x2x1xi32>
    %408 = vector.shape_cast %407 : vector<1x1x2x1xi32> to vector<2x1xi32>
    %409 = vector.shape_cast %406 : vector<2x1xi32> to vector<1x1x2x1xi32>
    tpu.vector_store %arg15[%c2_172, %c2_173, %c0_174, %c0_175], %409 {strides = array<i32>} : memref<3x6x2x1xi32, #tpu.memory_space<vmem>>, vector<1x1x2x1xi32>,
    %cst_176 = arith.constant 0.000000e+00 : f32
    %410 = vector.broadcast %cst_176 : f32 to vector<2x1xf32>
    %411 = arith.subf %410, %400 : vector<2x1xf32>
    %c2_177 = arith.constant 2 : index
    %c2_178 = arith.constant 2 : index
    %c0_179 = arith.constant 0 : index
    %c0_180 = arith.constant 0 : index
    %412 = vector.load %arg16[%c2_177, %c2_178, %c0_179, %c0_180] : memref<3x6x2x1xf32, #tpu.memory_space<vmem>>, vector<1x1x2x1xf32>
    %413 = vector.shape_cast %412 : vector<1x1x2x1xf32> to vector<2x1xf32>
    %414 = vector.shape_cast %411 : vector<2x1xf32> to vector<1x1x2x1xf32>
    tpu.vector_store %arg16[%c2_177, %c2_178, %c0_179, %c0_180], %414 {strides = array<i32>} : memref<3x6x2x1xf32, #tpu.memory_space<vmem>>, vector<1x1x2x1xf32>,
    %415 = vector.extract_strided_slice %0 {offsets = [3, 0, 0], sizes = [1, 2, 14], strides = [1, 1, 1]} : vector<6x2x14xf32> to vector<1x2x14xf32>
    %416 = vector.shape_cast %415 : vector<1x2x14xf32> to vector<2x14xf32>
    %417 = vector.extract_strided_slice %416 {offsets = [0, 0], sizes = [2, 8], strides = [1, 1]} : vector<2x14xf32> to vector<2x8xf32>
    %418 = vector.extract_strided_slice %416 {offsets = [0, 8], sizes = [2, 3], strides = [1, 1]} : vector<2x14xf32> to vector<2x3xf32>
    %419 = vector.extract_strided_slice %416 {offsets = [0, 11], sizes = [2, 3], strides = [1, 1]} : vector<2x14xf32> to vector<2x3xf32>
    %cst_181 = arith.constant dense<0.000000e+00> : vector<2x192xf32>
    %420 = tpu.matmul %417, %3, %cst_181 {dimension_numbers = #tpu.dot_dimension_numbers<[1], [0], [0], [1], [0, 0, 1, 1], [], []>} : vector<2x8xf32>, vector<8x192xf32>, vector<2x192xf32> -> vector<2x192xf32>
    %421 = vector.broadcast %5 : vector<1x192xf32> to vector<2x192xf32>
    %422 = arith.addf %420, %421 : vector<2x192xf32>
    %cst_182 = arith.constant dense<0.000000e+00> : vector<2x192xf32>
    %423 = tpu.matmul %318, %4, %cst_182 {dimension_numbers = #tpu.dot_dimension_numbers<[1], [0], [0], [1], [0, 0, 1, 1], [], []>} : vector<2x64xf32>, vector<64x192xf32>, vector<2x192xf32> -> vector<2x192xf32>
    %424 = vector.broadcast %6 : vector<1x192xf32> to vector<2x192xf32>
    %425 = arith.addf %423, %424 : vector<2x192xf32>
    %426 = vector.extract_strided_slice %422 {offsets = [0, 0], sizes = [2, 64], strides = [1, 1]} : vector<2x192xf32> to vector<2x64xf32>
    %427 = vector.extract_strided_slice %425 {offsets = [0, 0], sizes = [2, 64], strides = [1, 1]} : vector<2x192xf32> to vector<2x64xf32>
    %428 = arith.addf %426, %427 : vector<2x64xf32>
    %429 = arith.negf %428 : vector<2x64xf32>
    %430 = math.exp %429 : vector<2x64xf32>
    %cst_183 = arith.constant 1.000000e+00 : f32
    %431 = vector.broadcast %cst_183 : f32 to vector<2x64xf32>
    %432 = arith.addf %431, %430 : vector<2x64xf32>
    %433 = arith.divf %431, %432 : vector<2x64xf32>
    %434 = vector.extract_strided_slice %422 {offsets = [0, 64], sizes = [2, 64], strides = [1, 1]} : vector<2x192xf32> to vector<2x64xf32>
    %435 = vector.extract_strided_slice %425 {offsets = [0, 64], sizes = [2, 64], strides = [1, 1]} : vector<2x192xf32> to vector<2x64xf32>
    %436 = arith.addf %434, %435 : vector<2x64xf32>
    %437 = arith.negf %436 : vector<2x64xf32>
    %438 = math.exp %437 : vector<2x64xf32>
    %cst_184 = arith.constant 1.000000e+00 : f32
    %439 = vector.broadcast %cst_184 : f32 to vector<2x64xf32>
    %440 = arith.addf %439, %438 : vector<2x64xf32>
    %441 = arith.divf %439, %440 : vector<2x64xf32>
    %442 = vector.extract_strided_slice %422 {offsets = [0, 128], sizes = [2, 64], strides = [1, 1]} : vector<2x192xf32> to vector<2x64xf32>
    %443 = vector.extract_strided_slice %425 {offsets = [0, 128], sizes = [2, 64], strides = [1, 1]} : vector<2x192xf32> to vector<2x64xf32>
    %444 = arith.mulf %433, %443 : vector<2x64xf32>
    %445 = arith.addf %442, %444 : vector<2x64xf32>
    %446 = math.tanh %445 : vector<2x64xf32>
    %cst_185 = arith.constant 1.000000e+00 : f32
    %447 = vector.broadcast %cst_185 : f32 to vector<2x64xf32>
    %448 = arith.subf %447, %441 : vector<2x64xf32>
    %449 = arith.mulf %448, %446 : vector<2x64xf32>
    %450 = arith.mulf %441, %318 : vector<2x64xf32>
    %451 = arith.addf %449, %450 : vector<2x64xf32>
    %cst_186 = arith.constant dense<0.000000e+00> : vector<2x1xf32>
    %452 = tpu.matmul %451, %11, %cst_186 {dimension_numbers = #tpu.dot_dimension_numbers<[1], [0], [0], [1], [0, 0, 1, 1], [], []>} : vector<2x64xf32>, vector<64x1xf32>, vector<2x1xf32> -> vector<2x1xf32>
    %cst_187 = arith.constant dense<0.000000e+00> : vector<2x1xf32>
    %453 = tpu.matmul %418, %12, %cst_187 {dimension_numbers = #tpu.dot_dimension_numbers<[1], [0], [0], [1], [0, 0, 1, 1], [], []>} : vector<2x3xf32>, vector<3x1xf32>, vector<2x1xf32> -> vector<2x1xf32>
    %454 = arith.addf %452, %453 : vector<2x1xf32>
    %cst_188 = arith.constant dense<0.000000e+00> : vector<2x1xf32>
    %455 = tpu.matmul %419, %13, %cst_188 {dimension_numbers = #tpu.dot_dimension_numbers<[1], [0], [0], [1], [0, 0, 1, 1], [], []>} : vector<2x3xf32>, vector<3x1xf32>, vector<2x1xf32> -> vector<2x1xf32>
    %456 = arith.addf %454, %455 : vector<2x1xf32>
    %457 = vector.broadcast %14 : vector<1x1xf32> to vector<2x1xf32>
    %458 = arith.addf %456, %457 : vector<2x1xf32>
    %c3 = arith.constant 3 : index
    %c0_189 = arith.constant 0 : index
    %c0_190 = arith.constant 0 : index
    %459 = vector.load %arg14[%c3, %c0_189, %c0_190] : memref<6x2x1xf32, #tpu.memory_space<vmem>>, vector<1x2x1xf32>
    %460 = vector.shape_cast %459 : vector<1x2x1xf32> to vector<2x1xf32>
    %461 = vector.shape_cast %458 : vector<2x1xf32> to vector<1x2x1xf32>
    tpu.vector_store %arg14[%c3, %c0_189, %c0_190], %461 {strides = array<i32>} : memref<6x2x1xf32, #tpu.memory_space<vmem>>, vector<1x2x1xf32>,
    %cst_191 = arith.constant dense<0.000000e+00> : vector<2x5xf32>
    %462 = tpu.matmul %451, %7, %cst_191 {dimension_numbers = #tpu.dot_dimension_numbers<[1], [0], [0], [1], [0, 0, 1, 1], [], []>} : vector<2x64xf32>, vector<64x5xf32>, vector<2x5xf32> -> vector<2x5xf32>
    %cst_192 = arith.constant dense<0.000000e+00> : vector<2x5xf32>
    %463 = tpu.matmul %418, %8, %cst_192 {dimension_numbers = #tpu.dot_dimension_numbers<[1], [0], [0], [1], [0, 0, 1, 1], [], []>} : vector<2x3xf32>, vector<3x5xf32>, vector<2x5xf32> -> vector<2x5xf32>
    %464 = arith.addf %462, %463 : vector<2x5xf32>
    %465 = vector.broadcast %10 : vector<1x5xf32> to vector<2x5xf32>
    %466 = arith.addf %464, %465 : vector<2x5xf32>
    %467 = vector.extract_strided_slice %419 {offsets = [0, 0], sizes = [2, 1], strides = [1, 1]} : vector<2x3xf32> to vector<2x1xf32>
    %468 = vector.broadcast %467 : vector<2x1xf32> to vector<2x5xf32>
    %469 = vector.broadcast %9 : vector<1x5xf32> to vector<2x5xf32>
    %470 = arith.mulf %468, %469 : vector<2x5xf32>
    %471 = arith.addf %466, %470 : vector<2x5xf32>
    %cst_193 = arith.constant dense<0xFF800000> : vector<2xf32>
    %472 = vector.multi_reduction <maximumf>, %471, %cst_193 [1] : vector<2x5xf32> to vector<2xf32>
    %473 = vector.shape_cast %472 : vector<2xf32> to vector<2x1xf32>
    %474 = vector.broadcast %473 : vector<2x1xf32> to vector<2x5xf32>
    %475 = arith.subf %471, %474 : vector<2x5xf32>
    %476 = math.exp %475 : vector<2x5xf32>
    %cst_194 = arith.constant dense<0.000000e+00> : vector<2xf32>
    %477 = vector.multi_reduction <add>, %476, %cst_194 [1] : vector<2x5xf32> to vector<2xf32>
    %478 = vector.shape_cast %477 : vector<2xf32> to vector<2x1xf32>
    %479 = math.log %478 : vector<2x1xf32>
    %480 = vector.broadcast %473 : vector<2x1xf32> to vector<2x5xf32>
    %481 = arith.cmpf oeq, %471, %480 : vector<2x5xf32>
    %c5_i32_195 = arith.constant 5 : i32
    %482 = vector.broadcast %c5_i32_195 : i32 to vector<2x5xi32>
    %483 = arith.select %481, %15, %482 : vector<2x5xi1>, vector<2x5xi32>
    %cst_196 = arith.constant dense<2147483647> : vector<2xi32>
    %484 = vector.multi_reduction <minsi>, %483, %cst_196 [1] : vector<2x5xi32> to vector<2xi32>
    %485 = vector.shape_cast %484 : vector<2xi32> to vector<2x1xi32>
    %c0_197 = arith.constant 0 : index
    %c3_198 = arith.constant 3 : index
    %c0_199 = arith.constant 0 : index
    %c0_200 = arith.constant 0 : index
    %486 = vector.load %arg15[%c0_197, %c3_198, %c0_199, %c0_200] : memref<3x6x2x1xi32, #tpu.memory_space<vmem>>, vector<1x1x2x1xi32>
    %487 = vector.shape_cast %486 : vector<1x1x2x1xi32> to vector<2x1xi32>
    %488 = vector.shape_cast %485 : vector<2x1xi32> to vector<1x1x2x1xi32>
    tpu.vector_store %arg15[%c0_197, %c3_198, %c0_199, %c0_200], %488 {strides = array<i32>} : memref<3x6x2x1xi32, #tpu.memory_space<vmem>>, vector<1x1x2x1xi32>,
    %cst_201 = arith.constant 0.000000e+00 : f32
    %489 = vector.broadcast %cst_201 : f32 to vector<2x1xf32>
    %490 = arith.subf %489, %479 : vector<2x1xf32>
    %c0_202 = arith.constant 0 : index
    %c3_203 = arith.constant 3 : index
    %c0_204 = arith.constant 0 : index
    %c0_205 = arith.constant 0 : index
    %491 = vector.load %arg16[%c0_202, %c3_203, %c0_204, %c0_205] : memref<3x6x2x1xf32, #tpu.memory_space<vmem>>, vector<1x1x2x1xf32>
    %492 = vector.shape_cast %491 : vector<1x1x2x1xf32> to vector<2x1xf32>
    %493 = vector.shape_cast %490 : vector<2x1xf32> to vector<1x1x2x1xf32>
    tpu.vector_store %arg16[%c0_202, %c3_203, %c0_204, %c0_205], %493 {strides = array<i32>} : memref<3x6x2x1xf32, #tpu.memory_space<vmem>>, vector<1x1x2x1xf32>,
    %494 = vector.extract_strided_slice %419 {offsets = [0, 1], sizes = [2, 1], strides = [1, 1]} : vector<2x3xf32> to vector<2x1xf32>
    %495 = vector.broadcast %494 : vector<2x1xf32> to vector<2x5xf32>
    %496 = vector.broadcast %9 : vector<1x5xf32> to vector<2x5xf32>
    %497 = arith.mulf %495, %496 : vector<2x5xf32>
    %498 = arith.addf %466, %497 : vector<2x5xf32>
    %cst_206 = arith.constant dense<0xFF800000> : vector<2xf32>
    %499 = vector.multi_reduction <maximumf>, %498, %cst_206 [1] : vector<2x5xf32> to vector<2xf32>
    %500 = vector.shape_cast %499 : vector<2xf32> to vector<2x1xf32>
    %501 = vector.broadcast %500 : vector<2x1xf32> to vector<2x5xf32>
    %502 = arith.subf %498, %501 : vector<2x5xf32>
    %503 = math.exp %502 : vector<2x5xf32>
    %cst_207 = arith.constant dense<0.000000e+00> : vector<2xf32>
    %504 = vector.multi_reduction <add>, %503, %cst_207 [1] : vector<2x5xf32> to vector<2xf32>
    %505 = vector.shape_cast %504 : vector<2xf32> to vector<2x1xf32>
    %506 = math.log %505 : vector<2x1xf32>
    %507 = vector.broadcast %500 : vector<2x1xf32> to vector<2x5xf32>
    %508 = arith.cmpf oeq, %498, %507 : vector<2x5xf32>
    %c5_i32_208 = arith.constant 5 : i32
    %509 = vector.broadcast %c5_i32_208 : i32 to vector<2x5xi32>
    %510 = arith.select %508, %15, %509 : vector<2x5xi1>, vector<2x5xi32>
    %cst_209 = arith.constant dense<2147483647> : vector<2xi32>
    %511 = vector.multi_reduction <minsi>, %510, %cst_209 [1] : vector<2x5xi32> to vector<2xi32>
    %512 = vector.shape_cast %511 : vector<2xi32> to vector<2x1xi32>
    %c1_210 = arith.constant 1 : index
    %c3_211 = arith.constant 3 : index
    %c0_212 = arith.constant 0 : index
    %c0_213 = arith.constant 0 : index
    %513 = vector.load %arg15[%c1_210, %c3_211, %c0_212, %c0_213] : memref<3x6x2x1xi32, #tpu.memory_space<vmem>>, vector<1x1x2x1xi32>
    %514 = vector.shape_cast %513 : vector<1x1x2x1xi32> to vector<2x1xi32>
    %515 = vector.shape_cast %512 : vector<2x1xi32> to vector<1x1x2x1xi32>
    tpu.vector_store %arg15[%c1_210, %c3_211, %c0_212, %c0_213], %515 {strides = array<i32>} : memref<3x6x2x1xi32, #tpu.memory_space<vmem>>, vector<1x1x2x1xi32>,
    %cst_214 = arith.constant 0.000000e+00 : f32
    %516 = vector.broadcast %cst_214 : f32 to vector<2x1xf32>
    %517 = arith.subf %516, %506 : vector<2x1xf32>
    %c1_215 = arith.constant 1 : index
    %c3_216 = arith.constant 3 : index
    %c0_217 = arith.constant 0 : index
    %c0_218 = arith.constant 0 : index
    %518 = vector.load %arg16[%c1_215, %c3_216, %c0_217, %c0_218] : memref<3x6x2x1xf32, #tpu.memory_space<vmem>>, vector<1x1x2x1xf32>
    %519 = vector.shape_cast %518 : vector<1x1x2x1xf32> to vector<2x1xf32>
    %520 = vector.shape_cast %517 : vector<2x1xf32> to vector<1x1x2x1xf32>
    tpu.vector_store %arg16[%c1_215, %c3_216, %c0_217, %c0_218], %520 {strides = array<i32>} : memref<3x6x2x1xf32, #tpu.memory_space<vmem>>, vector<1x1x2x1xf32>,
    %521 = vector.extract_strided_slice %419 {offsets = [0, 2], sizes = [2, 1], strides = [1, 1]} : vector<2x3xf32> to vector<2x1xf32>
    %522 = vector.broadcast %521 : vector<2x1xf32> to vector<2x5xf32>
    %523 = vector.broadcast %9 : vector<1x5xf32> to vector<2x5xf32>
    %524 = arith.mulf %522, %523 : vector<2x5xf32>
    %525 = arith.addf %466, %524 : vector<2x5xf32>
    %cst_219 = arith.constant dense<0xFF800000> : vector<2xf32>
    %526 = vector.multi_reduction <maximumf>, %525, %cst_219 [1] : vector<2x5xf32> to vector<2xf32>
    %527 = vector.shape_cast %526 : vector<2xf32> to vector<2x1xf32>
    %528 = vector.broadcast %527 : vector<2x1xf32> to vector<2x5xf32>
    %529 = arith.subf %525, %528 : vector<2x5xf32>
    %530 = math.exp %529 : vector<2x5xf32>
    %cst_220 = arith.constant dense<0.000000e+00> : vector<2xf32>
    %531 = vector.multi_reduction <add>, %530, %cst_220 [1] : vector<2x5xf32> to vector<2xf32>
    %532 = vector.shape_cast %531 : vector<2xf32> to vector<2x1xf32>
    %533 = math.log %532 : vector<2x1xf32>
    %534 = vector.broadcast %527 : vector<2x1xf32> to vector<2x5xf32>
    %535 = arith.cmpf oeq, %525, %534 : vector<2x5xf32>
    %c5_i32_221 = arith.constant 5 : i32
    %536 = vector.broadcast %c5_i32_221 : i32 to vector<2x5xi32>
    %537 = arith.select %535, %15, %536 : vector<2x5xi1>, vector<2x5xi32>
    %cst_222 = arith.constant dense<2147483647> : vector<2xi32>
    %538 = vector.multi_reduction <minsi>, %537, %cst_222 [1] : vector<2x5xi32> to vector<2xi32>
    %539 = vector.shape_cast %538 : vector<2xi32> to vector<2x1xi32>
    %c2_223 = arith.constant 2 : index
    %c3_224 = arith.constant 3 : index
    %c0_225 = arith.constant 0 : index
    %c0_226 = arith.constant 0 : index
    %540 = vector.load %arg15[%c2_223, %c3_224, %c0_225, %c0_226] : memref<3x6x2x1xi32, #tpu.memory_space<vmem>>, vector<1x1x2x1xi32>
    %541 = vector.shape_cast %540 : vector<1x1x2x1xi32> to vector<2x1xi32>
    %542 = vector.shape_cast %539 : vector<2x1xi32> to vector<1x1x2x1xi32>
    tpu.vector_store %arg15[%c2_223, %c3_224, %c0_225, %c0_226], %542 {strides = array<i32>} : memref<3x6x2x1xi32, #tpu.memory_space<vmem>>, vector<1x1x2x1xi32>,
    %cst_227 = arith.constant 0.000000e+00 : f32
    %543 = vector.broadcast %cst_227 : f32 to vector<2x1xf32>
    %544 = arith.subf %543, %533 : vector<2x1xf32>
    %c2_228 = arith.constant 2 : index
    %c3_229 = arith.constant 3 : index
    %c0_230 = arith.constant 0 : index
    %c0_231 = arith.constant 0 : index
    %545 = vector.load %arg16[%c2_228, %c3_229, %c0_230, %c0_231] : memref<3x6x2x1xf32, #tpu.memory_space<vmem>>, vector<1x1x2x1xf32>
    %546 = vector.shape_cast %545 : vector<1x1x2x1xf32> to vector<2x1xf32>
    %547 = vector.shape_cast %544 : vector<2x1xf32> to vector<1x1x2x1xf32>
    tpu.vector_store %arg16[%c2_228, %c3_229, %c0_230, %c0_231], %547 {strides = array<i32>} : memref<3x6x2x1xf32, #tpu.memory_space<vmem>>, vector<1x1x2x1xf32>,
    %548 = vector.extract_strided_slice %0 {offsets = [4, 0, 0], sizes = [1, 2, 14], strides = [1, 1, 1]} : vector<6x2x14xf32> to vector<1x2x14xf32>
    %549 = vector.shape_cast %548 : vector<1x2x14xf32> to vector<2x14xf32>
    %550 = vector.extract_strided_slice %549 {offsets = [0, 0], sizes = [2, 8], strides = [1, 1]} : vector<2x14xf32> to vector<2x8xf32>
    %551 = vector.extract_strided_slice %549 {offsets = [0, 8], sizes = [2, 3], strides = [1, 1]} : vector<2x14xf32> to vector<2x3xf32>
    %552 = vector.extract_strided_slice %549 {offsets = [0, 11], sizes = [2, 3], strides = [1, 1]} : vector<2x14xf32> to vector<2x3xf32>
    %cst_232 = arith.constant dense<0.000000e+00> : vector<2x192xf32>
    %553 = tpu.matmul %550, %3, %cst_232 {dimension_numbers = #tpu.dot_dimension_numbers<[1], [0], [0], [1], [0, 0, 1, 1], [], []>} : vector<2x8xf32>, vector<8x192xf32>, vector<2x192xf32> -> vector<2x192xf32>
    %554 = vector.broadcast %5 : vector<1x192xf32> to vector<2x192xf32>
    %555 = arith.addf %553, %554 : vector<2x192xf32>
    %cst_233 = arith.constant dense<0.000000e+00> : vector<2x192xf32>
    %556 = tpu.matmul %451, %4, %cst_233 {dimension_numbers = #tpu.dot_dimension_numbers<[1], [0], [0], [1], [0, 0, 1, 1], [], []>} : vector<2x64xf32>, vector<64x192xf32>, vector<2x192xf32> -> vector<2x192xf32>
    %557 = vector.broadcast %6 : vector<1x192xf32> to vector<2x192xf32>
    %558 = arith.addf %556, %557 : vector<2x192xf32>
    %559 = vector.extract_strided_slice %555 {offsets = [0, 0], sizes = [2, 64], strides = [1, 1]} : vector<2x192xf32> to vector<2x64xf32>
    %560 = vector.extract_strided_slice %558 {offsets = [0, 0], sizes = [2, 64], strides = [1, 1]} : vector<2x192xf32> to vector<2x64xf32>
    %561 = arith.addf %559, %560 : vector<2x64xf32>
    %562 = arith.negf %561 : vector<2x64xf32>
    %563 = math.exp %562 : vector<2x64xf32>
    %cst_234 = arith.constant 1.000000e+00 : f32
    %564 = vector.broadcast %cst_234 : f32 to vector<2x64xf32>
    %565 = arith.addf %564, %563 : vector<2x64xf32>
    %566 = arith.divf %564, %565 : vector<2x64xf32>
    %567 = vector.extract_strided_slice %555 {offsets = [0, 64], sizes = [2, 64], strides = [1, 1]} : vector<2x192xf32> to vector<2x64xf32>
    %568 = vector.extract_strided_slice %558 {offsets = [0, 64], sizes = [2, 64], strides = [1, 1]} : vector<2x192xf32> to vector<2x64xf32>
    %569 = arith.addf %567, %568 : vector<2x64xf32>
    %570 = arith.negf %569 : vector<2x64xf32>
    %571 = math.exp %570 : vector<2x64xf32>
    %cst_235 = arith.constant 1.000000e+00 : f32
    %572 = vector.broadcast %cst_235 : f32 to vector<2x64xf32>
    %573 = arith.addf %572, %571 : vector<2x64xf32>
    %574 = arith.divf %572, %573 : vector<2x64xf32>
    %575 = vector.extract_strided_slice %555 {offsets = [0, 128], sizes = [2, 64], strides = [1, 1]} : vector<2x192xf32> to vector<2x64xf32>
    %576 = vector.extract_strided_slice %558 {offsets = [0, 128], sizes = [2, 64], strides = [1, 1]} : vector<2x192xf32> to vector<2x64xf32>
    %577 = arith.mulf %566, %576 : vector<2x64xf32>
    %578 = arith.addf %575, %577 : vector<2x64xf32>
    %579 = math.tanh %578 : vector<2x64xf32>
    %cst_236 = arith.constant 1.000000e+00 : f32
    %580 = vector.broadcast %cst_236 : f32 to vector<2x64xf32>
    %581 = arith.subf %580, %574 : vector<2x64xf32>
    %582 = arith.mulf %581, %579 : vector<2x64xf32>
    %583 = arith.mulf %574, %451 : vector<2x64xf32>
    %584 = arith.addf %582, %583 : vector<2x64xf32>
    %cst_237 = arith.constant dense<0.000000e+00> : vector<2x1xf32>
    %585 = tpu.matmul %584, %11, %cst_237 {dimension_numbers = #tpu.dot_dimension_numbers<[1], [0], [0], [1], [0, 0, 1, 1], [], []>} : vector<2x64xf32>, vector<64x1xf32>, vector<2x1xf32> -> vector<2x1xf32>
    %cst_238 = arith.constant dense<0.000000e+00> : vector<2x1xf32>
    %586 = tpu.matmul %551, %12, %cst_238 {dimension_numbers = #tpu.dot_dimension_numbers<[1], [0], [0], [1], [0, 0, 1, 1], [], []>} : vector<2x3xf32>, vector<3x1xf32>, vector<2x1xf32> -> vector<2x1xf32>
    %587 = arith.addf %585, %586 : vector<2x1xf32>
    %cst_239 = arith.constant dense<0.000000e+00> : vector<2x1xf32>
    %588 = tpu.matmul %552, %13, %cst_239 {dimension_numbers = #tpu.dot_dimension_numbers<[1], [0], [0], [1], [0, 0, 1, 1], [], []>} : vector<2x3xf32>, vector<3x1xf32>, vector<2x1xf32> -> vector<2x1xf32>
    %589 = arith.addf %587, %588 : vector<2x1xf32>
    %590 = vector.broadcast %14 : vector<1x1xf32> to vector<2x1xf32>
    %591 = arith.addf %589, %590 : vector<2x1xf32>
    %c4 = arith.constant 4 : index
    %c0_240 = arith.constant 0 : index
    %c0_241 = arith.constant 0 : index
    %592 = vector.load %arg14[%c4, %c0_240, %c0_241] : memref<6x2x1xf32, #tpu.memory_space<vmem>>, vector<1x2x1xf32>
    %593 = vector.shape_cast %592 : vector<1x2x1xf32> to vector<2x1xf32>
    %594 = vector.shape_cast %591 : vector<2x1xf32> to vector<1x2x1xf32>
    tpu.vector_store %arg14[%c4, %c0_240, %c0_241], %594 {strides = array<i32>} : memref<6x2x1xf32, #tpu.memory_space<vmem>>, vector<1x2x1xf32>,
    %cst_242 = arith.constant dense<0.000000e+00> : vector<2x5xf32>
    %595 = tpu.matmul %584, %7, %cst_242 {dimension_numbers = #tpu.dot_dimension_numbers<[1], [0], [0], [1], [0, 0, 1, 1], [], []>} : vector<2x64xf32>, vector<64x5xf32>, vector<2x5xf32> -> vector<2x5xf32>
    %cst_243 = arith.constant dense<0.000000e+00> : vector<2x5xf32>
    %596 = tpu.matmul %551, %8, %cst_243 {dimension_numbers = #tpu.dot_dimension_numbers<[1], [0], [0], [1], [0, 0, 1, 1], [], []>} : vector<2x3xf32>, vector<3x5xf32>, vector<2x5xf32> -> vector<2x5xf32>
    %597 = arith.addf %595, %596 : vector<2x5xf32>
    %598 = vector.broadcast %10 : vector<1x5xf32> to vector<2x5xf32>
    %599 = arith.addf %597, %598 : vector<2x5xf32>
    %600 = vector.extract_strided_slice %552 {offsets = [0, 0], sizes = [2, 1], strides = [1, 1]} : vector<2x3xf32> to vector<2x1xf32>
    %601 = vector.broadcast %600 : vector<2x1xf32> to vector<2x5xf32>
    %602 = vector.broadcast %9 : vector<1x5xf32> to vector<2x5xf32>
    %603 = arith.mulf %601, %602 : vector<2x5xf32>
    %604 = arith.addf %599, %603 : vector<2x5xf32>
    %cst_244 = arith.constant dense<0xFF800000> : vector<2xf32>
    %605 = vector.multi_reduction <maximumf>, %604, %cst_244 [1] : vector<2x5xf32> to vector<2xf32>
    %606 = vector.shape_cast %605 : vector<2xf32> to vector<2x1xf32>
    %607 = vector.broadcast %606 : vector<2x1xf32> to vector<2x5xf32>
    %608 = arith.subf %604, %607 : vector<2x5xf32>
    %609 = math.exp %608 : vector<2x5xf32>
    %cst_245 = arith.constant dense<0.000000e+00> : vector<2xf32>
    %610 = vector.multi_reduction <add>, %609, %cst_245 [1] : vector<2x5xf32> to vector<2xf32>
    %611 = vector.shape_cast %610 : vector<2xf32> to vector<2x1xf32>
    %612 = math.log %611 : vector<2x1xf32>
    %613 = vector.broadcast %606 : vector<2x1xf32> to vector<2x5xf32>
    %614 = arith.cmpf oeq, %604, %613 : vector<2x5xf32>
    %c5_i32_246 = arith.constant 5 : i32
    %615 = vector.broadcast %c5_i32_246 : i32 to vector<2x5xi32>
    %616 = arith.select %614, %15, %615 : vector<2x5xi1>, vector<2x5xi32>
    %cst_247 = arith.constant dense<2147483647> : vector<2xi32>
    %617 = vector.multi_reduction <minsi>, %616, %cst_247 [1] : vector<2x5xi32> to vector<2xi32>
    %618 = vector.shape_cast %617 : vector<2xi32> to vector<2x1xi32>
    %c0_248 = arith.constant 0 : index
    %c4_249 = arith.constant 4 : index
    %c0_250 = arith.constant 0 : index
    %c0_251 = arith.constant 0 : index
    %619 = vector.load %arg15[%c0_248, %c4_249, %c0_250, %c0_251] : memref<3x6x2x1xi32, #tpu.memory_space<vmem>>, vector<1x1x2x1xi32>
    %620 = vector.shape_cast %619 : vector<1x1x2x1xi32> to vector<2x1xi32>
    %621 = vector.shape_cast %618 : vector<2x1xi32> to vector<1x1x2x1xi32>
    tpu.vector_store %arg15[%c0_248, %c4_249, %c0_250, %c0_251], %621 {strides = array<i32>} : memref<3x6x2x1xi32, #tpu.memory_space<vmem>>, vector<1x1x2x1xi32>,
    %cst_252 = arith.constant 0.000000e+00 : f32
    %622 = vector.broadcast %cst_252 : f32 to vector<2x1xf32>
    %623 = arith.subf %622, %612 : vector<2x1xf32>
    %c0_253 = arith.constant 0 : index
    %c4_254 = arith.constant 4 : index
    %c0_255 = arith.constant 0 : index
    %c0_256 = arith.constant 0 : index
    %624 = vector.load %arg16[%c0_253, %c4_254, %c0_255, %c0_256] : memref<3x6x2x1xf32, #tpu.memory_space<vmem>>, vector<1x1x2x1xf32>
    %625 = vector.shape_cast %624 : vector<1x1x2x1xf32> to vector<2x1xf32>
    %626 = vector.shape_cast %623 : vector<2x1xf32> to vector<1x1x2x1xf32>
    tpu.vector_store %arg16[%c0_253, %c4_254, %c0_255, %c0_256], %626 {strides = array<i32>} : memref<3x6x2x1xf32, #tpu.memory_space<vmem>>, vector<1x1x2x1xf32>,
    %627 = vector.extract_strided_slice %552 {offsets = [0, 1], sizes = [2, 1], strides = [1, 1]} : vector<2x3xf32> to vector<2x1xf32>
    %628 = vector.broadcast %627 : vector<2x1xf32> to vector<2x5xf32>
    %629 = vector.broadcast %9 : vector<1x5xf32> to vector<2x5xf32>
    %630 = arith.mulf %628, %629 : vector<2x5xf32>
    %631 = arith.addf %599, %630 : vector<2x5xf32>
    %cst_257 = arith.constant dense<0xFF800000> : vector<2xf32>
    %632 = vector.multi_reduction <maximumf>, %631, %cst_257 [1] : vector<2x5xf32> to vector<2xf32>
    %633 = vector.shape_cast %632 : vector<2xf32> to vector<2x1xf32>
    %634 = vector.broadcast %633 : vector<2x1xf32> to vector<2x5xf32>
    %635 = arith.subf %631, %634 : vector<2x5xf32>
    %636 = math.exp %635 : vector<2x5xf32>
    %cst_258 = arith.constant dense<0.000000e+00> : vector<2xf32>
    %637 = vector.multi_reduction <add>, %636, %cst_258 [1] : vector<2x5xf32> to vector<2xf32>
    %638 = vector.shape_cast %637 : vector<2xf32> to vector<2x1xf32>
    %639 = math.log %638 : vector<2x1xf32>
    %640 = vector.broadcast %633 : vector<2x1xf32> to vector<2x5xf32>
    %641 = arith.cmpf oeq, %631, %640 : vector<2x5xf32>
    %c5_i32_259 = arith.constant 5 : i32
    %642 = vector.broadcast %c5_i32_259 : i32 to vector<2x5xi32>
    %643 = arith.select %641, %15, %642 : vector<2x5xi1>, vector<2x5xi32>
    %cst_260 = arith.constant dense<2147483647> : vector<2xi32>
    %644 = vector.multi_reduction <minsi>, %643, %cst_260 [1] : vector<2x5xi32> to vector<2xi32>
    %645 = vector.shape_cast %644 : vector<2xi32> to vector<2x1xi32>
    %c1_261 = arith.constant 1 : index
    %c4_262 = arith.constant 4 : index
    %c0_263 = arith.constant 0 : index
    %c0_264 = arith.constant 0 : index
    %646 = vector.load %arg15[%c1_261, %c4_262, %c0_263, %c0_264] : memref<3x6x2x1xi32, #tpu.memory_space<vmem>>, vector<1x1x2x1xi32>
    %647 = vector.shape_cast %646 : vector<1x1x2x1xi32> to vector<2x1xi32>
    %648 = vector.shape_cast %645 : vector<2x1xi32> to vector<1x1x2x1xi32>
    tpu.vector_store %arg15[%c1_261, %c4_262, %c0_263, %c0_264], %648 {strides = array<i32>} : memref<3x6x2x1xi32, #tpu.memory_space<vmem>>, vector<1x1x2x1xi32>,
    %cst_265 = arith.constant 0.000000e+00 : f32
    %649 = vector.broadcast %cst_265 : f32 to vector<2x1xf32>
    %650 = arith.subf %649, %639 : vector<2x1xf32>
    %c1_266 = arith.constant 1 : index
    %c4_267 = arith.constant 4 : index
    %c0_268 = arith.constant 0 : index
    %c0_269 = arith.constant 0 : index
    %651 = vector.load %arg16[%c1_266, %c4_267, %c0_268, %c0_269] : memref<3x6x2x1xf32, #tpu.memory_space<vmem>>, vector<1x1x2x1xf32>
    %652 = vector.shape_cast %651 : vector<1x1x2x1xf32> to vector<2x1xf32>
    %653 = vector.shape_cast %650 : vector<2x1xf32> to vector<1x1x2x1xf32>
    tpu.vector_store %arg16[%c1_266, %c4_267, %c0_268, %c0_269], %653 {strides = array<i32>} : memref<3x6x2x1xf32, #tpu.memory_space<vmem>>, vector<1x1x2x1xf32>,
    %654 = vector.extract_strided_slice %552 {offsets = [0, 2], sizes = [2, 1], strides = [1, 1]} : vector<2x3xf32> to vector<2x1xf32>
    %655 = vector.broadcast %654 : vector<2x1xf32> to vector<2x5xf32>
    %656 = vector.broadcast %9 : vector<1x5xf32> to vector<2x5xf32>
    %657 = arith.mulf %655, %656 : vector<2x5xf32>
    %658 = arith.addf %599, %657 : vector<2x5xf32>
    %cst_270 = arith.constant dense<0xFF800000> : vector<2xf32>
    %659 = vector.multi_reduction <maximumf>, %658, %cst_270 [1] : vector<2x5xf32> to vector<2xf32>
    %660 = vector.shape_cast %659 : vector<2xf32> to vector<2x1xf32>
    %661 = vector.broadcast %660 : vector<2x1xf32> to vector<2x5xf32>
    %662 = arith.subf %658, %661 : vector<2x5xf32>
    %663 = math.exp %662 : vector<2x5xf32>
    %cst_271 = arith.constant dense<0.000000e+00> : vector<2xf32>
    %664 = vector.multi_reduction <add>, %663, %cst_271 [1] : vector<2x5xf32> to vector<2xf32>
    %665 = vector.shape_cast %664 : vector<2xf32> to vector<2x1xf32>
    %666 = math.log %665 : vector<2x1xf32>
    %667 = vector.broadcast %660 : vector<2x1xf32> to vector<2x5xf32>
    %668 = arith.cmpf oeq, %658, %667 : vector<2x5xf32>
    %c5_i32_272 = arith.constant 5 : i32
    %669 = vector.broadcast %c5_i32_272 : i32 to vector<2x5xi32>
    %670 = arith.select %668, %15, %669 : vector<2x5xi1>, vector<2x5xi32>
    %cst_273 = arith.constant dense<2147483647> : vector<2xi32>
    %671 = vector.multi_reduction <minsi>, %670, %cst_273 [1] : vector<2x5xi32> to vector<2xi32>
    %672 = vector.shape_cast %671 : vector<2xi32> to vector<2x1xi32>
    %c2_274 = arith.constant 2 : index
    %c4_275 = arith.constant 4 : index
    %c0_276 = arith.constant 0 : index
    %c0_277 = arith.constant 0 : index
    %673 = vector.load %arg15[%c2_274, %c4_275, %c0_276, %c0_277] : memref<3x6x2x1xi32, #tpu.memory_space<vmem>>, vector<1x1x2x1xi32>
    %674 = vector.shape_cast %673 : vector<1x1x2x1xi32> to vector<2x1xi32>
    %675 = vector.shape_cast %672 : vector<2x1xi32> to vector<1x1x2x1xi32>
    tpu.vector_store %arg15[%c2_274, %c4_275, %c0_276, %c0_277], %675 {strides = array<i32>} : memref<3x6x2x1xi32, #tpu.memory_space<vmem>>, vector<1x1x2x1xi32>,
    %cst_278 = arith.constant 0.000000e+00 : f32
    %676 = vector.broadcast %cst_278 : f32 to vector<2x1xf32>
    %677 = arith.subf %676, %666 : vector<2x1xf32>
    %c2_279 = arith.constant 2 : index
    %c4_280 = arith.constant 4 : index
    %c0_281 = arith.constant 0 : index
    %c0_282 = arith.constant 0 : index
    %678 = vector.load %arg16[%c2_279, %c4_280, %c0_281, %c0_282] : memref<3x6x2x1xf32, #tpu.memory_space<vmem>>, vector<1x1x2x1xf32>
    %679 = vector.shape_cast %678 : vector<1x1x2x1xf32> to vector<2x1xf32>
    %680 = vector.shape_cast %677 : vector<2x1xf32> to vector<1x1x2x1xf32>
    tpu.vector_store %arg16[%c2_279, %c4_280, %c0_281, %c0_282], %680 {strides = array<i32>} : memref<3x6x2x1xf32, #tpu.memory_space<vmem>>, vector<1x1x2x1xf32>,
    %681 = vector.extract_strided_slice %0 {offsets = [5, 0, 0], sizes = [1, 2, 14], strides = [1, 1, 1]} : vector<6x2x14xf32> to vector<1x2x14xf32>
    %682 = vector.shape_cast %681 : vector<1x2x14xf32> to vector<2x14xf32>
    %683 = vector.extract_strided_slice %682 {offsets = [0, 0], sizes = [2, 8], strides = [1, 1]} : vector<2x14xf32> to vector<2x8xf32>
    %684 = vector.extract_strided_slice %682 {offsets = [0, 8], sizes = [2, 3], strides = [1, 1]} : vector<2x14xf32> to vector<2x3xf32>
    %685 = vector.extract_strided_slice %682 {offsets = [0, 11], sizes = [2, 3], strides = [1, 1]} : vector<2x14xf32> to vector<2x3xf32>
    %cst_283 = arith.constant dense<0.000000e+00> : vector<2x192xf32>
    %686 = tpu.matmul %683, %3, %cst_283 {dimension_numbers = #tpu.dot_dimension_numbers<[1], [0], [0], [1], [0, 0, 1, 1], [], []>} : vector<2x8xf32>, vector<8x192xf32>, vector<2x192xf32> -> vector<2x192xf32>
    %687 = vector.broadcast %5 : vector<1x192xf32> to vector<2x192xf32>
    %688 = arith.addf %686, %687 : vector<2x192xf32>
    %cst_284 = arith.constant dense<0.000000e+00> : vector<2x192xf32>
    %689 = tpu.matmul %584, %4, %cst_284 {dimension_numbers = #tpu.dot_dimension_numbers<[1], [0], [0], [1], [0, 0, 1, 1], [], []>} : vector<2x64xf32>, vector<64x192xf32>, vector<2x192xf32> -> vector<2x192xf32>
    %690 = vector.broadcast %6 : vector<1x192xf32> to vector<2x192xf32>
    %691 = arith.addf %689, %690 : vector<2x192xf32>
    %692 = vector.extract_strided_slice %688 {offsets = [0, 0], sizes = [2, 64], strides = [1, 1]} : vector<2x192xf32> to vector<2x64xf32>
    %693 = vector.extract_strided_slice %691 {offsets = [0, 0], sizes = [2, 64], strides = [1, 1]} : vector<2x192xf32> to vector<2x64xf32>
    %694 = arith.addf %692, %693 : vector<2x64xf32>
    %695 = arith.negf %694 : vector<2x64xf32>
    %696 = math.exp %695 : vector<2x64xf32>
    %cst_285 = arith.constant 1.000000e+00 : f32
    %697 = vector.broadcast %cst_285 : f32 to vector<2x64xf32>
    %698 = arith.addf %697, %696 : vector<2x64xf32>
    %699 = arith.divf %697, %698 : vector<2x64xf32>
    %700 = vector.extract_strided_slice %688 {offsets = [0, 64], sizes = [2, 64], strides = [1, 1]} : vector<2x192xf32> to vector<2x64xf32>
    %701 = vector.extract_strided_slice %691 {offsets = [0, 64], sizes = [2, 64], strides = [1, 1]} : vector<2x192xf32> to vector<2x64xf32>
    %702 = arith.addf %700, %701 : vector<2x64xf32>
    %703 = arith.negf %702 : vector<2x64xf32>
    %704 = math.exp %703 : vector<2x64xf32>
    %cst_286 = arith.constant 1.000000e+00 : f32
    %705 = vector.broadcast %cst_286 : f32 to vector<2x64xf32>
    %706 = arith.addf %705, %704 : vector<2x64xf32>
    %707 = arith.divf %705, %706 : vector<2x64xf32>
    %708 = vector.extract_strided_slice %688 {offsets = [0, 128], sizes = [2, 64], strides = [1, 1]} : vector<2x192xf32> to vector<2x64xf32>
    %709 = vector.extract_strided_slice %691 {offsets = [0, 128], sizes = [2, 64], strides = [1, 1]} : vector<2x192xf32> to vector<2x64xf32>
    %710 = arith.mulf %699, %709 : vector<2x64xf32>
    %711 = arith.addf %708, %710 : vector<2x64xf32>
    %712 = math.tanh %711 : vector<2x64xf32>
    %cst_287 = arith.constant 1.000000e+00 : f32
    %713 = vector.broadcast %cst_287 : f32 to vector<2x64xf32>
    %714 = arith.subf %713, %707 : vector<2x64xf32>
    %715 = arith.mulf %714, %712 : vector<2x64xf32>
    %716 = arith.mulf %707, %584 : vector<2x64xf32>
    %717 = arith.addf %715, %716 : vector<2x64xf32>
    %cst_288 = arith.constant dense<0.000000e+00> : vector<2x1xf32>
    %718 = tpu.matmul %717, %11, %cst_288 {dimension_numbers = #tpu.dot_dimension_numbers<[1], [0], [0], [1], [0, 0, 1, 1], [], []>} : vector<2x64xf32>, vector<64x1xf32>, vector<2x1xf32> -> vector<2x1xf32>
    %cst_289 = arith.constant dense<0.000000e+00> : vector<2x1xf32>
    %719 = tpu.matmul %684, %12, %cst_289 {dimension_numbers = #tpu.dot_dimension_numbers<[1], [0], [0], [1], [0, 0, 1, 1], [], []>} : vector<2x3xf32>, vector<3x1xf32>, vector<2x1xf32> -> vector<2x1xf32>
    %720 = arith.addf %718, %719 : vector<2x1xf32>
    %cst_290 = arith.constant dense<0.000000e+00> : vector<2x1xf32>
    %721 = tpu.matmul %685, %13, %cst_290 {dimension_numbers = #tpu.dot_dimension_numbers<[1], [0], [0], [1], [0, 0, 1, 1], [], []>} : vector<2x3xf32>, vector<3x1xf32>, vector<2x1xf32> -> vector<2x1xf32>
    %722 = arith.addf %720, %721 : vector<2x1xf32>
    %723 = vector.broadcast %14 : vector<1x1xf32> to vector<2x1xf32>
    %724 = arith.addf %722, %723 : vector<2x1xf32>
    %c5 = arith.constant 5 : index
    %c0_291 = arith.constant 0 : index
    %c0_292 = arith.constant 0 : index
    %725 = vector.load %arg14[%c5, %c0_291, %c0_292] : memref<6x2x1xf32, #tpu.memory_space<vmem>>, vector<1x2x1xf32>
    %726 = vector.shape_cast %725 : vector<1x2x1xf32> to vector<2x1xf32>
    %727 = vector.shape_cast %724 : vector<2x1xf32> to vector<1x2x1xf32>
    tpu.vector_store %arg14[%c5, %c0_291, %c0_292], %727 {strides = array<i32>} : memref<6x2x1xf32, #tpu.memory_space<vmem>>, vector<1x2x1xf32>,
    %cst_293 = arith.constant dense<0.000000e+00> : vector<2x5xf32>
    %728 = tpu.matmul %717, %7, %cst_293 {dimension_numbers = #tpu.dot_dimension_numbers<[1], [0], [0], [1], [0, 0, 1, 1], [], []>} : vector<2x64xf32>, vector<64x5xf32>, vector<2x5xf32> -> vector<2x5xf32>
    %cst_294 = arith.constant dense<0.000000e+00> : vector<2x5xf32>
    %729 = tpu.matmul %684, %8, %cst_294 {dimension_numbers = #tpu.dot_dimension_numbers<[1], [0], [0], [1], [0, 0, 1, 1], [], []>} : vector<2x3xf32>, vector<3x5xf32>, vector<2x5xf32> -> vector<2x5xf32>
    %730 = arith.addf %728, %729 : vector<2x5xf32>
    %731 = vector.broadcast %10 : vector<1x5xf32> to vector<2x5xf32>
    %732 = arith.addf %730, %731 : vector<2x5xf32>
    %733 = vector.extract_strided_slice %685 {offsets = [0, 0], sizes = [2, 1], strides = [1, 1]} : vector<2x3xf32> to vector<2x1xf32>
    %734 = vector.broadcast %733 : vector<2x1xf32> to vector<2x5xf32>
    %735 = vector.broadcast %9 : vector<1x5xf32> to vector<2x5xf32>
    %736 = arith.mulf %734, %735 : vector<2x5xf32>
    %737 = arith.addf %732, %736 : vector<2x5xf32>
    %cst_295 = arith.constant dense<0xFF800000> : vector<2xf32>
    %738 = vector.multi_reduction <maximumf>, %737, %cst_295 [1] : vector<2x5xf32> to vector<2xf32>
    %739 = vector.shape_cast %738 : vector<2xf32> to vector<2x1xf32>
    %740 = vector.broadcast %739 : vector<2x1xf32> to vector<2x5xf32>
    %741 = arith.subf %737, %740 : vector<2x5xf32>
    %742 = math.exp %741 : vector<2x5xf32>
    %cst_296 = arith.constant dense<0.000000e+00> : vector<2xf32>
    %743 = vector.multi_reduction <add>, %742, %cst_296 [1] : vector<2x5xf32> to vector<2xf32>
    %744 = vector.shape_cast %743 : vector<2xf32> to vector<2x1xf32>
    %745 = math.log %744 : vector<2x1xf32>
    %746 = vector.broadcast %739 : vector<2x1xf32> to vector<2x5xf32>
    %747 = arith.cmpf oeq, %737, %746 : vector<2x5xf32>
    %c5_i32_297 = arith.constant 5 : i32
    %748 = vector.broadcast %c5_i32_297 : i32 to vector<2x5xi32>
    %749 = arith.select %747, %15, %748 : vector<2x5xi1>, vector<2x5xi32>
    %cst_298 = arith.constant dense<2147483647> : vector<2xi32>
    %750 = vector.multi_reduction <minsi>, %749, %cst_298 [1] : vector<2x5xi32> to vector<2xi32>
    %751 = vector.shape_cast %750 : vector<2xi32> to vector<2x1xi32>
    %c0_299 = arith.constant 0 : index
    %c5_300 = arith.constant 5 : index
    %c0_301 = arith.constant 0 : index
    %c0_302 = arith.constant 0 : index
    %752 = vector.load %arg15[%c0_299, %c5_300, %c0_301, %c0_302] : memref<3x6x2x1xi32, #tpu.memory_space<vmem>>, vector<1x1x2x1xi32>
    %753 = vector.shape_cast %752 : vector<1x1x2x1xi32> to vector<2x1xi32>
    %754 = vector.shape_cast %751 : vector<2x1xi32> to vector<1x1x2x1xi32>
    tpu.vector_store %arg15[%c0_299, %c5_300, %c0_301, %c0_302], %754 {strides = array<i32>} : memref<3x6x2x1xi32, #tpu.memory_space<vmem>>, vector<1x1x2x1xi32>,
    %cst_303 = arith.constant 0.000000e+00 : f32
    %755 = vector.broadcast %cst_303 : f32 to vector<2x1xf32>
    %756 = arith.subf %755, %745 : vector<2x1xf32>
    %c0_304 = arith.constant 0 : index
    %c5_305 = arith.constant 5 : index
    %c0_306 = arith.constant 0 : index
    %c0_307 = arith.constant 0 : index
    %757 = vector.load %arg16[%c0_304, %c5_305, %c0_306, %c0_307] : memref<3x6x2x1xf32, #tpu.memory_space<vmem>>, vector<1x1x2x1xf32>
    %758 = vector.shape_cast %757 : vector<1x1x2x1xf32> to vector<2x1xf32>
    %759 = vector.shape_cast %756 : vector<2x1xf32> to vector<1x1x2x1xf32>
    tpu.vector_store %arg16[%c0_304, %c5_305, %c0_306, %c0_307], %759 {strides = array<i32>} : memref<3x6x2x1xf32, #tpu.memory_space<vmem>>, vector<1x1x2x1xf32>,
    %760 = vector.extract_strided_slice %685 {offsets = [0, 1], sizes = [2, 1], strides = [1, 1]} : vector<2x3xf32> to vector<2x1xf32>
    %761 = vector.broadcast %760 : vector<2x1xf32> to vector<2x5xf32>
    %762 = vector.broadcast %9 : vector<1x5xf32> to vector<2x5xf32>
    %763 = arith.mulf %761, %762 : vector<2x5xf32>
    %764 = arith.addf %732, %763 : vector<2x5xf32>
    %cst_308 = arith.constant dense<0xFF800000> : vector<2xf32>
    %765 = vector.multi_reduction <maximumf>, %764, %cst_308 [1] : vector<2x5xf32> to vector<2xf32>
    %766 = vector.shape_cast %765 : vector<2xf32> to vector<2x1xf32>
    %767 = vector.broadcast %766 : vector<2x1xf32> to vector<2x5xf32>
    %768 = arith.subf %764, %767 : vector<2x5xf32>
    %769 = math.exp %768 : vector<2x5xf32>
    %cst_309 = arith.constant dense<0.000000e+00> : vector<2xf32>
    %770 = vector.multi_reduction <add>, %769, %cst_309 [1] : vector<2x5xf32> to vector<2xf32>
    %771 = vector.shape_cast %770 : vector<2xf32> to vector<2x1xf32>
    %772 = math.log %771 : vector<2x1xf32>
    %773 = vector.broadcast %766 : vector<2x1xf32> to vector<2x5xf32>
    %774 = arith.cmpf oeq, %764, %773 : vector<2x5xf32>
    %c5_i32_310 = arith.constant 5 : i32
    %775 = vector.broadcast %c5_i32_310 : i32 to vector<2x5xi32>
    %776 = arith.select %774, %15, %775 : vector<2x5xi1>, vector<2x5xi32>
    %cst_311 = arith.constant dense<2147483647> : vector<2xi32>
    %777 = vector.multi_reduction <minsi>, %776, %cst_311 [1] : vector<2x5xi32> to vector<2xi32>
    %778 = vector.shape_cast %777 : vector<2xi32> to vector<2x1xi32>
    %c1_312 = arith.constant 1 : index
    %c5_313 = arith.constant 5 : index
    %c0_314 = arith.constant 0 : index
    %c0_315 = arith.constant 0 : index
    %779 = vector.load %arg15[%c1_312, %c5_313, %c0_314, %c0_315] : memref<3x6x2x1xi32, #tpu.memory_space<vmem>>, vector<1x1x2x1xi32>
    %780 = vector.shape_cast %779 : vector<1x1x2x1xi32> to vector<2x1xi32>
    %781 = vector.shape_cast %778 : vector<2x1xi32> to vector<1x1x2x1xi32>
    tpu.vector_store %arg15[%c1_312, %c5_313, %c0_314, %c0_315], %781 {strides = array<i32>} : memref<3x6x2x1xi32, #tpu.memory_space<vmem>>, vector<1x1x2x1xi32>,
    %cst_316 = arith.constant 0.000000e+00 : f32
    %782 = vector.broadcast %cst_316 : f32 to vector<2x1xf32>
    %783 = arith.subf %782, %772 : vector<2x1xf32>
    %c1_317 = arith.constant 1 : index
    %c5_318 = arith.constant 5 : index
    %c0_319 = arith.constant 0 : index
    %c0_320 = arith.constant 0 : index
    %784 = vector.load %arg16[%c1_317, %c5_318, %c0_319, %c0_320] : memref<3x6x2x1xf32, #tpu.memory_space<vmem>>, vector<1x1x2x1xf32>
    %785 = vector.shape_cast %784 : vector<1x1x2x1xf32> to vector<2x1xf32>
    %786 = vector.shape_cast %783 : vector<2x1xf32> to vector<1x1x2x1xf32>
    tpu.vector_store %arg16[%c1_317, %c5_318, %c0_319, %c0_320], %786 {strides = array<i32>} : memref<3x6x2x1xf32, #tpu.memory_space<vmem>>, vector<1x1x2x1xf32>,
    %787 = vector.extract_strided_slice %685 {offsets = [0, 2], sizes = [2, 1], strides = [1, 1]} : vector<2x3xf32> to vector<2x1xf32>
    %788 = vector.broadcast %787 : vector<2x1xf32> to vector<2x5xf32>
    %789 = vector.broadcast %9 : vector<1x5xf32> to vector<2x5xf32>
    %790 = arith.mulf %788, %789 : vector<2x5xf32>
    %791 = arith.addf %732, %790 : vector<2x5xf32>
    %cst_321 = arith.constant dense<0xFF800000> : vector<2xf32>
    %792 = vector.multi_reduction <maximumf>, %791, %cst_321 [1] : vector<2x5xf32> to vector<2xf32>
    %793 = vector.shape_cast %792 : vector<2xf32> to vector<2x1xf32>
    %794 = vector.broadcast %793 : vector<2x1xf32> to vector<2x5xf32>
    %795 = arith.subf %791, %794 : vector<2x5xf32>
    %796 = math.exp %795 : vector<2x5xf32>
    %cst_322 = arith.constant dense<0.000000e+00> : vector<2xf32>
    %797 = vector.multi_reduction <add>, %796, %cst_322 [1] : vector<2x5xf32> to vector<2xf32>
    %798 = vector.shape_cast %797 : vector<2xf32> to vector<2x1xf32>
    %799 = math.log %798 : vector<2x1xf32>
    %800 = vector.broadcast %793 : vector<2x1xf32> to vector<2x5xf32>
    %801 = arith.cmpf oeq, %791, %800 : vector<2x5xf32>
    %c5_i32_323 = arith.constant 5 : i32
    %802 = vector.broadcast %c5_i32_323 : i32 to vector<2x5xi32>
    %803 = arith.select %801, %15, %802 : vector<2x5xi1>, vector<2x5xi32>
    %cst_324 = arith.constant dense<2147483647> : vector<2xi32>
    %804 = vector.multi_reduction <minsi>, %803, %cst_324 [1] : vector<2x5xi32> to vector<2xi32>
    %805 = vector.shape_cast %804 : vector<2xi32> to vector<2x1xi32>
    %c2_325 = arith.constant 2 : index
    %c5_326 = arith.constant 5 : index
    %c0_327 = arith.constant 0 : index
    %c0_328 = arith.constant 0 : index
    %806 = vector.load %arg15[%c2_325, %c5_326, %c0_327, %c0_328] : memref<3x6x2x1xi32, #tpu.memory_space<vmem>>, vector<1x1x2x1xi32>
    %807 = vector.shape_cast %806 : vector<1x1x2x1xi32> to vector<2x1xi32>
    %808 = vector.shape_cast %805 : vector<2x1xi32> to vector<1x1x2x1xi32>
    tpu.vector_store %arg15[%c2_325, %c5_326, %c0_327, %c0_328], %808 {strides = array<i32>} : memref<3x6x2x1xi32, #tpu.memory_space<vmem>>, vector<1x1x2x1xi32>,
    %cst_329 = arith.constant 0.000000e+00 : f32
    %809 = vector.broadcast %cst_329 : f32 to vector<2x1xf32>
    %810 = arith.subf %809, %799 : vector<2x1xf32>
    %c2_330 = arith.constant 2 : index
    %c5_331 = arith.constant 5 : index
    %c0_332 = arith.constant 0 : index
    %c0_333 = arith.constant 0 : index
    %811 = vector.load %arg16[%c2_330, %c5_331, %c0_332, %c0_333] : memref<3x6x2x1xf32, #tpu.memory_space<vmem>>, vector<1x1x2x1xf32>
    %812 = vector.shape_cast %811 : vector<1x1x2x1xf32> to vector<2x1xf32>
    %813 = vector.shape_cast %810 : vector<2x1xf32> to vector<1x1x2x1xf32>
    tpu.vector_store %arg16[%c2_330, %c5_331, %c0_332, %c0_333], %813 {strides = array<i32>} : memref<3x6x2x1xf32, #tpu.memory_space<vmem>>, vector<1x1x2x1xf32>,
    return
  }
}

</mosaic_0001>

<llo_original>
// kernel: policy_act.1
$region0: #{policy_act.1}
  #allocation0 [shape = 'u32[]', space=smem, size = 0x4, offset = 0x4, fixed_abs, tag = 'smem constant byte address 0x4 - core index']
  #allocation1 [shape = 'u32[144,128]{1,0:T(1,128)}', space=vmem, size = 0x12000, scoped, tag = 'internal scratch']
  #allocation2 [shape = 'f32[1,1]{1,0:T(1,128)S(1)}', space=vmem, size = 0x200, scoped, tag = 'scoped memory for policy_act.1']
  %s0 = inlined_call_operand.vmem [shape: f32[6,2,14], index: 0, kind: input, shape index: {}]
  %s1 = inlined_call_operand.vmem [shape: f32[1,2,64], index: 1, kind: input, shape index: {}]
  %s2 = inlined_call_operand.vmem [shape: f32[8,192], index: 2, kind: input, shape index: {}]
  %s3 = inlined_call_operand.vmem [shape: f32[64,192], index: 3, kind: input, shape index: {}]
  %s4 = inlined_call_operand.vmem [shape: f32[1,192], index: 4, kind: input, shape index: {}]
  %s5 = inlined_call_operand.vmem [shape: f32[1,192], index: 5, kind: input, shape index: {}]
  %s6 = inlined_call_operand.vmem [shape: f32[64,5], index: 6, kind: input, shape index: {}]
  %s7 = inlined_call_operand.hbm [shape: f32[3,5], index: 7, kind: input, shape index: {}]
  %s8 = inlined_call_operand.hbm [shape: f32[1,5], index: 8, kind: input, shape index: {}]
  %s9 = inlined_call_operand.vmem [shape: f32[1,5], index: 9, kind: input, shape index: {}]
  %s10 = inlined_call_operand.vmem [shape: f32[64,1], index: 10, kind: input, shape index: {}]
  %s11 = inlined_call_operand.vmem [shape: f32[3,1], index: 11, kind: input, shape index: {}]
  %s12 = inlined_call_operand.vmem [shape: f32[3,1], index: 12, kind: input, shape index: {}]
  %s13 = inlined_call_operand.<no memory space> [shape: f32[1,1], index: 13, kind: input, shape index: {}]
  %s14 = inlined_call_operand.vmem [shape: f32[6,2,1], index: 14, kind: output, shape index: {0}]
  %s15 = inlined_call_operand.vmem [shape: s32[3,6,2,1], index: 15, kind: output, shape index: {1}]
  %s16 = inlined_call_operand.vmem [shape: f32[3,6,2,1], index: 16, kind: output, shape index: {2}]
  %17 = xla_tuple %s14, %s15, %s16
  %s18 = sld [smem:[#allocation0]]
  $region90: #{policy_act.1} parent=0
    _
  %s20 = ssub.s32 1, %s18
  %s21 = scalar_select 0, %s20, %s18
  %v22 = vstv %s13
  %23 = vst [vmem:[#allocation2] sm:$0x1] %v22
  $region1: #{policy_act.1} parent=0
    #allocation3 [shape = 'u8[2048]{0}', space=vmem, size = 0x800, scoped, tag = 'input window, operand 7, single buffered']
    #allocation4 [shape = 's32[1]{0}', space=sflag, size = 0x4, scoped, tag = 'scoped memory for policy_act.1']
    #allocation5 [shape = 'u8[512]{0}', space=vmem, size = 0x400, scoped, tag = 'input window, operand 8, single buffered']
    #allocation6 [shape = 's32[1]{0}', space=sflag, size = 0x4, scoped, tag = 'scoped memory for policy_act.1']
    %24 = vsyncpa [#allocation4], 0
    %25 = vsyncpa [#allocation6], 0
    // Predicated region
    $region2: #{policy_act.1} parent=1 // pred_check
      _
    $region3: #{policy_act.1} parent=1 // pred_check_branch
      %27 = sbr.rel (0) target = $region5
    $region4: #{policy_act.1} parent=1 // pred_region
      _
    $region5: #{policy_act.1} parent=1 // pred_fallthru
      _
    // Predicated region
    $region6: #{policy_act.1} parent=1 // pred_check
      _
    $region7: #{policy_act.1} parent=1 // pred_check_branch
      %29 = sbr.rel (0) target = $region9
    $region8: #{policy_act.1} parent=1 // pred_region
      _
    $region9: #{policy_act.1} parent=1 // pred_fallthru
      _
    // Predicated region
    $region10: #{policy_act.1} parent=1 // pred_check
      _
    $region11: #{policy_act.1} parent=1 // pred_check_branch
      %31 = sbr.rel (0) target = $region13
    $region12: #{policy_act.1} parent=1 // pred_region
      _
    $region13: #{policy_act.1} parent=1 // pred_fallthru
      _
    // Predicated region
    $region14: #{policy_act.1} parent=1 // pred_check
      _
    $region15: #{policy_act.1} parent=1 // pred_check_branch
      %33 = sbr.rel (0) target = $region17
    $region16: #{policy_act.1} parent=1 // pred_region
      _
    $region17: #{policy_act.1} parent=1 // pred_fallthru
      _
    // Predicated region
    $region18: #{policy_act.1} parent=1 // pred_check
      _
    $region19: #{policy_act.1} parent=1 // pred_check_branch
      %35 = sbr.rel (0) target = $region21
    $region20: #{policy_act.1} parent=1 // pred_region
      _
    $region21: #{policy_act.1} parent=1 // pred_fallthru
      _
    // Predicated region
    $region22: #{policy_act.1} parent=1 // pred_check
      _
    $region23: #{policy_act.1} parent=1 // pred_check_branch
      %37 = sbr.rel (0) target = $region25
    $region24: #{policy_act.1} parent=1 // pred_region
      _
    $region25: #{policy_act.1} parent=1 // pred_fallthru
      _
    // Predicated region
    $region26: #{policy_act.1} parent=1 // pred_check
      _
    $region27: #{policy_act.1} parent=1 // pred_check_branch
      %39 = sbr.rel (0) target = $region29
    $region28: #{policy_act.1} parent=1 // pred_region
      _
    $region29: #{policy_act.1} parent=1 // pred_fallthru
      _
    // Predicated region
    $region30: #{policy_act.1} parent=1 // pred_check
      _
    $region31: #{policy_act.1} parent=1 // pred_check_branch
      %41 = sbr.rel (0) target = $region33
    $region32: #{policy_act.1} parent=1 // pred_region
      %s43 = ssub.s32 64, 64
      %44 = vsyncadd [#allocation4], %s43
      %s46 = sshll.u32 [#allocation3], 4
      %s47 = int_to_ptr.vmem [resolvable:$true] %s46
      %49 = dma.hbm_to_vmem [thread:$0]  %s7, 64, %s47, [#allocation4]
    $region33: #{policy_act.1} parent=1 // pred_fallthru
      _
    // Predicated region
    $region34: #{policy_act.1} parent=1 // pred_check
      _
    $region35: #{policy_act.1} parent=1 // pred_check_branch
      %51 = sbr.rel (0) target = $region37
    $region36: #{policy_act.1} parent=1 // pred_region
      %s53 = ssub.s32 16, 16
      %54 = vsyncadd [#allocation6], %s53
      %s56 = sshll.u32 [#allocation5], 4
      %s57 = int_to_ptr.vmem [resolvable:$true] %s56
      %59 = dma.hbm_to_vmem [thread:$0]  %s8, 16, %s57, [#allocation6]
    $region37: #{policy_act.1} parent=1 // pred_fallthru
      _
    // Predicated region
    $region38: #{policy_act.1} parent=1 // pred_check
      _
    $region39: #{policy_act.1} parent=1 // pred_check_branch
      %61 = sbr.rel (0) target = $region41
    $region40: #{policy_act.1} parent=1 // pred_region
      _
    $region41: #{policy_act.1} parent=1 // pred_fallthru
      _
    // Predicated region
    $region42: #{policy_act.1} parent=1 // pred_check
      _
    $region43: #{policy_act.1} parent=1 // pred_check_branch
      %63 = sbr.rel (0) target = $region45
    $region44: #{policy_act.1} parent=1 // pred_region
      _
    $region45: #{policy_act.1} parent=1 // pred_fallthru
      _
    // Predicated region
    $region46: #{policy_act.1} parent=1 // pred_check
      _
    $region47: #{policy_act.1} parent=1 // pred_check_branch
      %65 = sbr.rel (0) target = $region49
    $region48: #{policy_act.1} parent=1 // pred_region
      _
    $region49: #{policy_act.1} parent=1 // pred_fallthru
      _
    // Predicated region
    $region50: #{policy_act.1} parent=1 // pred_check
      _
    $region51: #{policy_act.1} parent=1 // pred_check_branch
      %67 = sbr.rel (0) target = $region53
    $region52: #{policy_act.1} parent=1 // pred_region
      _
    $region53: #{policy_act.1} parent=1 // pred_fallthru
      _
    // Predicated region
    $region54: #{policy_act.1} parent=1 // pred_check
      _
    $region55: #{policy_act.1} parent=1 // pred_check_branch
      %69 = sbr.rel (0) target = $region57
    $region56: #{policy_act.1} parent=1 // pred_region
      _
    $region57: #{policy_act.1} parent=1 // pred_fallthru
      _
    // Predicated region
    $region58: #{policy_act.1} parent=1 // pred_check
      _
    $region59: #{policy_act.1} parent=1 // pred_check_branch
      %71 = sbr.rel (0) target = $region61
    $region60: #{policy_act.1} parent=1 // pred_region
      %72 = dma.done [#allocation4], 64
    $region61: #{policy_act.1} parent=1 // pred_fallthru
      _
    // Predicated region
    $region62: #{policy_act.1} parent=1 // pred_check
      _
    $region63: #{policy_act.1} parent=1 // pred_check_branch
      %74 = sbr.rel (0) target = $region65
    $region64: #{policy_act.1} parent=1 // pred_region
      %75 = dma.done [#allocation6], 16
    $region65: #{policy_act.1} parent=1 // pred_fallthru
      _
    %v76 = vld [vmem:[%s0] sm:$0x3]
    %v77 = vld [vmem:[%s0 + $0x2] sm:$0x3]
    %v78 = vld [vmem:[%s0 + $0x4] sm:$0x3]
    %v79 = vld [vmem:[%s0 + $0x6] sm:$0x3]
    %v80 = vld [vmem:[%s0 + $0x8] sm:$0x3]
    %v81 = vld [vmem:[%s0 + $0xa] sm:$0x3]
    %v82 = vld [vmem:[%s1] sm:$0x3]
    %v83 = vld [vmem:[%s2] sm:$0xff]
    %v84 = vld [vmem:[%s2 + $0x8] sm:$0xff]
    %v85 = vld [vmem:[%s3] sm:$0xff]
    %v86 = vld [vmem:[%s3 + $0x8] sm:$0xff]
    %v87 = vld [vmem:[%s3 + $0x10] sm:$0xff]
    %v88 = vld [vmem:[%s3 + $0x18] sm:$0xff]
    %v89 = vld [vmem:[%s3 + $0x20] sm:$0xff]
    %v90 = vld [vmem:[%s3 + $0x28] sm:$0xff]
    %v91 = vld [vmem:[%s3 + $0x30] sm:$0xff]
    %v92 = vld [vmem:[%s3 + $0x38] sm:$0xff]
    %v93 = vld [vmem:[%s3 + $0x40] sm:$0xff]
    %v94 = vld [vmem:[%s3 + $0x48] sm:$0xff]
    %v95 = vld [vmem:[%s3 + $0x50] sm:$0xff]
    %v96 = vld [vmem:[%s3 + $0x58] sm:$0xff]
    %v97 = vld [vmem:[%s3 + $0x60] sm:$0xff]
    %v98 = vld [vmem:[%s3 + $0x68] sm:$0xff]
    %v99 = vld [vmem:[%s3 + $0x70] sm:$0xff]
    %v100 = vld [vmem:[%s3 + $0x78] sm:$0xff]
    %v101 = vld [vmem:[%s4] sm:$0x3]
    %v102 = vld [vmem:[%s5] sm:$0x3]
    %v103 = vld [vmem:[%s6] sm:$0xff]
    %v104 = vld [vmem:[%s6 + $0x8] sm:$0xff]
    %v105 = vld [vmem:[%s6 + $0x10] sm:$0xff]
    %v106 = vld [vmem:[%s6 + $0x18] sm:$0xff]
    %v107 = vld [vmem:[%s6 + $0x20] sm:$0xff]
    %v108 = vld [vmem:[%s6 + $0x28] sm:$0xff]
    %v109 = vld [vmem:[%s6 + $0x30] sm:$0xff]
    %v110 = vld [vmem:[%s6 + $0x38] sm:$0xff]
    %v111 = vld [vmem:[#allocation3] sm:$0x7]
    %v112 = vld [vmem:[#allocation5] sm:$0x1]
    %v113 = vld [vmem:[%s9] sm:$0x1]
    %v114 = vld [vmem:[%s10] sm:$0xff]
    %v115 = vld [vmem:[%s10 + $0x8] sm:$0xff]
    %v116 = vld [vmem:[%s10 + $0x10] sm:$0xff]
    %v117 = vld [vmem:[%s10 + $0x18] sm:$0xff]
    %v118 = vld [vmem:[%s10 + $0x20] sm:$0xff]
    %v119 = vld [vmem:[%s10 + $0x28] sm:$0xff]
    %v120 = vld [vmem:[%s10 + $0x30] sm:$0xff]
    %v121 = vld [vmem:[%s10 + $0x38] sm:$0xff]
    %v122 = vld [vmem:[%s11] sm:$0x7]
    %v123 = vld [vmem:[%s12] sm:$0x7]
    %v124 = vld [vmem:[#allocation2] sm:$0x1]
    %v125 = vlaneseq
    %v126 = vand.u32 %v125, 127
    %v128 = vlaneseq
    %v129 = vshrl.u32 %v128, 7
    %v130 = vsub.s32 0, %v129
    %v131 = vrot.slane %v101, %v130
    %v132 = vlaneseq
    %v133 = vshrl.u32 %v132, 7
    %v134 = vsub.s32 1, %v133
    %v135 = vrot.slane %v101, %v134
    %vm138 = vcmask 64512
    %v140 = vsel %vm138, %v76, 0
    %142 = vmatprep.subr.mxu0 %v84
    %143 = vmatpush1.msra.mxu0 %v83
    %144 = vmatprep.subr.mxu0 0.0
    %145 = vmatpush1.msra.mxu0 0.0
    %146 = vmatprep.subr.mxu0 0.0
    %147 = vmatpush1.msra.mxu0 0.0
    %148 = vmatprep.subr.mxu0 0.0
    %149 = vmatpush1.msra.mxu0 0.0
    %150 = vmatprep.subr.mxu0 0.0
    %151 = vmatpush1.msra.mxu0 0.0
    %152 = vmatprep.subr.mxu0 0.0
    %153 = vmatpush1.msra.mxu0 0.0
    %154 = vmatprep.subr.mxu0 0.0
    %155 = vmatpush1.msra.mxu0 0.0
    %156 = vmatprep.subr.mxu0 0.0
    %157 = vmatpush1.msra.mxu0 0.0
    %158 = vmatprep.subr.mxu0 0.0
    %159 = vmatpush1.msra.mxu0 0.0
    %160 = vmatprep.subr.mxu0 0.0
    %161 = vmatpush1.msra.mxu0 0.0
    %162 = vmatprep.subr.mxu0 0.0
    %163 = vmatpush1.msra.mxu0 0.0
    %164 = vmatprep.subr.mxu0 0.0
    %165 = vmatpush1.msra.mxu0 0.0
    %166 = vmatprep.subr.mxu0 0.0
    %167 = vmatpush1.msra.mxu0 0.0
    %168 = vmatprep.subr.mxu0 0.0
    %169 = vmatpush1.msra.mxu0 0.0
    %170 = vmatprep.subr.mxu0 0.0
    %171 = vmatpush1.msra.mxu0 0.0
    %172 = vmatprep.subr.mxu0 0.0
    %173 = vmatpush1.msra.mxu0 0.0
    %174 = vmatprep.subr.mxu0 0.0
    %175 = vmatpush1.msra.mxu0 0.0
    %176 = vmatprep.subr.mxu0 0.0
    %177 = vmatpush1.msra.mxu0 0.0
    %178 = vmatprep.subr.mxu0 0.0
    %179 = vmatpush1.msra.mxu0 0.0
    %180 = vmatprep.subr.mxu0 0.0
    %181 = vmatpush1.msra.mxu0 0.0
    %182 = vmatprep.subr.mxu0 0.0
    %183 = vmatpush1.msra.mxu0 0.0
    %184 = vmatprep.subr.mxu0 0.0
    %185 = vmatpush1.msra.mxu0 0.0
    %186 = vmatprep.subr.mxu0 0.0
    %187 = vmatpush1.msra.mxu0 0.0
    %188 = vmatprep.subr.mxu0 0.0
    %189 = vmatpush1.msra.mxu0 0.0
    %190 = vmatprep.subr.mxu0 0.0
    %191 = vmatpush1.msra.mxu0 0.0
    %192 = vmatprep.subr.mxu0 0.0
    %193 = vmatpush1.msra.mxu0 0.0
    %194 = vmatprep.subr.mxu0 0.0
    %195 = vmatpush1.msra.mxu0 0.0
    %196 = vmatprep.subr.mxu0 0.0
    %197 = vmatpush1.msra.mxu0 0.0
    %198 = vmatprep.subr.mxu0 0.0
    %199 = vmatpush1.msra.mxu0 0.0
    %200 = vmatprep.subr.mxu0 0.0
    %201 = vmatpush1.msra.mxu0 0.0
    %202 = vmatprep.subr.mxu0 0.0
    %203 = vmatpush1.msra.mxu0 0.0
    %204 = vmatprep.subr.mxu0 0.0
    %205 = vmatpush1.msra.mxu0 0.0
    %206 = vmatprep.mubr.f32.mxu0 0.0
    %207 = vmatmul.mubr.f32.gmra.mrb[0].mxu0 %v140
    %v208 = vpop.f32.mrb[0].mxu0
    %v209 = vadd.f32 %v131, %v208
    %v210 = vpop.f32.mrb[0].mxu0
    %v211 = vadd.f32 %v135, %v210
    %212 = vdwg.mxu0
    %v214 = vlaneseq
    %v215 = vshrl.u32 %v214, 7
    %v216 = vsub.s32 0, %v215
    %v217 = vrot.slane %v102, %v216
    %v218 = vlaneseq
    %v219 = vshrl.u32 %v218, 7
    %v220 = vsub.s32 1, %v219
    %v221 = vrot.slane %v102, %v220
    %vm224 = vcmask 523264
    %v226 = vsel %vm224, %v82, 0
    %228 = vmatprep.subr.mxu0 %v86
    %229 = vmatpush1.msra.mxu0 %v85
    %230 = vmatprep.subr.mxu0 %v88
    %231 = vmatpush1.msra.mxu0 %v87
    %232 = vmatprep.subr.mxu0 %v90
    %233 = vmatpush1.msra.mxu0 %v89
    %234 = vmatprep.subr.mxu0 %v92
    %235 = vmatpush1.msra.mxu0 %v91
    %236 = vmatprep.subr.mxu0 %v94
    %237 = vmatpush1.msra.mxu0 %v93
    %238 = vmatprep.subr.mxu0 %v96
    %239 = vmatpush1.msra.mxu0 %v95
    %240 = vmatprep.subr.mxu0 %v98
    %241 = vmatpush1.msra.mxu0 %v97
    %242 = vmatprep.subr.mxu0 %v100
    %243 = vmatpush1.msra.mxu0 %v99
    %244 = vmatprep.subr.mxu0 0.0
    %245 = vmatpush1.msra.mxu0 0.0
    %246 = vmatprep.subr.mxu0 0.0
    %247 = vmatpush1.msra.mxu0 0.0
    %248 = vmatprep.subr.mxu0 0.0
    %249 = vmatpush1.msra.mxu0 0.0
    %250 = vmatprep.subr.mxu0 0.0
    %251 = vmatpush1.msra.mxu0 0.0
    %252 = vmatprep.subr.mxu0 0.0
    %253 = vmatpush1.msra.mxu0 0.0
    %254 = vmatprep.subr.mxu0 0.0
    %255 = vmatpush1.msra.mxu0 0.0
    %256 = vmatprep.subr.mxu0 0.0
    %257 = vmatpush1.msra.mxu0 0.0
    %258 = vmatprep.subr.mxu0 0.0
    %259 = vmatpush1.msra.mxu0 0.0
    %260 = vmatprep.subr.mxu0 0.0
    %261 = vmatpush1.msra.mxu0 0.0
    %262 = vmatprep.subr.mxu0 0.0
    %263 = vmatpush1.msra.mxu0 0.0
    %264 = vmatprep.subr.mxu0 0.0
    %265 = vmatpush1.msra.mxu0 0.0
    %266 = vmatprep.subr.mxu0 0.0
    %267 = vmatpush1.msra.mxu0 0.0
    %268 = vmatprep.subr.mxu0 0.0
    %269 = vmatpush1.msra.mxu0 0.0
    %270 = vmatprep.subr.mxu0 0.0
    %271 = vmatpush1.msra.mxu0 0.0
    %272 = vmatprep.subr.mxu0 0.0
    %273 = vmatpush1.msra.mxu0 0.0
    %274 = vmatprep.subr.mxu0 0.0
    %275 = vmatpush1.msra.mxu0 0.0
    %276 = vmatprep.subr.mxu0 0.0
    %277 = vmatpush1.msra.mxu0 0.0
    %278 = vmatprep.subr.mxu0 0.0
    %279 = vmatpush1.msra.mxu0 0.0
    %280 = vmatprep.subr.mxu0 0.0
    %281 = vmatpush1.msra.mxu0 0.0
    %282 = vmatprep.subr.mxu0 0.0
    %283 = vmatpush1.msra.mxu0 0.0
    %284 = vmatprep.subr.mxu0 0.0
    %285 = vmatpush1.msra.mxu0 0.0
    %286 = vmatprep.subr.mxu0 0.0
    %287 = vmatpush1.msra.mxu0 0.0
    %288 = vmatprep.subr.mxu0 0.0
    %289 = vmatpush1.msra.mxu0 0.0
    %290 = vmatprep.subr.mxu0 0.0
    %291 = vmatpush1.msra.mxu0 0.0
    %292 = vmatprep.mubr.f32.mxu0 0.0
    %293 = vmatmul.mubr.f32.gmra.mrb[0].mxu0 %v226
    %v294 = vpop.f32.mrb[0].mxu0
    %v295 = vadd.f32 %v217, %v294
    %v296 = vpop.f32.mrb[0].mxu0
    %v297 = vadd.f32 %v221, %v296
    %298 = vdwg.mxu0
    %v299 = vadd.f32 %v209, %v295
    %v300 = vxor.u32 %v299, 2147483648
    %v301 = vmul.f32 %v300, 1.442695
    %v302 = vpow.pop %v301
    %v303 = vadd.f32 %v302, 1.0
    %v304 = vrcp.pop %v303
    %v305 = vmul.f32 1.0, %v304
    %v306 = vmul.f32 %v305, %v297
    %v307 = vadd.f32 %v211, %v306
    %v308 = vtanh.pop %v307
    %v309 = vsub.f32 1.0, %v305
    %311 = vrot.lane.b32.xlu0 %v308, 64
    %v312 = vpop.permute.xlu0 %311
    %v314 = vmul.f32 %v309, %v312
    %315 = vrot.lane.b32.xlu0 %v82, 64
    %v316 = vpop.permute.xlu0 %315
    %v318 = vmul.f32 %v305, %v316
    %v319 = vadd.f32 %v314, %v318
    %320 = vrot.lane.b32.xlu0 %v76, 120
    %v321 = vpop.permute.xlu0 %320
    %vm322 = vcmask 23552
    %v323 = vsel %vm322, %v321, 0
    %vm325 = vcmask 1042432
    %v327 = vsel %vm325, %v122, 0
    %329 = vmatprep.subr.mxu0 0.0
    %330 = vmatpush1.msra.mxu0 %v327
    %331 = vmatprep.subr.mxu0 0.0
    %332 = vmatpush1.msra.mxu0 0.0
    %333 = vmatprep.subr.mxu0 0.0
    %334 = vmatpush1.msra.mxu0 0.0
    %335 = vmatprep.subr.mxu0 0.0
    %336 = vmatpush1.msra.mxu0 0.0
    %337 = vmatprep.subr.mxu0 0.0
    %338 = vmatpush1.msra.mxu0 0.0
    %339 = vmatprep.subr.mxu0 0.0
    %340 = vmatpush1.msra.mxu0 0.0
    %341 = vmatprep.subr.mxu0 0.0
    %342 = vmatpush1.msra.mxu0 0.0
    %343 = vmatprep.subr.mxu0 0.0
    %344 = vmatpush1.msra.mxu0 0.0
    %345 = vmatprep.subr.mxu0 0.0
    %346 = vmatpush1.msra.mxu0 0.0
    %347 = vmatprep.subr.mxu0 0.0
    %348 = vmatpush1.msra.mxu0 0.0
    %349 = vmatprep.subr.mxu0 0.0
    %350 = vmatpush1.msra.mxu0 0.0
    %351 = vmatprep.subr.mxu0 0.0
    %352 = vmatpush1.msra.mxu0 0.0
    %353 = vmatprep.subr.mxu0 0.0
    %354 = vmatpush1.msra.mxu0 0.0
    %355 = vmatprep.subr.mxu0 0.0
    %356 = vmatpush1.msra.mxu0 0.0
    %357 = vmatprep.subr.mxu0 0.0
    %358 = vmatpush1.msra.mxu0 0.0
    %359 = vmatprep.subr.mxu0 0.0
    %360 = vmatpush1.msra.mxu0 0.0
    %361 = vmatprep.subr.mxu0 0.0
    %362 = vmatpush1.msra.mxu0 0.0
    %363 = vmatprep.subr.mxu0 0.0
    %364 = vmatpush1.msra.mxu0 0.0
    %365 = vmatprep.subr.mxu0 0.0
    %366 = vmatpush1.msra.mxu0 0.0
    %367 = vmatprep.subr.mxu0 0.0
    %368 = vmatpush1.msra.mxu0 0.0
    %369 = vmatprep.subr.mxu0 0.0
    %370 = vmatpush1.msra.mxu0 0.0
    %371 = vmatprep.subr.mxu0 0.0
    %372 = vmatpush1.msra.mxu0 0.0
    %373 = vmatprep.subr.mxu0 0.0
    %374 = vmatpush1.msra.mxu0 0.0
    %375 = vmatprep.subr.mxu0 0.0
    %376 = vmatpush1.msra.mxu0 0.0
    %377 = vmatprep.subr.mxu0 0.0
    %378 = vmatpush1.msra.mxu0 0.0
    %379 = vmatprep.subr.mxu0 0.0
    %380 = vmatpush1.msra.mxu0 0.0
    %381 = vmatprep.subr.mxu0 0.0
    %382 = vmatpush1.msra.mxu0 0.0
    %383 = vmatprep.subr.mxu0 0.0
    %384 = vmatpush1.msra.mxu0 0.0
    %385 = vmatprep.subr.mxu0 0.0
    %386 = vmatpush1.msra.mxu0 0.0
    %387 = vmatprep.subr.mxu0 0.0
    %388 = vmatpush1.msra.mxu0 0.0
    %389 = vmatprep.subr.mxu0 0.0
    %390 = vmatpush1.msra.mxu0 0.0
    %391 = vmatprep.subr.mxu0 0.0
    %392 = vmatpush1.msra.mxu0 0.0
    %393 = vmatprep.mubr.f32.mxu0 0.0
    %394 = vmatmul.mubr.f32.gmra.mrb[0].mxu0 %v323
    %v395 = vpop.f32.mrb[0].mxu0
    %v396 = vadd.f32 0.0, %v395
    %v397 = vpop.f32.mrb[0].mxu0
    %398 = vdwg.mxu0
    %400 = vrot.lane.b32.xlu0 %v319, 64
    %v401 = vpop.permute.xlu0 %400
    %v402 = vsel %vm224, %v401, 0
    %404 = vmatprep.subr.mxu0 0.0
    %405 = vmatpush1.msra.mxu0 %v114
    %406 = vmatprep.subr.mxu0 0.0
    %407 = vmatpush1.msra.mxu0 %v115
    %408 = vmatprep.subr.mxu0 0.0
    %409 = vmatpush1.msra.mxu0 %v116
    %410 = vmatprep.subr.mxu0 0.0
    %411 = vmatpush1.msra.mxu0 %v117
    %412 = vmatprep.subr.mxu0 0.0
    %413 = vmatpush1.msra.mxu0 %v118
    %414 = vmatprep.subr.mxu0 0.0
    %415 = vmatpush1.msra.mxu0 %v119
    %416 = vmatprep.subr.mxu0 0.0
    %417 = vmatpush1.msra.mxu0 %v120
    %418 = vmatprep.subr.mxu0 0.0
    %419 = vmatpush1.msra.mxu0 %v121
    %420 = vmatprep.subr.mxu0 0.0
    %421 = vmatpush1.msra.mxu0 0.0
    %422 = vmatprep.subr.mxu0 0.0
    %423 = vmatpush1.msra.mxu0 0.0
    %424 = vmatprep.subr.mxu0 0.0
    %425 = vmatpush1.msra.mxu0 0.0
    %426 = vmatprep.subr.mxu0 0.0
    %427 = vmatpush1.msra.mxu0 0.0
    %428 = vmatprep.subr.mxu0 0.0
    %429 = vmatpush1.msra.mxu0 0.0
    %430 = vmatprep.subr.mxu0 0.0
    %431 = vmatpush1.msra.mxu0 0.0
    %432 = vmatprep.subr.mxu0 0.0
    %433 = vmatpush1.msra.mxu0 0.0
    %434 = vmatprep.subr.mxu0 0.0
    %435 = vmatpush1.msra.mxu0 0.0
    %436 = vmatprep.subr.mxu0 0.0
    %437 = vmatpush1.msra.mxu0 0.0
    %438 = vmatprep.subr.mxu0 0.0
    %439 = vmatpush1.msra.mxu0 0.0
    %440 = vmatprep.subr.mxu0 0.0
    %441 = vmatpush1.msra.mxu0 0.0
    %442 = vmatprep.subr.mxu0 0.0
    %443 = vmatpush1.msra.mxu0 0.0
    %444 = vmatprep.subr.mxu0 0.0
    %445 = vmatpush1.msra.mxu0 0.0
    %446 = vmatprep.subr.mxu0 0.0
    %447 = vmatpush1.msra.mxu0 0.0
    %448 = vmatprep.subr.mxu0 0.0
    %449 = vmatpush1.msra.mxu0 0.0
    %450 = vmatprep.subr.mxu0 0.0
    %451 = vmatpush1.msra.mxu0 0.0
    %452 = vmatprep.subr.mxu0 0.0
    %453 = vmatpush1.msra.mxu0 0.0
    %454 = vmatprep.subr.mxu0 0.0
    %455 = vmatpush1.msra.mxu0 0.0
    %456 = vmatprep.subr.mxu0 0.0
    %457 = vmatpush1.msra.mxu0 0.0
    %458 = vmatprep.subr.mxu0 0.0
    %459 = vmatpush1.msra.mxu0 0.0
    %460 = vmatprep.subr.mxu0 0.0
    %461 = vmatpush1.msra.mxu0 0.0
    %462 = vmatprep.subr.mxu0 0.0
    %463 = vmatpush1.msra.mxu0 0.0
    %464 = vmatprep.subr.mxu0 0.0
    %465 = vmatpush1.msra.mxu0 0.0
    %466 = vmatprep.subr.mxu0 0.0
    %467 = vmatpush1.msra.mxu0 0.0
    %468 = vmatprep.mubr.f32.mxu0 0.0
    %469 = vmatmul.mubr.f32.gmra.mrb[0].mxu0 %v402
    %v470 = vpop.f32.mrb[0].mxu0
    %v471 = vadd.f32 %v396, %v470
    %v472 = vpop.f32.mrb[0].mxu0
    %473 = vdwg.mxu0
    %474 = vrot.lane.b32.xlu0 %v76, 117
    %v475 = vpop.permute.xlu0 %474
    %v476 = vsel %vm322, %v475, 0
    %v479 = vsel %vm325, %v123, 0
    %481 = vmatprep.subr.mxu0 0.0
    %482 = vmatpush1.msra.mxu0 %v479
    %483 = vmatprep.subr.mxu0 0.0
    %484 = vmatpush1.msra.mxu0 0.0
    %485 = vmatprep.subr.mxu0 0.0
    %486 = vmatpush1.msra.mxu0 0.0
    %487 = vmatprep.subr.mxu0 0.0
    %488 = vmatpush1.msra.mxu0 0.0
    %489 = vmatprep.subr.mxu0 0.0
    %490 = vmatpush1.msra.mxu0 0.0
    %491 = vmatprep.subr.mxu0 0.0
    %492 = vmatpush1.msra.mxu0 0.0
    %493 = vmatprep.subr.mxu0 0.0
    %494 = vmatpush1.msra.mxu0 0.0
    %495 = vmatprep.subr.mxu0 0.0
    %496 = vmatpush1.msra.mxu0 0.0
    %497 = vmatprep.subr.mxu0 0.0
    %498 = vmatpush1.msra.mxu0 0.0
    %499 = vmatprep.subr.mxu0 0.0
    %500 = vmatpush1.msra.mxu0 0.0
    %501 = vmatprep.subr.mxu0 0.0
    %502 = vmatpush1.msra.mxu0 0.0
    %503 = vmatprep.subr.mxu0 0.0
    %504 = vmatpush1.msra.mxu0 0.0
    %505 = vmatprep.subr.mxu0 0.0
    %506 = vmatpush1.msra.mxu0 0.0
    %507 = vmatprep.subr.mxu0 0.0
    %508 = vmatpush1.msra.mxu0 0.0
    %509 = vmatprep.subr.mxu0 0.0
    %510 = vmatpush1.msra.mxu0 0.0
    %511 = vmatprep.subr.mxu0 0.0
    %512 = vmatpush1.msra.mxu0 0.0
    %513 = vmatprep.subr.mxu0 0.0
    %514 = vmatpush1.msra.mxu0 0.0
    %515 = vmatprep.subr.mxu0 0.0
    %516 = vmatpush1.msra.mxu0 0.0
    %517 = vmatprep.subr.mxu0 0.0
    %518 = vmatpush1.msra.mxu0 0.0
    %519 = vmatprep.subr.mxu0 0.0
    %520 = vmatpush1.msra.mxu0 0.0
    %521 = vmatprep.subr.mxu0 0.0
    %522 = vmatpush1.msra.mxu0 0.0
    %523 = vmatprep.subr.mxu0 0.0
    %524 = vmatpush1.msra.mxu0 0.0
    %525 = vmatprep.subr.mxu0 0.0
    %526 = vmatpush1.msra.mxu0 0.0
    %527 = vmatprep.subr.mxu0 0.0
    %528 = vmatpush1.msra.mxu0 0.0
    %529 = vmatprep.subr.mxu0 0.0
    %530 = vmatpush1.msra.mxu0 0.0
    %531 = vmatprep.subr.mxu0 0.0
    %532 = vmatpush1.msra.mxu0 0.0
    %533 = vmatprep.subr.mxu0 0.0
    %534 = vmatpush1.msra.mxu0 0.0
    %535 = vmatprep.subr.mxu0 0.0
    %536 = vmatpush1.msra.mxu0 0.0
    %537 = vmatprep.subr.mxu0 0.0
    %538 = vmatpush1.msra.mxu0 0.0
    %539 = vmatprep.subr.mxu0 0.0
    %540 = vmatpush1.msra.mxu0 0.0
    %541 = vmatprep.subr.mxu0 0.0
    %542 = vmatpush1.msra.mxu0 0.0
    %543 = vmatprep.subr.mxu0 0.0
    %544 = vmatpush1.msra.mxu0 0.0
    %545 = vmatprep.mubr.f32.mxu0 0.0
    %546 = vmatmul.mubr.f32.gmra.mrb[0].mxu0 %v476
    %v547 = vpop.f32.mrb[0].mxu0
    %v548 = vadd.f32 0.0, %v547
    %v549 = vpop.f32.mrb[0].mxu0
    %550 = vdwg.mxu0
    %v551 = vadd.f32 %v471, %v548
    %v553 = vlaneseq
    %v554 = vshrl.u32 %v553, 7
    %v555 = vsub.s32 0, %v554
    %v556 = vrot.slane %v124, %v555
    %v558 = vadd.f32 %v551, %v556
    %vm559 = vcmask 1024
    %560 = vst.msk [vmem:[%s14] sm:$0x3] %vm559, %v558
    %v562 = vsel %vm325, %v111, 0
    %564 = vmatprep.subr.mxu0 0.0
    %565 = vmatpush1.msra.mxu0 %v562
    %566 = vmatprep.subr.mxu0 0.0
    %567 = vmatpush1.msra.mxu0 0.0
    %568 = vmatprep.subr.mxu0 0.0
    %569 = vmatpush1.msra.mxu0 0.0
    %570 = vmatprep.subr.mxu0 0.0
    %571 = vmatpush1.msra.mxu0 0.0
    %572 = vmatprep.subr.mxu0 0.0
    %573 = vmatpush1.msra.mxu0 0.0
    %574 = vmatprep.subr.mxu0 0.0
    %575 = vmatpush1.msra.mxu0 0.0
    %576 = vmatprep.subr.mxu0 0.0
    %577 = vmatpush1.msra.mxu0 0.0
    %578 = vmatprep.subr.mxu0 0.0
    %579 = vmatpush1.msra.mxu0 0.0
    %580 = vmatprep.subr.mxu0 0.0
    %581 = vmatpush1.msra.mxu0 0.0
    %582 = vmatprep.subr.mxu0 0.0
    %583 = vmatpush1.msra.mxu0 0.0
    %584 = vmatprep.subr.mxu0 0.0
    %585 = vmatpush1.msra.mxu0 0.0
    %586 = vmatprep.subr.mxu0 0.0
    %587 = vmatpush1.msra.mxu0 0.0
    %588 = vmatprep.subr.mxu0 0.0
    %589 = vmatpush1.msra.mxu0 0.0
    %590 = vmatprep.subr.mxu0 0.0
    %591 = vmatpush1.msra.mxu0 0.0
    %592 = vmatprep.subr.mxu0 0.0
    %593 = vmatpush1.msra.mxu0 0.0
    %594 = vmatprep.subr.mxu0 0.0
    %595 = vmatpush1.msra.mxu0 0.0
    %596 = vmatprep.subr.mxu0 0.0
    %597 = vmatpush1.msra.mxu0 0.0
    %598 = vmatprep.subr.mxu0 0.0
    %599 = vmatpush1.msra.mxu0 0.0
    %600 = vmatprep.subr.mxu0 0.0
    %601 = vmatpush1.msra.mxu0 0.0
    %602 = vmatprep.subr.mxu0 0.0
    %603 = vmatpush1.msra.mxu0 0.0
    %604 = vmatprep.subr.mxu0 0.0
    %605 = vmatpush1.msra.mxu0 0.0
    %606 = vmatprep.subr.mxu0 0.0
    %607 = vmatpush1.msra.mxu0 0.0
    %608 = vmatprep.subr.mxu0 0.0
    %609 = vmatpush1.msra.mxu0 0.0
    %610 = vmatprep.subr.mxu0 0.0
    %611 = vmatpush1.msra.mxu0 0.0
    %612 = vmatprep.subr.mxu0 0.0
    %613 = vmatpush1.msra.mxu0 0.0
    %614 = vmatprep.subr.mxu0 0.0
    %615 = vmatpush1.msra.mxu0 0.0
    %616 = vmatprep.subr.mxu0 0.0
    %617 = vmatpush1.msra.mxu0 0.0
    %618 = vmatprep.subr.mxu0 0.0
    %619 = vmatpush1.msra.mxu0 0.0
    %620 = vmatprep.subr.mxu0 0.0
    %621 = vmatpush1.msra.mxu0 0.0
    %622 = vmatprep.subr.mxu0 0.0
    %623 = vmatpush1.msra.mxu0 0.0
    %624 = vmatprep.subr.mxu0 0.0
    %625 = vmatpush1.msra.mxu0 0.0
    %626 = vmatprep.subr.mxu0 0.0
    %627 = vmatpush1.msra.mxu0 0.0
    %628 = vmatprep.mubr.f32.mxu0 0.0
    %629 = vmatmul.mubr.f32.gmra.mrb[0].mxu0 %v323
    %v630 = vpop.f32.mrb[0].mxu0
    %v631 = vadd.f32 0.0, %v630
    %v632 = vpop.f32.mrb[0].mxu0
    %633 = vdwg.mxu0
    %634 = vmatprep.subr.mxu0 0.0
    %635 = vmatpush1.msra.mxu0 %v103
    %636 = vmatprep.subr.mxu0 0.0
    %637 = vmatpush1.msra.mxu0 %v104
    %638 = vmatprep.subr.mxu0 0.0
    %639 = vmatpush1.msra.mxu0 %v105
    %640 = vmatprep.subr.mxu0 0.0
    %641 = vmatpush1.msra.mxu0 %v106
    %642 = vmatprep.subr.mxu0 0.0
    %643 = vmatpush1.msra.mxu0 %v107
    %644 = vmatprep.subr.mxu0 0.0
    %645 = vmatpush1.msra.mxu0 %v108
    %646 = vmatprep.subr.mxu0 0.0
    %647 = vmatpush1.msra.mxu0 %v109
    %648 = vmatprep.subr.mxu0 0.0
    %649 = vmatpush1.msra.mxu0 %v110
    %650 = vmatprep.subr.mxu0 0.0
    %651 = vmatpush1.msra.mxu0 0.0
    %652 = vmatprep.subr.mxu0 0.0
    %653 = vmatpush1.msra.mxu0 0.0
    %654 = vmatprep.subr.mxu0 0.0
    %655 = vmatpush1.msra.mxu0 0.0
    %656 = vmatprep.subr.mxu0 0.0
    %657 = vmatpush1.msra.mxu0 0.0
    %658 = vmatprep.subr.mxu0 0.0
    %659 = vmatpush1.msra.mxu0 0.0
    %660 = vmatprep.subr.mxu0 0.0
    %661 = vmatpush1.msra.mxu0 0.0
    %662 = vmatprep.subr.mxu0 0.0
    %663 = vmatpush1.msra.mxu0 0.0
    %664 = vmatprep.subr.mxu0 0.0
    %665 = vmatpush1.msra.mxu0 0.0
    %666 = vmatprep.subr.mxu0 0.0
    %667 = vmatpush1.msra.mxu0 0.0
    %668 = vmatprep.subr.mxu0 0.0
    %669 = vmatpush1.msra.mxu0 0.0
    %670 = vmatprep.subr.mxu0 0.0
    %671 = vmatpush1.msra.mxu0 0.0
    %672 = vmatprep.subr.mxu0 0.0
    %673 = vmatpush1.msra.mxu0 0.0
    %674 = vmatprep.subr.mxu0 0.0
    %675 = vmatpush1.msra.mxu0 0.0
    %676 = vmatprep.subr.mxu0 0.0
    %677 = vmatpush1.msra.mxu0 0.0
    %678 = vmatprep.subr.mxu0 0.0
    %679 = vmatpush1.msra.mxu0 0.0
    %680 = vmatprep.subr.mxu0 0.0
    %681 = vmatpush1.msra.mxu0 0.0
    %682 = vmatprep.subr.mxu0 0.0
    %683 = vmatpush1.msra.mxu0 0.0
    %684 = vmatprep.subr.mxu0 0.0
    %685 = vmatpush1.msra.mxu0 0.0
    %686 = vmatprep.subr.mxu0 0.0
    %687 = vmatpush1.msra.mxu0 0.0
    %688 = vmatprep.subr.mxu0 0.0
    %689 = vmatpush1.msra.mxu0 0.0
    %690 = vmatprep.subr.mxu0 0.0
    %691 = vmatpush1.msra.mxu0 0.0
    %692 = vmatprep.subr.mxu0 0.0
    %693 = vmatpush1.msra.mxu0 0.0
    %694 = vmatprep.subr.mxu0 0.0
    %695 = vmatpush1.msra.mxu0 0.0
    %696 = vmatprep.subr.mxu0 0.0
    %697 = vmatpush1.msra.mxu0 0.0
    %698 = vmatprep.mubr.f32.mxu0 0.0
    %699 = vmatmul.mubr.f32.gmra.mrb[0].mxu0 %v402
    %v700 = vpop.f32.mrb[0].mxu0
    %v701 = vadd.f32 %v631, %v700
    %v702 = vpop.f32.mrb[0].mxu0
    %703 = vdwg.mxu0
    %v705 = vlaneseq
    %v706 = vshrl.u32 %v705, 7
    %v707 = vsub.s32 0, %v706
    %v708 = vrot.slane %v113, %v707
    %v710 = vadd.f32 %v701, %v708
    %711 = vset.pattern.permute.xlu0 11
    %712 = vperm.xlu0 %711, %v76
    %v713 = vpop.permute.xlu0 %712
    %v716 = vlaneseq
    %v717 = vshrl.u32 %v716, 7
    %v718 = vsub.s32 0, %v717
    %v719 = vrot.slane %v112, %v718
    %v721 = vmul.f32 %v713, %v719
    %v722 = vadd.f32 %v710, %v721
    %vm723 = vcmask 33792
    %v724 = vsel %vm723, %v722, -inf
    %725 = vmax.xlane.f32.xlu0 %v724
    %v726 = vpop.xlane.xlu0 %725
    %v727 = vsub.f32 %v722, %v726
    %v728 = vmul.f32 %v727, 1.442695
    %v729 = vpow.pop %v728
    %v730 = vsel %vm723, %v729, 0.0
    %731 = vadd.xlane.f32.xlu0 %v730
    %v732 = vpop.xlane.xlu0 %731
    %v733 = vlog2.pop %v732
    %v734 = vmul.f32 %v733, 0.6931472
    %vm735 = vcmp.eq.f32.partialorder %v722, %v726
    %v736 = vsel %vm735, %v126, 5
    %v737 = vsel %vm723, %v736, 2147483647
    %v738 = vand.u32 %v737, 65535
    %v739 = vshra.s32 %v737, 16
    %v740 = vcvt.s32.f32 %v738
    %v741 = vcvt.s32.f32 %v739
    %742 = vmin.xlane.f32.xlu0 %v741
    %v743 = vpop.xlane.xlu0 %742
    %vm744 = vcmp.eq.f32.partialorder %v741, %v743
    %v745 = vsel %vm744, %v740, inf
    %746 = vmin.xlane.f32.xlu0 %v745
    %v747 = vpop.xlane.xlu0 %746
    %v748 = vcvt.f32.s32 %v747
    %v749 = vcvt.f32.s32 %v743
    %v750 = vshll.u32 %v749, 16
    %v751 = vadd.s32 %v750, %v748
    %752 = vst.msk [vmem:[%s15] sm:$0x3] %vm559, %v751
    %v753 = vsub.f32 0.0, %v734
    %754 = vst.msk [vmem:[%s16] sm:$0x3] %vm559, %v753
    %755 = vset.pattern.permute.xlu0 12
    %756 = vperm.xlu0 %755, %v76
    %v757 = vpop.permute.xlu0 %756
    %v759 = vmul.f32 %v757, %v719
    %v760 = vadd.f32 %v710, %v759
    %v761 = vsel %vm723, %v760, -inf
    %762 = vmax.xlane.f32.xlu0 %v761
    %v763 = vpop.xlane.xlu0 %762
    %v764 = vsub.f32 %v760, %v763
    %v765 = vmul.f32 %v764, 1.442695
    %v766 = vpow.pop %v765
    %v767 = vsel %vm723, %v766, 0.0
    %768 = vadd.xlane.f32.xlu0 %v767
    %v769 = vpop.xlane.xlu0 %768
    %v770 = vlog2.pop %v769
    %v771 = vmul.f32 %v770, 0.6931472
    %vm772 = vcmp.eq.f32.partialorder %v760, %v763
    %v773 = vsel %vm772, %v126, 5
    %v774 = vsel %vm723, %v773, 2147483647
    %v775 = vand.u32 %v774, 65535
    %v776 = vshra.s32 %v774, 16
    %v777 = vcvt.s32.f32 %v775
    %v778 = vcvt.s32.f32 %v776
    %779 = vmin.xlane.f32.xlu0 %v778
    %v780 = vpop.xlane.xlu0 %779
    %vm781 = vcmp.eq.f32.partialorder %v778, %v780
    %v782 = vsel %vm781, %v777, inf
    %783 = vmin.xlane.f32.xlu0 %v782
    %v784 = vpop.xlane.xlu0 %783
    %v785 = vcvt.f32.s32 %v784
    %v786 = vcvt.f32.s32 %v780
    %v787 = vshll.u32 %v786, 16
    %v788 = vadd.s32 %v787, %v785
    %s789 = scalar_lea.vmem %s15, 12
    %790 = vst.msk [vmem:[%s789] sm:$0x3] %vm559, %v788
    %v791 = vsub.f32 0.0, %v771
    %s792 = scalar_lea.vmem %s16, 12
    %793 = vst.msk [vmem:[%s792] sm:$0x3] %vm559, %v791
    %794 = vset.pattern.permute.xlu0 13
    %795 = vperm.xlu0 %794, %v76
    %v796 = vpop.permute.xlu0 %795
    %v798 = vmul.f32 %v796, %v719
    %v799 = vadd.f32 %v710, %v798
    %v800 = vsel %vm723, %v799, -inf
    %801 = vmax.xlane.f32.xlu0 %v800
    %v802 = vpop.xlane.xlu0 %801
    %v803 = vsub.f32 %v799, %v802
    %v804 = vmul.f32 %v803, 1.442695
    %v805 = vpow.pop %v804
    %v806 = vsel %vm723, %v805, 0.0
    %807 = vadd.xlane.f32.xlu0 %v806
    %v808 = vpop.xlane.xlu0 %807
    %v809 = vlog2.pop %v808
    %v810 = vmul.f32 %v809, 0.6931472
    %vm811 = vcmp.eq.f32.partialorder %v799, %v802
    %v812 = vsel %vm811, %v126, 5
    %v813 = vsel %vm723, %v812, 2147483647
    %v814 = vand.u32 %v813, 65535
    %v815 = vshra.s32 %v813, 16
    %v816 = vcvt.s32.f32 %v814
    %v817 = vcvt.s32.f32 %v815
    %818 = vmin.xlane.f32.xlu0 %v817
    %v819 = vpop.xlane.xlu0 %818
    %vm820 = vcmp.eq.f32.partialorder %v817, %v819
    %v821 = vsel %vm820, %v816, inf
    %822 = vmin.xlane.f32.xlu0 %v821
    %v823 = vpop.xlane.xlu0 %822
    %v824 = vcvt.f32.s32 %v823
    %v825 = vcvt.f32.s32 %v819
    %v826 = vshll.u32 %v825, 16
    %v827 = vadd.s32 %v826, %v824
    %s828 = scalar_lea.vmem %s15, 24
    %829 = vst.msk [vmem:[%s828] sm:$0x3] %vm559, %v827
    %v830 = vsub.f32 0.0, %v810
    %s831 = scalar_lea.vmem %s16, 24
    %832 = vst.msk [vmem:[%s831] sm:$0x3] %vm559, %v830
    %v834 = vsel %vm138, %v77, 0
    %836 = vmatprep.subr.mxu0 %v84
    %837 = vmatpush1.msra.mxu0 %v83
    %838 = vmatprep.subr.mxu0 0.0
    %839 = vmatpush1.msra.mxu0 0.0
    %840 = vmatprep.subr.mxu0 0.0
    %841 = vmatpush1.msra.mxu0 0.0
    %842 = vmatprep.subr.mxu0 0.0
    %843 = vmatpush1.msra.mxu0 0.0
    %844 = vmatprep.subr.mxu0 0.0
    %845 = vmatpush1.msra.mxu0 0.0
    %846 = vmatprep.subr.mxu0 0.0
    %847 = vmatpush1.msra.mxu0 0.0
    %848 = vmatprep.subr.mxu0 0.0
    %849 = vmatpush1.msra.mxu0 0.0
    %850 = vmatprep.subr.mxu0 0.0
    %851 = vmatpush1.msra.mxu0 0.0
    %852 = vmatprep.subr.mxu0 0.0
    %853 = vmatpush1.msra.mxu0 0.0
    %854 = vmatprep.subr.mxu0 0.0
    %855 = vmatpush1.msra.mxu0 0.0
    %856 = vmatprep.subr.mxu0 0.0
    %857 = vmatpush1.msra.mxu0 0.0
    %858 = vmatprep.subr.mxu0 0.0
    %859 = vmatpush1.msra.mxu0 0.0
    %860 = vmatprep.subr.mxu0 0.0
    %861 = vmatpush1.msra.mxu0 0.0
    %862 = vmatprep.subr.mxu0 0.0
    %863 = vmatpush1.msra.mxu0 0.0
    %864 = vmatprep.subr.mxu0 0.0
    %865 = vmatpush1.msra.mxu0 0.0
    %866 = vmatprep.subr.mxu0 0.0
    %867 = vmatpush1.msra.mxu0 0.0
    %868 = vmatprep.subr.mxu0 0.0
    %869 = vmatpush1.msra.mxu0 0.0
    %870 = vmatprep.subr.mxu0 0.0
    %871 = vmatpush1.msra.mxu0 0.0
    %872 = vmatprep.subr.mxu0 0.0
    %873 = vmatpush1.msra.mxu0 0.0
    %874 = vmatprep.subr.mxu0 0.0
    %875 = vmatpush1.msra.mxu0 0.0
    %876 = vmatprep.subr.mxu0 0.0
    %877 = vmatpush1.msra.mxu0 0.0
    %878 = vmatprep.subr.mxu0 0.0
    %879 = vmatpush1.msra.mxu0 0.0
    %880 = vmatprep.subr.mxu0 0.0
    %881 = vmatpush1.msra.mxu0 0.0
    %882 = vmatprep.subr.mxu0 0.0
    %883 = vmatpush1.msra.mxu0 0.0
    %884 = vmatprep.subr.mxu0 0.0
    %885 = vmatpush1.msra.mxu0 0.0
    %886 = vmatprep.subr.mxu0 0.0
    %887 = vmatpush1.msra.mxu0 0.0
    %888 = vmatprep.subr.mxu0 0.0
    %889 = vmatpush1.msra.mxu0 0.0
    %890 = vmatprep.subr.mxu0 0.0
    %891 = vmatpush1.msra.mxu0 0.0
    %892 = vmatprep.subr.mxu0 0.0
    %893 = vmatpush1.msra.mxu0 0.0
    %894 = vmatprep.subr.mxu0 0.0
    %895 = vmatpush1.msra.mxu0 0.0
    %896 = vmatprep.subr.mxu0 0.0
    %897 = vmatpush1.msra.mxu0 0.0
    %898 = vmatprep.subr.mxu0 0.0
    %899 = vmatpush1.msra.mxu0 0.0
    %900 = vmatprep.mubr.f32.mxu0 0.0
    %901 = vmatmul.mubr.f32.gmra.mrb[0].mxu0 %v834
    %v902 = vpop.f32.mrb[0].mxu0
    %v903 = vadd.f32 %v131, %v902
    %v904 = vpop.f32.mrb[0].mxu0
    %v905 = vadd.f32 %v135, %v904
    %906 = vdwg.mxu0
    %907 = vmatprep.subr.mxu0 %v86
    %908 = vmatpush1.msra.mxu0 %v85
    %909 = vmatprep.subr.mxu0 %v88
    %910 = vmatpush1.msra.mxu0 %v87
    %911 = vmatprep.subr.mxu0 %v90
    %912 = vmatpush1.msra.mxu0 %v89
    %913 = vmatprep.subr.mxu0 %v92
    %914 = vmatpush1.msra.mxu0 %v91
    %915 = vmatprep.subr.mxu0 %v94
    %916 = vmatpush1.msra.mxu0 %v93
    %917 = vmatprep.subr.mxu0 %v96
    %918 = vmatpush1.msra.mxu0 %v95
    %919 = vmatprep.subr.mxu0 %v98
    %920 = vmatpush1.msra.mxu0 %v97
    %921 = vmatprep.subr.mxu0 %v100
    %922 = vmatpush1.msra.mxu0 %v99
    %923 = vmatprep.subr.mxu0 0.0
    %924 = vmatpush1.msra.mxu0 0.0
    %925 = vmatprep.subr.mxu0 0.0
    %926 = vmatpush1.msra.mxu0 0.0
    %927 = vmatprep.subr.mxu0 0.0
    %928 = vmatpush1.msra.mxu0 0.0
    %929 = vmatprep.subr.mxu0 0.0
    %930 = vmatpush1.msra.mxu0 0.0
    %931 = vmatprep.subr.mxu0 0.0
    %932 = vmatpush1.msra.mxu0 0.0
    %933 = vmatprep.subr.mxu0 0.0
    %934 = vmatpush1.msra.mxu0 0.0
    %935 = vmatprep.subr.mxu0 0.0
    %936 = vmatpush1.msra.mxu0 0.0
    %937 = vmatprep.subr.mxu0 0.0
    %938 = vmatpush1.msra.mxu0 0.0
    %939 = vmatprep.subr.mxu0 0.0
    %940 = vmatpush1.msra.mxu0 0.0
    %941 = vmatprep.subr.mxu0 0.0
    %942 = vmatpush1.msra.mxu0 0.0
    %943 = vmatprep.subr.mxu0 0.0
    %944 = vmatpush1.msra.mxu0 0.0
    %945 = vmatprep.subr.mxu0 0.0
    %946 = vmatpush1.msra.mxu0 0.0
    %947 = vmatprep.subr.mxu0 0.0
    %948 = vmatpush1.msra.mxu0 0.0
    %949 = vmatprep.subr.mxu0 0.0
    %950 = vmatpush1.msra.mxu0 0.0
    %951 = vmatprep.subr.mxu0 0.0
    %952 = vmatpush1.msra.mxu0 0.0
    %953 = vmatprep.subr.mxu0 0.0
    %954 = vmatpush1.msra.mxu0 0.0
    %955 = vmatprep.subr.mxu0 0.0
    %956 = vmatpush1.msra.mxu0 0.0
    %957 = vmatprep.subr.mxu0 0.0
    %958 = vmatpush1.msra.mxu0 0.0
    %959 = vmatprep.subr.mxu0 0.0
    %960 = vmatpush1.msra.mxu0 0.0
    %961 = vmatprep.subr.mxu0 0.0
    %962 = vmatpush1.msra.mxu0 0.0
    %963 = vmatprep.subr.mxu0 0.0
    %964 = vmatpush1.msra.mxu0 0.0
    %965 = vmatprep.subr.mxu0 0.0
    %966 = vmatpush1.msra.mxu0 0.0
    %967 = vmatprep.subr.mxu0 0.0
    %968 = vmatpush1.msra.mxu0 0.0
    %969 = vmatprep.subr.mxu0 0.0
    %970 = vmatpush1.msra.mxu0 0.0
    %971 = vmatprep.mubr.f32.mxu0 0.0
    %972 = vmatmul.mubr.f32.gmra.mrb[0].mxu0 %v402
    %v973 = vpop.f32.mrb[0].mxu0
    %v974 = vadd.f32 %v217, %v973
    %v975 = vpop.f32.mrb[0].mxu0
    %v976 = vadd.f32 %v221, %v975
    %977 = vdwg.mxu0
    %v978 = vadd.f32 %v903, %v974
    %v979 = vxor.u32 %v978, 2147483648
    %v980 = vmul.f32 %v979, 1.442695
    %v981 = vpow.pop %v980
    %v982 = vadd.f32 %v981, 1.0
    %v983 = vrcp.pop %v982
    %v984 = vmul.f32 1.0, %v983
    %v985 = vmul.f32 %v984, %v976
    %v986 = vadd.f32 %v905, %v985
    %v987 = vtanh.pop %v986
    %v988 = vsub.f32 1.0, %v984
    %990 = vrot.lane.b32.xlu0 %v987, 64
    %v991 = vpop.permute.xlu0 %990
    %v993 = vmul.f32 %v988, %v991
    %v994 = vmul.f32 %v984, %v319
    %v995 = vadd.f32 %v993, %v994
    %996 = vrot.lane.b32.xlu0 %v77, 120
    %v997 = vpop.permute.xlu0 %996
    %v998 = vsel %vm322, %v997, 0
    %1000 = vmatprep.subr.mxu0 0.0
    %1001 = vmatpush1.msra.mxu0 %v327
    %1002 = vmatprep.subr.mxu0 0.0
    %1003 = vmatpush1.msra.mxu0 0.0
    %1004 = vmatprep.subr.mxu0 0.0
    %1005 = vmatpush1.msra.mxu0 0.0
    %1006 = vmatprep.subr.mxu0 0.0
    %1007 = vmatpush1.msra.mxu0 0.0
    %1008 = vmatprep.subr.mxu0 0.0
    %1009 = vmatpush1.msra.mxu0 0.0
    %1010 = vmatprep.subr.mxu0 0.0
    %1011 = vmatpush1.msra.mxu0 0.0
    %1012 = vmatprep.subr.mxu0 0.0
    %1013 = vmatpush1.msra.mxu0 0.0
    %1014 = vmatprep.subr.mxu0 0.0
    %1015 = vmatpush1.msra.mxu0 0.0
    %1016 = vmatprep.subr.mxu0 0.0
    %1017 = vmatpush1.msra.mxu0 0.0
    %1018 = vmatprep.subr.mxu0 0.0
    %1019 = vmatpush1.msra.mxu0 0.0
    %1020 = vmatprep.subr.mxu0 0.0
    %1021 = vmatpush1.msra.mxu0 0.0
    %1022 = vmatprep.subr.mxu0 0.0
    %1023 = vmatpush1.msra.mxu0 0.0
    %1024 = vmatprep.subr.mxu0 0.0
    %1025 = vmatpush1.msra.mxu0 0.0
    %1026 = vmatprep.subr.mxu0 0.0
    %1027 = vmatpush1.msra.mxu0 0.0
    %1028 = vmatprep.subr.mxu0 0.0
    %1029 = vmatpush1.msra.mxu0 0.0
    %1030 = vmatprep.subr.mxu0 0.0
    %1031 = vmatpush1.msra.mxu0 0.0
    %1032 = vmatprep.subr.mxu0 0.0
    %1033 = vmatpush1.msra.mxu0 0.0
    %1034 = vmatprep.subr.mxu0 0.0
    %1035 = vmatpush1.msra.mxu0 0.0
    %1036 = vmatprep.subr.mxu0 0.0
    %1037 = vmatpush1.msra.mxu0 0.0
    %1038 = vmatprep.subr.mxu0 0.0
    %1039 = vmatpush1.msra.mxu0 0.0
    %1040 = vmatprep.subr.mxu0 0.0
    %1041 = vmatpush1.msra.mxu0 0.0
    %1042 = vmatprep.subr.mxu0 0.0
    %1043 = vmatpush1.msra.mxu0 0.0
    %1044 = vmatprep.subr.mxu0 0.0
    %1045 = vmatpush1.msra.mxu0 0.0
    %1046 = vmatprep.subr.mxu0 0.0
    %1047 = vmatpush1.msra.mxu0 0.0
    %1048 = vmatprep.subr.mxu0 0.0
    %1049 = vmatpush1.msra.mxu0 0.0
    %1050 = vmatprep.subr.mxu0 0.0
    %1051 = vmatpush1.msra.mxu0 0.0
    %1052 = vmatprep.subr.mxu0 0.0
    %1053 = vmatpush1.msra.mxu0 0.0
    %1054 = vmatprep.subr.mxu0 0.0
    %1055 = vmatpush1.msra.mxu0 0.0
    %1056 = vmatprep.subr.mxu0 0.0
    %1057 = vmatpush1.msra.mxu0 0.0
    %1058 = vmatprep.subr.mxu0 0.0
    %1059 = vmatpush1.msra.mxu0 0.0
    %1060 = vmatprep.subr.mxu0 0.0
    %1061 = vmatpush1.msra.mxu0 0.0
    %1062 = vmatprep.subr.mxu0 0.0
    %1063 = vmatpush1.msra.mxu0 0.0
    %1064 = vmatprep.mubr.f32.mxu0 0.0
    %1065 = vmatmul.mubr.f32.gmra.mrb[0].mxu0 %v998
    %v1066 = vpop.f32.mrb[0].mxu0
    %v1067 = vadd.f32 0.0, %v1066
    %v1068 = vpop.f32.mrb[0].mxu0
    %1069 = vdwg.mxu0
    %1071 = vrot.lane.b32.xlu0 %v995, 64
    %v1072 = vpop.permute.xlu0 %1071
    %v1073 = vsel %vm224, %v1072, 0
    %1075 = vmatprep.subr.mxu0 0.0
    %1076 = vmatpush1.msra.mxu0 %v114
    %1077 = vmatprep.subr.mxu0 0.0
    %1078 = vmatpush1.msra.mxu0 %v115
    %1079 = vmatprep.subr.mxu0 0.0
    %1080 = vmatpush1.msra.mxu0 %v116
    %1081 = vmatprep.subr.mxu0 0.0
    %1082 = vmatpush1.msra.mxu0 %v117
    %1083 = vmatprep.subr.mxu0 0.0
    %1084 = vmatpush1.msra.mxu0 %v118
    %1085 = vmatprep.subr.mxu0 0.0
    %1086 = vmatpush1.msra.mxu0 %v119
    %1087 = vmatprep.subr.mxu0 0.0
    %1088 = vmatpush1.msra.mxu0 %v120
    %1089 = vmatprep.subr.mxu0 0.0
    %1090 = vmatpush1.msra.mxu0 %v121
    %1091 = vmatprep.subr.mxu0 0.0
    %1092 = vmatpush1.msra.mxu0 0.0
    %1093 = vmatprep.subr.mxu0 0.0
    %1094 = vmatpush1.msra.mxu0 0.0
    %1095 = vmatprep.subr.mxu0 0.0
    %1096 = vmatpush1.msra.mxu0 0.0
    %1097 = vmatprep.subr.mxu0 0.0
    %1098 = vmatpush1.msra.mxu0 0.0
    %1099 = vmatprep.subr.mxu0 0.0
    %1100 = vmatpush1.msra.mxu0 0.0
    %1101 = vmatprep.subr.mxu0 0.0
    %1102 = vmatpush1.msra.mxu0 0.0
    %1103 = vmatprep.subr.mxu0 0.0
    %1104 = vmatpush1.msra.mxu0 0.0
    %1105 = vmatprep.subr.mxu0 0.0
    %1106 = vmatpush1.msra.mxu0 0.0
    %1107 = vmatprep.subr.mxu0 0.0
    %1108 = vmatpush1.msra.mxu0 0.0
    %1109 = vmatprep.subr.mxu0 0.0
    %1110 = vmatpush1.msra.mxu0 0.0
    %1111 = vmatprep.subr.mxu0 0.0
    %1112 = vmatpush1.msra.mxu0 0.0
    %1113 = vmatprep.subr.mxu0 0.0
    %1114 = vmatpush1.msra.mxu0 0.0
    %1115 = vmatprep.subr.mxu0 0.0
    %1116 = vmatpush1.msra.mxu0 0.0
    %1117 = vmatprep.subr.mxu0 0.0
    %1118 = vmatpush1.msra.mxu0 0.0
    %1119 = vmatprep.subr.mxu0 0.0
    %1120 = vmatpush1.msra.mxu0 0.0
    %1121 = vmatprep.subr.mxu0 0.0
    %1122 = vmatpush1.msra.mxu0 0.0
    %1123 = vmatprep.subr.mxu0 0.0
    %1124 = vmatpush1.msra.mxu0 0.0
    %1125 = vmatprep.subr.mxu0 0.0
    %1126 = vmatpush1.msra.mxu0 0.0
    %1127 = vmatprep.subr.mxu0 0.0
    %1128 = vmatpush1.msra.mxu0 0.0
    %1129 = vmatprep.subr.mxu0 0.0
    %1130 = vmatpush1.msra.mxu0 0.0
    %1131 = vmatprep.subr.mxu0 0.0
    %1132 = vmatpush1.msra.mxu0 0.0
    %1133 = vmatprep.subr.mxu0 0.0
    %1134 = vmatpush1.msra.mxu0 0.0
    %1135 = vmatprep.subr.mxu0 0.0
    %1136 = vmatpush1.msra.mxu0 0.0
    %1137 = vmatprep.subr.mxu0 0.0
    %1138 = vmatpush1.msra.mxu0 0.0
    %1139 = vmatprep.mubr.f32.mxu0 0.0
    %1140 = vmatmul.mubr.f32.gmra.mrb[0].mxu0 %v1073
    %v1141 = vpop.f32.mrb[0].mxu0
    %v1142 = vadd.f32 %v1067, %v1141
    %v1143 = vpop.f32.mrb[0].mxu0
    %1144 = vdwg.mxu0
    %1145 = vrot.lane.b32.xlu0 %v77, 117
    %v1146 = vpop.permute.xlu0 %1145
    %v1147 = vsel %vm322, %v1146, 0
    %1149 = vmatprep.subr.mxu0 0.0
    %1150 = vmatpush1.msra.mxu0 %v479
    %1151 = vmatprep.subr.mxu0 0.0
    %1152 = vmatpush1.msra.mxu0 0.0
    %1153 = vmatprep.subr.mxu0 0.0
    %1154 = vmatpush1.msra.mxu0 0.0
    %1155 = vmatprep.subr.mxu0 0.0
    %1156 = vmatpush1.msra.mxu0 0.0
    %1157 = vmatprep.subr.mxu0 0.0
    %1158 = vmatpush1.msra.mxu0 0.0
    %1159 = vmatprep.subr.mxu0 0.0
    %1160 = vmatpush1.msra.mxu0 0.0
    %1161 = vmatprep.subr.mxu0 0.0
    %1162 = vmatpush1.msra.mxu0 0.0
    %1163 = vmatprep.subr.mxu0 0.0
    %1164 = vmatpush1.msra.mxu0 0.0
    %1165 = vmatprep.subr.mxu0 0.0
    %1166 = vmatpush1.msra.mxu0 0.0
    %1167 = vmatprep.subr.mxu0 0.0
    %1168 = vmatpush1.msra.mxu0 0.0
    %1169 = vmatprep.subr.mxu0 0.0
    %1170 = vmatpush1.msra.mxu0 0.0
    %1171 = vmatprep.subr.mxu0 0.0
    %1172 = vmatpush1.msra.mxu0 0.0
    %1173 = vmatprep.subr.mxu0 0.0
    %1174 = vmatpush1.msra.mxu0 0.0
    %1175 = vmatprep.subr.mxu0 0.0
    %1176 = vmatpush1.msra.mxu0 0.0
    %1177 = vmatprep.subr.mxu0 0.0
    %1178 = vmatpush1.msra.mxu0 0.0
    %1179 = vmatprep.subr.mxu0 0.0
    %1180 = vmatpush1.msra.mxu0 0.0
    %1181 = vmatprep.subr.mxu0 0.0
    %1182 = vmatpush1.msra.mxu0 0.0
    %1183 = vmatprep.subr.mxu0 0.0
    %1184 = vmatpush1.msra.mxu0 0.0
    %1185 = vmatprep.subr.mxu0 0.0
    %1186 = vmatpush1.msra.mxu0 0.0
    %1187 = vmatprep.subr.mxu0 0.0
    %1188 = vmatpush1.msra.mxu0 0.0
    %1189 = vmatprep.subr.mxu0 0.0
    %1190 = vmatpush1.msra.mxu0 0.0
    %1191 = vmatprep.subr.mxu0 0.0
    %1192 = vmatpush1.msra.mxu0 0.0
    %1193 = vmatprep.subr.mxu0 0.0
    %1194 = vmatpush1.msra.mxu0 0.0
    %1195 = vmatprep.subr.mxu0 0.0
    %1196 = vmatpush1.msra.mxu0 0.0
    %1197 = vmatprep.subr.mxu0 0.0
    %1198 = vmatpush1.msra.mxu0 0.0
    %1199 = vmatprep.subr.mxu0 0.0
    %1200 = vmatpush1.msra.mxu0 0.0
    %1201 = vmatprep.subr.mxu0 0.0
    %1202 = vmatpush1.msra.mxu0 0.0
    %1203 = vmatprep.subr.mxu0 0.0
    %1204 = vmatpush1.msra.mxu0 0.0
    %1205 = vmatprep.subr.mxu0 0.0
    %1206 = vmatpush1.msra.mxu0 0.0
    %1207 = vmatprep.subr.mxu0 0.0
    %1208 = vmatpush1.msra.mxu0 0.0
    %1209 = vmatprep.subr.mxu0 0.0
    %1210 = vmatpush1.msra.mxu0 0.0
    %1211 = vmatprep.subr.mxu0 0.0
    %1212 = vmatpush1.msra.mxu0 0.0
    %1213 = vmatprep.mubr.f32.mxu0 0.0
    %1214 = vmatmul.mubr.f32.gmra.mrb[0].mxu0 %v1147
    %v1215 = vpop.f32.mrb[0].mxu0
    %v1216 = vadd.f32 0.0, %v1215
    %v1217 = vpop.f32.mrb[0].mxu0
    %1218 = vdwg.mxu0
    %v1219 = vadd.f32 %v1142, %v1216
    %v1220 = vadd.f32 %v1219, %v556
    %s1221 = scalar_lea.vmem %s14, 2
    %1222 = vst.msk [vmem:[%s1221] sm:$0x3] %vm559, %v1220
    %1223 = vmatprep.subr.mxu0 0.0
    %1224 = vmatpush1.msra.mxu0 %v562
    %1225 = vmatprep.subr.mxu0 0.0
    %1226 = vmatpush1.msra.mxu0 0.0
    %1227 = vmatprep.subr.mxu0 0.0
    %1228 = vmatpush1.msra.mxu0 0.0
    %1229 = vmatprep.subr.mxu0 0.0
    %1230 = vmatpush1.msra.mxu0 0.0
    %1231 = vmatprep.subr.mxu0 0.0
    %1232 = vmatpush1.msra.mxu0 0.0
    %1233 = vmatprep.subr.mxu0 0.0
    %1234 = vmatpush1.msra.mxu0 0.0
    %1235 = vmatprep.subr.mxu0 0.0
    %1236 = vmatpush1.msra.mxu0 0.0
    %1237 = vmatprep.subr.mxu0 0.0
    %1238 = vmatpush1.msra.mxu0 0.0
    %1239 = vmatprep.subr.mxu0 0.0
    %1240 = vmatpush1.msra.mxu0 0.0
    %1241 = vmatprep.subr.mxu0 0.0
    %1242 = vmatpush1.msra.mxu0 0.0
    %1243 = vmatprep.subr.mxu0 0.0
    %1244 = vmatpush1.msra.mxu0 0.0
    %1245 = vmatprep.subr.mxu0 0.0
    %1246 = vmatpush1.msra.mxu0 0.0
    %1247 = vmatprep.subr.mxu0 0.0
    %1248 = vmatpush1.msra.mxu0 0.0
    %1249 = vmatprep.subr.mxu0 0.0
    %1250 = vmatpush1.msra.mxu0 0.0
    %1251 = vmatprep.subr.mxu0 0.0
    %1252 = vmatpush1.msra.mxu0 0.0
    %1253 = vmatprep.subr.mxu0 0.0
    %1254 = vmatpush1.msra.mxu0 0.0
    %1255 = vmatprep.subr.mxu0 0.0
    %1256 = vmatpush1.msra.mxu0 0.0
    %1257 = vmatprep.subr.mxu0 0.0
    %1258 = vmatpush1.msra.mxu0 0.0
    %1259 = vmatprep.subr.mxu0 0.0
    %1260 = vmatpush1.msra.mxu0 0.0
    %1261 = vmatprep.subr.mxu0 0.0
    %1262 = vmatpush1.msra.mxu0 0.0
    %1263 = vmatprep.subr.mxu0 0.0
    %1264 = vmatpush1.msra.mxu0 0.0
    %1265 = vmatprep.subr.mxu0 0.0
    %1266 = vmatpush1.msra.mxu0 0.0
    %1267 = vmatprep.subr.mxu0 0.0
    %1268 = vmatpush1.msra.mxu0 0.0
    %1269 = vmatprep.subr.mxu0 0.0
    %1270 = vmatpush1.msra.mxu0 0.0
    %1271 = vmatprep.subr.mxu0 0.0
    %1272 = vmatpush1.msra.mxu0 0.0
    %1273 = vmatprep.subr.mxu0 0.0
    %1274 = vmatpush1.msra.mxu0 0.0
    %1275 = vmatprep.subr.mxu0 0.0
    %1276 = vmatpush1.msra.mxu0 0.0
    %1277 = vmatprep.subr.mxu0 0.0
    %1278 = vmatpush1.msra.mxu0 0.0
    %1279 = vmatprep.subr.mxu0 0.0
    %1280 = vmatpush1.msra.mxu0 0.0
    %1281 = vmatprep.subr.mxu0 0.0
    %1282 = vmatpush1.msra.mxu0 0.0
    %1283 = vmatprep.subr.mxu0 0.0
    %1284 = vmatpush1.msra.mxu0 0.0
    %1285 = vmatprep.subr.mxu0 0.0
    %1286 = vmatpush1.msra.mxu0 0.0
    %1287 = vmatprep.mubr.f32.mxu0 0.0
    %1288 = vmatmul.mubr.f32.gmra.mrb[0].mxu0 %v998
    %v1289 = vpop.f32.mrb[0].mxu0
    %v1290 = vadd.f32 0.0, %v1289
    %v1291 = vpop.f32.mrb[0].mxu0
    %1292 = vdwg.mxu0
    %1293 = vmatprep.subr.mxu0 0.0
    %1294 = vmatpush1.msra.mxu0 %v103
    %1295 = vmatprep.subr.mxu0 0.0
    %1296 = vmatpush1.msra.mxu0 %v104
    %1297 = vmatprep.subr.mxu0 0.0
    %1298 = vmatpush1.msra.mxu0 %v105
    %1299 = vmatprep.subr.mxu0 0.0
    %1300 = vmatpush1.msra.mxu0 %v106
    %1301 = vmatprep.subr.mxu0 0.0
    %1302 = vmatpush1.msra.mxu0 %v107
    %1303 = vmatprep.subr.mxu0 0.0
    %1304 = vmatpush1.msra.mxu0 %v108
    %1305 = vmatprep.subr.mxu0 0.0
    %1306 = vmatpush1.msra.mxu0 %v109
    %1307 = vmatprep.subr.mxu0 0.0
    %1308 = vmatpush1.msra.mxu0 %v110
    %1309 = vmatprep.subr.mxu0 0.0
    %1310 = vmatpush1.msra.mxu0 0.0
    %1311 = vmatprep.subr.mxu0 0.0
    %1312 = vmatpush1.msra.mxu0 0.0
    %1313 = vmatprep.subr.mxu0 0.0
    %1314 = vmatpush1.msra.mxu0 0.0
    %1315 = vmatprep.subr.mxu0 0.0
    %1316 = vmatpush1.msra.mxu0 0.0
    %1317 = vmatprep.subr.mxu0 0.0
    %1318 = vmatpush1.msra.mxu0 0.0
    %1319 = vmatprep.subr.mxu0 0.0
    %1320 = vmatpush1.msra.mxu0 0.0
    %1321 = vmatprep.subr.mxu0 0.0
    %1322 = vmatpush1.msra.mxu0 0.0
    %1323 = vmatprep.subr.mxu0 0.0
    %1324 = vmatpush1.msra.mxu0 0.0
    %1325 = vmatprep.subr.mxu0 0.0
    %1326 = vmatpush1.msra.mxu0 0.0
    %1327 = vmatprep.subr.mxu0 0.0
    %1328 = vmatpush1.msra.mxu0 0.0
    %1329 = vmatprep.subr.mxu0 0.0
    %1330 = vmatpush1.msra.mxu0 0.0
    %1331 = vmatprep.subr.mxu0 0.0
    %1332 = vmatpush1.msra.mxu0 0.0
    %1333 = vmatprep.subr.mxu0 0.0
    %1334 = vmatpush1.msra.mxu0 0.0
    %1335 = vmatprep.subr.mxu0 0.0
    %1336 = vmatpush1.msra.mxu0 0.0
    %1337 = vmatprep.subr.mxu0 0.0
    %1338 = vmatpush1.msra.mxu0 0.0
    %1339 = vmatprep.subr.mxu0 0.0
    %1340 = vmatpush1.msra.mxu0 0.0
    %1341 = vmatprep.subr.mxu0 0.0
    %1342 = vmatpush1.msra.mxu0 0.0
    %1343 = vmatprep.subr.mxu0 0.0
    %1344 = vmatpush1.msra.mxu0 0.0
    %1345 = vmatprep.subr.mxu0 0.0
    %1346 = vmatpush1.msra.mxu0 0.0
    %1347 = vmatprep.subr.mxu0 0.0
    %1348 = vmatpush1.msra.mxu0 0.0
    %1349 = vmatprep.subr.mxu0 0.0
    %1350 = vmatpush1.msra.mxu0 0.0
    %1351 = vmatprep.subr.mxu0 0.0
    %1352 = vmatpush1.msra.mxu0 0.0
    %1353 = vmatprep.subr.mxu0 0.0
    %1354 = vmatpush1.msra.mxu0 0.0
    %1355 = vmatprep.subr.mxu0 0.0
    %1356 = vmatpush1.msra.mxu0 0.0
    %1357 = vmatprep.mubr.f32.mxu0 0.0
    %1358 = vmatmul.mubr.f32.gmra.mrb[0].mxu0 %v1073
    %v1359 = vpop.f32.mrb[0].mxu0
    %v1360 = vadd.f32 %v1290, %v1359
    %v1361 = vpop.f32.mrb[0].mxu0
    %1362 = vdwg.mxu0
    %v1363 = vadd.f32 %v1360, %v708
    %1364 = vset.pattern.permute.xlu0 11
    %1365 = vperm.xlu0 %1364, %v77
    %v1366 = vpop.permute.xlu0 %1365
    %v1368 = vmul.f32 %v1366, %v719
    %v1369 = vadd.f32 %v1363, %v1368
    %v1370 = vsel %vm723, %v1369, -inf
    %1371 = vmax.xlane.f32.xlu0 %v1370
    %v1372 = vpop.xlane.xlu0 %1371
    %v1373 = vsub.f32 %v1369, %v1372
    %v1374 = vmul.f32 %v1373, 1.442695
    %v1375 = vpow.pop %v1374
    %v1376 = vsel %vm723, %v1375, 0.0
    %1377 = vadd.xlane.f32.xlu0 %v1376
    %v1378 = vpop.xlane.xlu0 %1377
    %v1379 = vlog2.pop %v1378
    %v1380 = vmul.f32 %v1379, 0.6931472
    %vm1381 = vcmp.eq.f32.partialorder %v1369, %v1372
    %v1382 = vsel %vm1381, %v126, 5
    %v1383 = vsel %vm723, %v1382, 2147483647
    %v1384 = vand.u32 %v1383, 65535
    %v1385 = vshra.s32 %v1383, 16
    %v1386 = vcvt.s32.f32 %v1384
    %v1387 = vcvt.s32.f32 %v1385
    %1388 = vmin.xlane.f32.xlu0 %v1387
    %v1389 = vpop.xlane.xlu0 %1388
    %vm1390 = vcmp.eq.f32.partialorder %v1387, %v1389
    %v1391 = vsel %vm1390, %v1386, inf
    %1392 = vmin.xlane.f32.xlu0 %v1391
    %v1393 = vpop.xlane.xlu0 %1392
    %v1394 = vcvt.f32.s32 %v1393
    %v1395 = vcvt.f32.s32 %v1389
    %v1396 = vshll.u32 %v1395, 16
    %v1397 = vadd.s32 %v1396, %v1394
    %s1398 = scalar_lea.vmem %s15, 2
    %1399 = vst.msk [vmem:[%s1398] sm:$0x3] %vm559, %v1397
    %v1400 = vsub.f32 0.0, %v1380
    %s1401 = scalar_lea.vmem %s16, 2
    %1402 = vst.msk [vmem:[%s1401] sm:$0x3] %vm559, %v1400
    %1403 = vset.pattern.permute.xlu0 12
    %1404 = vperm.xlu0 %1403, %v77
    %v1405 = vpop.permute.xlu0 %1404
    %v1407 = vmul.f32 %v1405, %v719
    %v1408 = vadd.f32 %v1363, %v1407
    %v1409 = vsel %vm723, %v1408, -inf
    %1410 = vmax.xlane.f32.xlu0 %v1409
    %v1411 = vpop.xlane.xlu0 %1410
    %v1412 = vsub.f32 %v1408, %v1411
    %v1413 = vmul.f32 %v1412, 1.442695
    %v1414 = vpow.pop %v1413
    %v1415 = vsel %vm723, %v1414, 0.0
    %1416 = vadd.xlane.f32.xlu0 %v1415
    %v1417 = vpop.xlane.xlu0 %1416
    %v1418 = vlog2.pop %v1417
    %v1419 = vmul.f32 %v1418, 0.6931472
    %vm1420 = vcmp.eq.f32.partialorder %v1408, %v1411
    %v1421 = vsel %vm1420, %v126, 5
    %v1422 = vsel %vm723, %v1421, 2147483647
    %v1423 = vand.u32 %v1422, 65535
    %v1424 = vshra.s32 %v1422, 16
    %v1425 = vcvt.s32.f32 %v1423
    %v1426 = vcvt.s32.f32 %v1424
    %1427 = vmin.xlane.f32.xlu0 %v1426
    %v1428 = vpop.xlane.xlu0 %1427
    %vm1429 = vcmp.eq.f32.partialorder %v1426, %v1428
    %v1430 = vsel %vm1429, %v1425, inf
    %1431 = vmin.xlane.f32.xlu0 %v1430
    %v1432 = vpop.xlane.xlu0 %1431
    %v1433 = vcvt.f32.s32 %v1432
    %v1434 = vcvt.f32.s32 %v1428
    %v1435 = vshll.u32 %v1434, 16
    %v1436 = vadd.s32 %v1435, %v1433
    %s1437 = scalar_lea.vmem %s15, 14
    %1438 = vst.msk [vmem:[%s1437] sm:$0x3] %vm559, %v1436
    %v1439 = vsub.f32 0.0, %v1419
    %s1440 = scalar_lea.vmem %s16, 14
    %1441 = vst.msk [vmem:[%s1440] sm:$0x3] %vm559, %v1439
    %1442 = vset.pattern.permute.xlu0 13
    %1443 = vperm.xlu0 %1442, %v77
    %v1444 = vpop.permute.xlu0 %1443
    %v1446 = vmul.f32 %v1444, %v719
    %v1447 = vadd.f32 %v1363, %v1446
    %v1448 = vsel %vm723, %v1447, -inf
    %1449 = vmax.xlane.f32.xlu0 %v1448
    %v1450 = vpop.xlane.xlu0 %1449
    %v1451 = vsub.f32 %v1447, %v1450
    %v1452 = vmul.f32 %v1451, 1.442695
    %v1453 = vpow.pop %v1452
    %v1454 = vsel %vm723, %v1453, 0.0
    %1455 = vadd.xlane.f32.xlu0 %v1454
    %v1456 = vpop.xlane.xlu0 %1455
    %v1457 = vlog2.pop %v1456
    %v1458 = vmul.f32 %v1457, 0.6931472
    %vm1459 = vcmp.eq.f32.partialorder %v1447, %v1450
    %v1460 = vsel %vm1459, %v126, 5
    %v1461 = vsel %vm723, %v1460, 2147483647
    %v1462 = vand.u32 %v1461, 65535
    %v1463 = vshra.s32 %v1461, 16
    %v1464 = vcvt.s32.f32 %v1462
    %v1465 = vcvt.s32.f32 %v1463
    %1466 = vmin.xlane.f32.xlu0 %v1465
    %v1467 = vpop.xlane.xlu0 %1466
    %vm1468 = vcmp.eq.f32.partialorder %v1465, %v1467
    %v1469 = vsel %vm1468, %v1464, inf
    %1470 = vmin.xlane.f32.xlu0 %v1469
    %v1471 = vpop.xlane.xlu0 %1470
    %v1472 = vcvt.f32.s32 %v1471
    %v1473 = vcvt.f32.s32 %v1467
    %v1474 = vshll.u32 %v1473, 16
    %v1475 = vadd.s32 %v1474, %v1472
    %s1476 = scalar_lea.vmem %s15, 26
    %1477 = vst.msk [vmem:[%s1476] sm:$0x3] %vm559, %v1475
    %v1478 = vsub.f32 0.0, %v1458
    %s1479 = scalar_lea.vmem %s16, 26
    %1480 = vst.msk [vmem:[%s1479] sm:$0x3] %vm559, %v1478
    %v1482 = vsel %vm138, %v78, 0
    %1484 = vmatprep.subr.mxu0 %v84
    %1485 = vmatpush1.msra.mxu0 %v83
    %1486 = vmatprep.subr.mxu0 0.0
    %1487 = vmatpush1.msra.mxu0 0.0
    %1488 = vmatprep.subr.mxu0 0.0
    %1489 = vmatpush1.msra.mxu0 0.0
    %1490 = vmatprep.subr.mxu0 0.0
    %1491 = vmatpush1.msra.mxu0 0.0
    %1492 = vmatprep.subr.mxu0 0.0
    %1493 = vmatpush1.msra.mxu0 0.0
    %1494 = vmatprep.subr.mxu0 0.0
    %1495 = vmatpush1.msra.mxu0 0.0
    %1496 = vmatprep.subr.mxu0 0.0
    %1497 = vmatpush1.msra.mxu0 0.0
    %1498 = vmatprep.subr.mxu0 0.0
    %1499 = vmatpush1.msra.mxu0 0.0
    %1500 = vmatprep.subr.mxu0 0.0
    %1501 = vmatpush1.msra.mxu0 0.0
    %1502 = vmatprep.subr.mxu0 0.0
    %1503 = vmatpush1.msra.mxu0 0.0
    %1504 = vmatprep.subr.mxu0 0.0
    %1505 = vmatpush1.msra.mxu0 0.0
    %1506 = vmatprep.subr.mxu0 0.0
    %1507 = vmatpush1.msra.mxu0 0.0
    %1508 = vmatprep.subr.mxu0 0.0
    %1509 = vmatpush1.msra.mxu0 0.0
    %1510 = vmatprep.subr.mxu0 0.0
    %1511 = vmatpush1.msra.mxu0 0.0
    %1512 = vmatprep.subr.mxu0 0.0
    %1513 = vmatpush1.msra.mxu0 0.0
    %1514 = vmatprep.subr.mxu0 0.0
    %1515 = vmatpush1.msra.mxu0 0.0
    %1516 = vmatprep.subr.mxu0 0.0
    %1517 = vmatpush1.msra.mxu0 0.0
    %1518 = vmatprep.subr.mxu0 0.0
    %1519 = vmatpush1.msra.mxu0 0.0
    %1520 = vmatprep.subr.mxu0 0.0
    %1521 = vmatpush1.msra.mxu0 0.0
    %1522 = vmatprep.subr.mxu0 0.0
    %1523 = vmatpush1.msra.mxu0 0.0
    %1524 = vmatprep.subr.mxu0 0.0
    %1525 = vmatpush1.msra.mxu0 0.0
    %1526 = vmatprep.subr.mxu0 0.0
    %1527 = vmatpush1.msra.mxu0 0.0
    %1528 = vmatprep.subr.mxu0 0.0
    %1529 = vmatpush1.msra.mxu0 0.0
    %1530 = vmatprep.subr.mxu0 0.0
    %1531 = vmatpush1.msra.mxu0 0.0
    %1532 = vmatprep.subr.mxu0 0.0
    %1533 = vmatpush1.msra.mxu0 0.0
    %1534 = vmatprep.subr.mxu0 0.0
    %1535 = vmatpush1.msra.mxu0 0.0
    %1536 = vmatprep.subr.mxu0 0.0
    %1537 = vmatpush1.msra.mxu0 0.0
    %1538 = vmatprep.subr.mxu0 0.0
    %1539 = vmatpush1.msra.mxu0 0.0
    %1540 = vmatprep.subr.mxu0 0.0
    %1541 = vmatpush1.msra.mxu0 0.0
    %1542 = vmatprep.subr.mxu0 0.0
    %1543 = vmatpush1.msra.mxu0 0.0
    %1544 = vmatprep.subr.mxu0 0.0
    %1545 = vmatpush1.msra.mxu0 0.0
    %1546 = vmatprep.subr.mxu0 0.0
    %1547 = vmatpush1.msra.mxu0 0.0
    %1548 = vmatprep.mubr.f32.mxu0 0.0
    %1549 = vmatmul.mubr.f32.gmra.mrb[0].mxu0 %v1482
    %v1550 = vpop.f32.mrb[0].mxu0
    %v1551 = vadd.f32 %v131, %v1550
    %v1552 = vpop.f32.mrb[0].mxu0
    %v1553 = vadd.f32 %v135, %v1552
    %1554 = vdwg.mxu0
    %1555 = vmatprep.subr.mxu0 %v86
    %1556 = vmatpush1.msra.mxu0 %v85
    %1557 = vmatprep.subr.mxu0 %v88
    %1558 = vmatpush1.msra.mxu0 %v87
    %1559 = vmatprep.subr.mxu0 %v90
    %1560 = vmatpush1.msra.mxu0 %v89
    %1561 = vmatprep.subr.mxu0 %v92
    %1562 = vmatpush1.msra.mxu0 %v91
    %1563 = vmatprep.subr.mxu0 %v94
    %1564 = vmatpush1.msra.mxu0 %v93
    %1565 = vmatprep.subr.mxu0 %v96
    %1566 = vmatpush1.msra.mxu0 %v95
    %1567 = vmatprep.subr.mxu0 %v98
    %1568 = vmatpush1.msra.mxu0 %v97
    %1569 = vmatprep.subr.mxu0 %v100
    %1570 = vmatpush1.msra.mxu0 %v99
    %1571 = vmatprep.subr.mxu0 0.0
    %1572 = vmatpush1.msra.mxu0 0.0
    %1573 = vmatprep.subr.mxu0 0.0
    %1574 = vmatpush1.msra.mxu0 0.0
    %1575 = vmatprep.subr.mxu0 0.0
    %1576 = vmatpush1.msra.mxu0 0.0
    %1577 = vmatprep.subr.mxu0 0.0
    %1578 = vmatpush1.msra.mxu0 0.0
    %1579 = vmatprep.subr.mxu0 0.0
    %1580 = vmatpush1.msra.mxu0 0.0
    %1581 = vmatprep.subr.mxu0 0.0
    %1582 = vmatpush1.msra.mxu0 0.0
    %1583 = vmatprep.subr.mxu0 0.0
    %1584 = vmatpush1.msra.mxu0 0.0
    %1585 = vmatprep.subr.mxu0 0.0
    %1586 = vmatpush1.msra.mxu0 0.0
    %1587 = vmatprep.subr.mxu0 0.0
    %1588 = vmatpush1.msra.mxu0 0.0
    %1589 = vmatprep.subr.mxu0 0.0
    %1590 = vmatpush1.msra.mxu0 0.0
    %1591 = vmatprep.subr.mxu0 0.0
    %1592 = vmatpush1.msra.mxu0 0.0
    %1593 = vmatprep.subr.mxu0 0.0
    %1594 = vmatpush1.msra.mxu0 0.0
    %1595 = vmatprep.subr.mxu0 0.0
    %1596 = vmatpush1.msra.mxu0 0.0
    %1597 = vmatprep.subr.mxu0 0.0
    %1598 = vmatpush1.msra.mxu0 0.0
    %1599 = vmatprep.subr.mxu0 0.0
    %1600 = vmatpush1.msra.mxu0 0.0
    %1601 = vmatprep.subr.mxu0 0.0
    %1602 = vmatpush1.msra.mxu0 0.0
    %1603 = vmatprep.subr.mxu0 0.0
    %1604 = vmatpush1.msra.mxu0 0.0
    %1605 = vmatprep.subr.mxu0 0.0
    %1606 = vmatpush1.msra.mxu0 0.0
    %1607 = vmatprep.subr.mxu0 0.0
    %1608 = vmatpush1.msra.mxu0 0.0
    %1609 = vmatprep.subr.mxu0 0.0
    %1610 = vmatpush1.msra.mxu0 0.0
    %1611 = vmatprep.subr.mxu0 0.0
    %1612 = vmatpush1.msra.mxu0 0.0
    %1613 = vmatprep.subr.mxu0 0.0
    %1614 = vmatpush1.msra.mxu0 0.0
    %1615 = vmatprep.subr.mxu0 0.0
    %1616 = vmatpush1.msra.mxu0 0.0
    %1617 = vmatprep.subr.mxu0 0.0
    %1618 = vmatpush1.msra.mxu0 0.0
    %1619 = vmatprep.mubr.f32.mxu0 0.0
    %1620 = vmatmul.mubr.f32.gmra.mrb[0].mxu0 %v1073
    %v1621 = vpop.f32.mrb[0].mxu0
    %v1622 = vadd.f32 %v217, %v1621
    %v1623 = vpop.f32.mrb[0].mxu0
    %v1624 = vadd.f32 %v221, %v1623
    %1625 = vdwg.mxu0
    %v1626 = vadd.f32 %v1551, %v1622
    %v1627 = vxor.u32 %v1626, 2147483648
    %v1628 = vmul.f32 %v1627, 1.442695
    %v1629 = vpow.pop %v1628
    %v1630 = vadd.f32 %v1629, 1.0
    %v1631 = vrcp.pop %v1630
    %v1632 = vmul.f32 1.0, %v1631
    %v1633 = vmul.f32 %v1632, %v1624
    %v1634 = vadd.f32 %v1553, %v1633
    %v1635 = vtanh.pop %v1634
    %v1636 = vsub.f32 1.0, %v1632
    %1638 = vrot.lane.b32.xlu0 %v1635, 64
    %v1639 = vpop.permute.xlu0 %1638
    %v1641 = vmul.f32 %v1636, %v1639
    %v1642 = vmul.f32 %v1632, %v995
    %v1643 = vadd.f32 %v1641, %v1642
    %1644 = vrot.lane.b32.xlu0 %v78, 120
    %v1645 = vpop.permute.xlu0 %1644
    %v1646 = vsel %vm322, %v1645, 0
    %1648 = vmatprep.subr.mxu0 0.0
    %1649 = vmatpush1.msra.mxu0 %v327
    %1650 = vmatprep.subr.mxu0 0.0
    %1651 = vmatpush1.msra.mxu0 0.0
    %1652 = vmatprep.subr.mxu0 0.0
    %1653 = vmatpush1.msra.mxu0 0.0
    %1654 = vmatprep.subr.mxu0 0.0
    %1655 = vmatpush1.msra.mxu0 0.0
    %1656 = vmatprep.subr.mxu0 0.0
    %1657 = vmatpush1.msra.mxu0 0.0
    %1658 = vmatprep.subr.mxu0 0.0
    %1659 = vmatpush1.msra.mxu0 0.0
    %1660 = vmatprep.subr.mxu0 0.0
    %1661 = vmatpush1.msra.mxu0 0.0
    %1662 = vmatprep.subr.mxu0 0.0
    %1663 = vmatpush1.msra.mxu0 0.0
    %1664 = vmatprep.subr.mxu0 0.0
    %1665 = vmatpush1.msra.mxu0 0.0
    %1666 = vmatprep.subr.mxu0 0.0
    %1667 = vmatpush1.msra.mxu0 0.0
    %1668 = vmatprep.subr.mxu0 0.0
    %1669 = vmatpush1.msra.mxu0 0.0
    %1670 = vmatprep.subr.mxu0 0.0
    %1671 = vmatpush1.msra.mxu0 0.0
    %1672 = vmatprep.subr.mxu0 0.0
    %1673 = vmatpush1.msra.mxu0 0.0
    %1674 = vmatprep.subr.mxu0 0.0
    %1675 = vmatpush1.msra.mxu0 0.0
    %1676 = vmatprep.subr.mxu0 0.0
    %1677 = vmatpush1.msra.mxu0 0.0
    %1678 = vmatprep.subr.mxu0 0.0
    %1679 = vmatpush1.msra.mxu0 0.0
    %1680 = vmatprep.subr.mxu0 0.0
    %1681 = vmatpush1.msra.mxu0 0.0
    %1682 = vmatprep.subr.mxu0 0.0
    %1683 = vmatpush1.msra.mxu0 0.0
    %1684 = vmatprep.subr.mxu0 0.0
    %1685 = vmatpush1.msra.mxu0 0.0
    %1686 = vmatprep.subr.mxu0 0.0
    %1687 = vmatpush1.msra.mxu0 0.0
    %1688 = vmatprep.subr.mxu0 0.0
    %1689 = vmatpush1.msra.mxu0 0.0
    %1690 = vmatprep.subr.mxu0 0.0
    %1691 = vmatpush1.msra.mxu0 0.0
    %1692 = vmatprep.subr.mxu0 0.0
    %1693 = vmatpush1.msra.mxu0 0.0
    %1694 = vmatprep.subr.mxu0 0.0
    %1695 = vmatpush1.msra.mxu0 0.0
    %1696 = vmatprep.subr.mxu0 0.0
    %1697 = vmatpush1.msra.mxu0 0.0
    %1698 = vmatprep.subr.mxu0 0.0
    %1699 = vmatpush1.msra.mxu0 0.0
    %1700 = vmatprep.subr.mxu0 0.0
    %1701 = vmatpush1.msra.mxu0 0.0
    %1702 = vmatprep.subr.mxu0 0.0
    %1703 = vmatpush1.msra.mxu0 0.0
    %1704 = vmatprep.subr.mxu0 0.0
    %1705 = vmatpush1.msra.mxu0 0.0
    %1706 = vmatprep.subr.mxu0 0.0
    %1707 = vmatpush1.msra.mxu0 0.0
    %1708 = vmatprep.subr.mxu0 0.0
    %1709 = vmatpush1.msra.mxu0 0.0
    %1710 = vmatprep.subr.mxu0 0.0
    %1711 = vmatpush1.msra.mxu0 0.0
    %1712 = vmatprep.mubr.f32.mxu0 0.0
    %1713 = vmatmul.mubr.f32.gmra.mrb[0].mxu0 %v1646
    %v1714 = vpop.f32.mrb[0].mxu0
    %v1715 = vadd.f32 0.0, %v1714
    %v1716 = vpop.f32.mrb[0].mxu0
    %1717 = vdwg.mxu0
    %1719 = vrot.lane.b32.xlu0 %v1643, 64
    %v1720 = vpop.permute.xlu0 %1719
    %v1721 = vsel %vm224, %v1720, 0
    %1723 = vmatprep.subr.mxu0 0.0
    %1724 = vmatpush1.msra.mxu0 %v114
    %1725 = vmatprep.subr.mxu0 0.0
    %1726 = vmatpush1.msra.mxu0 %v115
    %1727 = vmatprep.subr.mxu0 0.0
    %1728 = vmatpush1.msra.mxu0 %v116
    %1729 = vmatprep.subr.mxu0 0.0
    %1730 = vmatpush1.msra.mxu0 %v117
    %1731 = vmatprep.subr.mxu0 0.0
    %1732 = vmatpush1.msra.mxu0 %v118
    %1733 = vmatprep.subr.mxu0 0.0
    %1734 = vmatpush1.msra.mxu0 %v119
    %1735 = vmatprep.subr.mxu0 0.0
    %1736 = vmatpush1.msra.mxu0 %v120
    %1737 = vmatprep.subr.mxu0 0.0
    %1738 = vmatpush1.msra.mxu0 %v121
    %1739 = vmatprep.subr.mxu0 0.0
    %1740 = vmatpush1.msra.mxu0 0.0
    %1741 = vmatprep.subr.mxu0 0.0
    %1742 = vmatpush1.msra.mxu0 0.0
    %1743 = vmatprep.subr.mxu0 0.0
    %1744 = vmatpush1.msra.mxu0 0.0
    %1745 = vmatprep.subr.mxu0 0.0
    %1746 = vmatpush1.msra.mxu0 0.0
    %1747 = vmatprep.subr.mxu0 0.0
    %1748 = vmatpush1.msra.mxu0 0.0
    %1749 = vmatprep.subr.mxu0 0.0
    %1750 = vmatpush1.msra.mxu0 0.0
    %1751 = vmatprep.subr.mxu0 0.0
    %1752 = vmatpush1.msra.mxu0 0.0
    %1753 = vmatprep.subr.mxu0 0.0
    %1754 = vmatpush1.msra.mxu0 0.0
    %1755 = vmatprep.subr.mxu0 0.0
    %1756 = vmatpush1.msra.mxu0 0.0
    %1757 = vmatprep.subr.mxu0 0.0
    %1758 = vmatpush1.msra.mxu0 0.0
    %1759 = vmatprep.subr.mxu0 0.0
    %1760 = vmatpush1.msra.mxu0 0.0
    %1761 = vmatprep.subr.mxu0 0.0
    %1762 = vmatpush1.msra.mxu0 0.0
    %1763 = vmatprep.subr.mxu0 0.0
    %1764 = vmatpush1.msra.mxu0 0.0
    %1765 = vmatprep.subr.mxu0 0.0
    %1766 = vmatpush1.msra.mxu0 0.0
    %1767 = vmatprep.subr.mxu0 0.0
    %1768 = vmatpush1.msra.mxu0 0.0
    %1769 = vmatprep.subr.mxu0 0.0
    %1770 = vmatpush1.msra.mxu0 0.0
    %1771 = vmatprep.subr.mxu0 0.0
    %1772 = vmatpush1.msra.mxu0 0.0
    %1773 = vmatprep.subr.mxu0 0.0
    %1774 = vmatpush1.msra.mxu0 0.0
    %1775 = vmatprep.subr.mxu0 0.0
    %1776 = vmatpush1.msra.mxu0 0.0
    %1777 = vmatprep.subr.mxu0 0.0
    %1778 = vmatpush1.msra.mxu0 0.0
    %1779 = vmatprep.subr.mxu0 0.0
    %1780 = vmatpush1.msra.mxu0 0.0
    %1781 = vmatprep.subr.mxu0 0.0
    %1782 = vmatpush1.msra.mxu0 0.0
    %1783 = vmatprep.subr.mxu0 0.0
    %1784 = vmatpush1.msra.mxu0 0.0
    %1785 = vmatprep.subr.mxu0 0.0
    %1786 = vmatpush1.msra.mxu0 0.0
    %1787 = vmatprep.mubr.f32.mxu0 0.0
    %1788 = vmatmul.mubr.f32.gmra.mrb[0].mxu0 %v1721
    %v1789 = vpop.f32.mrb[0].mxu0
    %v1790 = vadd.f32 %v1715, %v1789
    %v1791 = vpop.f32.mrb[0].mxu0
    %1792 = vdwg.mxu0
    %1793 = vrot.lane.b32.xlu0 %v78, 117
    %v1794 = vpop.permute.xlu0 %1793
    %v1795 = vsel %vm322, %v1794, 0
    %1797 = vmatprep.subr.mxu0 0.0
    %1798 = vmatpush1.msra.mxu0 %v479
    %1799 = vmatprep.subr.mxu0 0.0
    %1800 = vmatpush1.msra.mxu0 0.0
    %1801 = vmatprep.subr.mxu0 0.0
    %1802 = vmatpush1.msra.mxu0 0.0
    %1803 = vmatprep.subr.mxu0 0.0
    %1804 = vmatpush1.msra.mxu0 0.0
    %1805 = vmatprep.subr.mxu0 0.0
    %1806 = vmatpush1.msra.mxu0 0.0
    %1807 = vmatprep.subr.mxu0 0.0
    %1808 = vmatpush1.msra.mxu0 0.0
    %1809 = vmatprep.subr.mxu0 0.0
    %1810 = vmatpush1.msra.mxu0 0.0
    %1811 = vmatprep.subr.mxu0 0.0
    %1812 = vmatpush1.msra.mxu0 0.0
    %1813 = vmatprep.subr.mxu0 0.0
    %1814 = vmatpush1.msra.mxu0 0.0
    %1815 = vmatprep.subr.mxu0 0.0
    %1816 = vmatpush1.msra.mxu0 0.0
    %1817 = vmatprep.subr.mxu0 0.0
    %1818 = vmatpush1.msra.mxu0 0.0
    %1819 = vmatprep.subr.mxu0 0.0
    %1820 = vmatpush1.msra.mxu0 0.0
    %1821 = vmatprep.subr.mxu0 0.0
    %1822 = vmatpush1.msra.mxu0 0.0
    %1823 = vmatprep.subr.mxu0 0.0
    %1824 = vmatpush1.msra.mxu0 0.0
    %1825 = vmatprep.subr.mxu0 0.0
    %1826 = vmatpush1.msra.mxu0 0.0
    %1827 = vmatprep.subr.mxu0 0.0
    %1828 = vmatpush1.msra.mxu0 0.0
    %1829 = vmatprep.subr.mxu0 0.0
    %1830 = vmatpush1.msra.mxu0 0.0
    %1831 = vmatprep.subr.mxu0 0.0
    %1832 = vmatpush1.msra.mxu0 0.0
    %1833 = vmatprep.subr.mxu0 0.0
    %1834 = vmatpush1.msra.mxu0 0.0
    %1835 = vmatprep.subr.mxu0 0.0
    %1836 = vmatpush1.msra.mxu0 0.0
    %1837 = vmatprep.subr.mxu0 0.0
    %1838 = vmatpush1.msra.mxu0 0.0
    %1839 = vmatprep.subr.mxu0 0.0
    %1840 = vmatpush1.msra.mxu0 0.0
    %1841 = vmatprep.subr.mxu0 0.0
    %1842 = vmatpush1.msra.mxu0 0.0
    %1843 = vmatprep.subr.mxu0 0.0
    %1844 = vmatpush1.msra.mxu0 0.0
    %1845 = vmatprep.subr.mxu0 0.0
    %1846 = vmatpush1.msra.mxu0 0.0
    %1847 = vmatprep.subr.mxu0 0.0
    %1848 = vmatpush1.msra.mxu0 0.0
    %1849 = vmatprep.subr.mxu0 0.0
    %1850 = vmatpush1.msra.mxu0 0.0
    %1851 = vmatprep.subr.mxu0 0.0
    %1852 = vmatpush1.msra.mxu0 0.0
    %1853 = vmatprep.subr.mxu0 0.0
    %1854 = vmatpush1.msra.mxu0 0.0
    %1855 = vmatprep.subr.mxu0 0.0
    %1856 = vmatpush1.msra.mxu0 0.0
    %1857 = vmatprep.subr.mxu0 0.0
    %1858 = vmatpush1.msra.mxu0 0.0
    %1859 = vmatprep.subr.mxu0 0.0
    %1860 = vmatpush1.msra.mxu0 0.0
    %1861 = vmatprep.mubr.f32.mxu0 0.0
    %1862 = vmatmul.mubr.f32.gmra.mrb[0].mxu0 %v1795
    %v1863 = vpop.f32.mrb[0].mxu0
    %v1864 = vadd.f32 0.0, %v1863
    %v1865 = vpop.f32.mrb[0].mxu0
    %1866 = vdwg.mxu0
    %v1867 = vadd.f32 %v1790, %v1864
    %v1868 = vadd.f32 %v1867, %v556
    %s1869 = scalar_lea.vmem %s14, 4
    %1870 = vst.msk [vmem:[%s1869] sm:$0x3] %vm559, %v1868
    %1871 = vmatprep.subr.mxu0 0.0
    %1872 = vmatpush1.msra.mxu0 %v562
    %1873 = vmatprep.subr.mxu0 0.0
    %1874 = vmatpush1.msra.mxu0 0.0
    %1875 = vmatprep.subr.mxu0 0.0
    %1876 = vmatpush1.msra.mxu0 0.0
    %1877 = vmatprep.subr.mxu0 0.0
    %1878 = vmatpush1.msra.mxu0 0.0
    %1879 = vmatprep.subr.mxu0 0.0
    %1880 = vmatpush1.msra.mxu0 0.0
    %1881 = vmatprep.subr.mxu0 0.0
    %1882 = vmatpush1.msra.mxu0 0.0
    %1883 = vmatprep.subr.mxu0 0.0
    %1884 = vmatpush1.msra.mxu0 0.0
    %1885 = vmatprep.subr.mxu0 0.0
    %1886 = vmatpush1.msra.mxu0 0.0
    %1887 = vmatprep.subr.mxu0 0.0
    %1888 = vmatpush1.msra.mxu0 0.0
    %1889 = vmatprep.subr.mxu0 0.0
    %1890 = vmatpush1.msra.mxu0 0.0
    %1891 = vmatprep.subr.mxu0 0.0
    %1892 = vmatpush1.msra.mxu0 0.0
    %1893 = vmatprep.subr.mxu0 0.0
    %1894 = vmatpush1.msra.mxu0 0.0
    %1895 = vmatprep.subr.mxu0 0.0
    %1896 = vmatpush1.msra.mxu0 0.0
    %1897 = vmatprep.subr.mxu0 0.0
    %1898 = vmatpush1.msra.mxu0 0.0
    %1899 = vmatprep.subr.mxu0 0.0
    %1900 = vmatpush1.msra.mxu0 0.0
    %1901 = vmatprep.subr.mxu0 0.0
    %1902 = vmatpush1.msra.mxu0 0.0
    %1903 = vmatprep.subr.mxu0 0.0
    %1904 = vmatpush1.msra.mxu0 0.0
    %1905 = vmatprep.subr.mxu0 0.0
    %1906 = vmatpush1.msra.mxu0 0.0
    %1907 = vmatprep.subr.mxu0 0.0
    %1908 = vmatpush1.msra.mxu0 0.0
    %1909 = vmatprep.subr.mxu0 0.0
    %1910 = vmatpush1.msra.mxu0 0.0
    %1911 = vmatprep.subr.mxu0 0.0
    %1912 = vmatpush1.msra.mxu0 0.0
    %1913 = vmatprep.subr.mxu0 0.0
    %1914 = vmatpush1.msra.mxu0 0.0
    %1915 = vmatprep.subr.mxu0 0.0
    %1916 = vmatpush1.msra.mxu0 0.0
    %1917 = vmatprep.subr.mxu0 0.0
    %1918 = vmatpush1.msra.mxu0 0.0
    %1919 = vmatprep.subr.mxu0 0.0
    %1920 = vmatpush1.msra.mxu0 0.0
    %1921 = vmatprep.subr.mxu0 0.0
    %1922 = vmatpush1.msra.mxu0 0.0
    %1923 = vmatprep.subr.mxu0 0.0
    %1924 = vmatpush1.msra.mxu0 0.0
    %1925 = vmatprep.subr.mxu0 0.0
    %1926 = vmatpush1.msra.mxu0 0.0
    %1927 = vmatprep.subr.mxu0 0.0
    %1928 = vmatpush1.msra.mxu0 0.0
    %1929 = vmatprep.subr.mxu0 0.0
    %1930 = vmatpush1.msra.mxu0 0.0
    %1931 = vmatprep.subr.mxu0 0.0
    %1932 = vmatpush1.msra.mxu0 0.0
    %1933 = vmatprep.subr.mxu0 0.0
    %1934 = vmatpush1.msra.mxu0 0.0
    %1935 = vmatprep.mubr.f32.mxu0 0.0
    %1936 = vmatmul.mubr.f32.gmra.mrb[0].mxu0 %v1646
    %v1937 = vpop.f32.mrb[0].mxu0
    %v1938 = vadd.f32 0.0, %v1937
    %v1939 = vpop.f32.mrb[0].mxu0
    %1940 = vdwg.mxu0
    %1941 = vmatprep.subr.mxu0 0.0
    %1942 = vmatpush1.msra.mxu0 %v103
    %1943 = vmatprep.subr.mxu0 0.0
    %1944 = vmatpush1.msra.mxu0 %v104
    %1945 = vmatprep.subr.mxu0 0.0
    %1946 = vmatpush1.msra.mxu0 %v105
    %1947 = vmatprep.subr.mxu0 0.0
    %1948 = vmatpush1.msra.mxu0 %v106
    %1949 = vmatprep.subr.mxu0 0.0
    %1950 = vmatpush1.msra.mxu0 %v107
    %1951 = vmatprep.subr.mxu0 0.0
    %1952 = vmatpush1.msra.mxu0 %v108
    %1953 = vmatprep.subr.mxu0 0.0
    %1954 = vmatpush1.msra.mxu0 %v109
    %1955 = vmatprep.subr.mxu0 0.0
    %1956 = vmatpush1.msra.mxu0 %v110
    %1957 = vmatprep.subr.mxu0 0.0
    %1958 = vmatpush1.msra.mxu0 0.0
    %1959 = vmatprep.subr.mxu0 0.0
    %1960 = vmatpush1.msra.mxu0 0.0
    %1961 = vmatprep.subr.mxu0 0.0
    %1962 = vmatpush1.msra.mxu0 0.0
    %1963 = vmatprep.subr.mxu0 0.0
    %1964 = vmatpush1.msra.mxu0 0.0
    %1965 = vmatprep.subr.mxu0 0.0
    %1966 = vmatpush1.msra.mxu0 0.0
    %1967 = vmatprep.subr.mxu0 0.0
    %1968 = vmatpush1.msra.mxu0 0.0
    %1969 = vmatprep.subr.mxu0 0.0
    %1970 = vmatpush1.msra.mxu0 0.0
    %1971 = vmatprep.subr.mxu0 0.0
    %1972 = vmatpush1.msra.mxu0 0.0
    %1973 = vmatprep.subr.mxu0 0.0
    %1974 = vmatpush1.msra.mxu0 0.0
    %1975 = vmatprep.subr.mxu0 0.0
    %1976 = vmatpush1.msra.mxu0 0.0
    %1977 = vmatprep.subr.mxu0 0.0
    %1978 = vmatpush1.msra.mxu0 0.0
    %1979 = vmatprep.subr.mxu0 0.0
    %1980 = vmatpush1.msra.mxu0 0.0
    %1981 = vmatprep.subr.mxu0 0.0
    %1982 = vmatpush1.msra.mxu0 0.0
    %1983 = vmatprep.subr.mxu0 0.0
    %1984 = vmatpush1.msra.mxu0 0.0
    %1985 = vmatprep.subr.mxu0 0.0
    %1986 = vmatpush1.msra.mxu0 0.0
    %1987 = vmatprep.subr.mxu0 0.0
    %1988 = vmatpush1.msra.mxu0 0.0
    %1989 = vmatprep.subr.mxu0 0.0
    %1990 = vmatpush1.msra.mxu0 0.0
    %1991 = vmatprep.subr.mxu0 0.0
    %1992 = vmatpush1.msra.mxu0 0.0
    %1993 = vmatprep.subr.mxu0 0.0
    %1994 = vmatpush1.msra.mxu0 0.0
    %1995 = vmatprep.subr.mxu0 0.0
    %1996 = vmatpush1.msra.mxu0 0.0
    %1997 = vmatprep.subr.mxu0 0.0
    %1998 = vmatpush1.msra.mxu0 0.0
    %1999 = vmatprep.subr.mxu0 0.0
    %2000 = vmatpush1.msra.mxu0 0.0
    %2001 = vmatprep.subr.mxu0 0.0
    %2002 = vmatpush1.msra.mxu0 0.0
    %2003 = vmatprep.subr.mxu0 0.0
    %2004 = vmatpush1.msra.mxu0 0.0
    %2005 = vmatprep.mubr.f32.mxu0 0.0
    %2006 = vmatmul.mubr.f32.gmra.mrb[0].mxu0 %v1721
    %v2007 = vpop.f32.mrb[0].mxu0
    %v2008 = vadd.f32 %v1938, %v2007
    %v2009 = vpop.f32.mrb[0].mxu0
    %2010 = vdwg.mxu0
    %v2011 = vadd.f32 %v2008, %v708
    %2012 = vset.pattern.permute.xlu0 11
    %2013 = vperm.xlu0 %2012, %v78
    %v2014 = vpop.permute.xlu0 %2013
    %v2016 = vmul.f32 %v2014, %v719
    %v2017 = vadd.f32 %v2011, %v2016
    %v2018 = vsel %vm723, %v2017, -inf
    %2019 = vmax.xlane.f32.xlu0 %v2018
    %v2020 = vpop.xlane.xlu0 %2019
    %v2021 = vsub.f32 %v2017, %v2020
    %v2022 = vmul.f32 %v2021, 1.442695
    %v2023 = vpow.pop %v2022
    %v2024 = vsel %vm723, %v2023, 0.0
    %2025 = vadd.xlane.f32.xlu0 %v2024
    %v2026 = vpop.xlane.xlu0 %2025
    %v2027 = vlog2.pop %v2026
    %v2028 = vmul.f32 %v2027, 0.6931472
    %vm2029 = vcmp.eq.f32.partialorder %v2017, %v2020
    %v2030 = vsel %vm2029, %v126, 5
    %v2031 = vsel %vm723, %v2030, 2147483647
    %v2032 = vand.u32 %v2031, 65535
    %v2033 = vshra.s32 %v2031, 16
    %v2034 = vcvt.s32.f32 %v2032
    %v2035 = vcvt.s32.f32 %v2033
    %2036 = vmin.xlane.f32.xlu0 %v2035
    %v2037 = vpop.xlane.xlu0 %2036
    %vm2038 = vcmp.eq.f32.partialorder %v2035, %v2037
    %v2039 = vsel %vm2038, %v2034, inf
    %2040 = vmin.xlane.f32.xlu0 %v2039
    %v2041 = vpop.xlane.xlu0 %2040
    %v2042 = vcvt.f32.s32 %v2041
    %v2043 = vcvt.f32.s32 %v2037
    %v2044 = vshll.u32 %v2043, 16
    %v2045 = vadd.s32 %v2044, %v2042
    %s2046 = scalar_lea.vmem %s15, 4
    %2047 = vst.msk [vmem:[%s2046] sm:$0x3] %vm559, %v2045
    %v2048 = vsub.f32 0.0, %v2028
    %s2049 = scalar_lea.vmem %s16, 4
    %2050 = vst.msk [vmem:[%s2049] sm:$0x3] %vm559, %v2048
    %2051 = vset.pattern.permute.xlu0 12
    %2052 = vperm.xlu0 %2051, %v78
    %v2053 = vpop.permute.xlu0 %2052
    %v2055 = vmul.f32 %v2053, %v719
    %v2056 = vadd.f32 %v2011, %v2055
    %v2057 = vsel %vm723, %v2056, -inf
    %2058 = vmax.xlane.f32.xlu0 %v2057
    %v2059 = vpop.xlane.xlu0 %2058
    %v2060 = vsub.f32 %v2056, %v2059
    %v2061 = vmul.f32 %v2060, 1.442695
    %v2062 = vpow.pop %v2061
    %v2063 = vsel %vm723, %v2062, 0.0
    %2064 = vadd.xlane.f32.xlu0 %v2063
    %v2065 = vpop.xlane.xlu0 %2064
    %v2066 = vlog2.pop %v2065
    %v2067 = vmul.f32 %v2066, 0.6931472
    %vm2068 = vcmp.eq.f32.partialorder %v2056, %v2059
    %v2069 = vsel %vm2068, %v126, 5
    %v2070 = vsel %vm723, %v2069, 2147483647
    %v2071 = vand.u32 %v2070, 65535
    %v2072 = vshra.s32 %v2070, 16
    %v2073 = vcvt.s32.f32 %v2071
    %v2074 = vcvt.s32.f32 %v2072
    %2075 = vmin.xlane.f32.xlu0 %v2074
    %v2076 = vpop.xlane.xlu0 %2075
    %vm2077 = vcmp.eq.f32.partialorder %v2074, %v2076
    %v2078 = vsel %vm2077, %v2073, inf
    %2079 = vmin.xlane.f32.xlu0 %v2078
    %v2080 = vpop.xlane.xlu0 %2079
    %v2081 = vcvt.f32.s32 %v2080
    %v2082 = vcvt.f32.s32 %v2076
    %v2083 = vshll.u32 %v2082, 16
    %v2084 = vadd.s32 %v2083, %v2081
    %s2085 = scalar_lea.vmem %s15, 16
    %2086 = vst.msk [vmem:[%s2085] sm:$0x3] %vm559, %v2084
    %v2087 = vsub.f32 0.0, %v2067
    %s2088 = scalar_lea.vmem %s16, 16
    %2089 = vst.msk [vmem:[%s2088] sm:$0x3] %vm559, %v2087
    %2090 = vset.pattern.permute.xlu0 13
    %2091 = vperm.xlu0 %2090, %v78
    %v2092 = vpop.permute.xlu0 %2091
    %v2094 = vmul.f32 %v2092, %v719
    %v2095 = vadd.f32 %v2011, %v2094
    %v2096 = vsel %vm723, %v2095, -inf
    %2097 = vmax.xlane.f32.xlu0 %v2096
    %v2098 = vpop.xlane.xlu0 %2097
    %v2099 = vsub.f32 %v2095, %v2098
    %v2100 = vmul.f32 %v2099, 1.442695
    %v2101 = vpow.pop %v2100
    %v2102 = vsel %vm723, %v2101, 0.0
    %2103 = vadd.xlane.f32.xlu0 %v2102
    %v2104 = vpop.xlane.xlu0 %2103
    %v2105 = vlog2.pop %v2104
    %v2106 = vmul.f32 %v2105, 0.6931472
    %vm2107 = vcmp.eq.f32.partialorder %v2095, %v2098
    %v2108 = vsel %vm2107, %v126, 5
    %v2109 = vsel %vm723, %v2108, 2147483647
    %v2110 = vand.u32 %v2109, 65535
    %v2111 = vshra.s32 %v2109, 16
    %v2112 = vcvt.s32.f32 %v2110
    %v2113 = vcvt.s32.f32 %v2111
    %2114 = vmin.xlane.f32.xlu0 %v2113
    %v2115 = vpop.xlane.xlu0 %2114
    %vm2116 = vcmp.eq.f32.partialorder %v2113, %v2115
    %v2117 = vsel %vm2116, %v2112, inf
    %2118 = vmin.xlane.f32.xlu0 %v2117
    %v2119 = vpop.xlane.xlu0 %2118
    %v2120 = vcvt.f32.s32 %v2119
    %v2121 = vcvt.f32.s32 %v2115
    %v2122 = vshll.u32 %v2121, 16
    %v2123 = vadd.s32 %v2122, %v2120
    %s2124 = scalar_lea.vmem %s15, 28
    %2125 = vst.msk [vmem:[%s2124] sm:$0x3] %vm559, %v2123
    %v2126 = vsub.f32 0.0, %v2106
    %s2127 = scalar_lea.vmem %s16, 28
    %2128 = vst.msk [vmem:[%s2127] sm:$0x3] %vm559, %v2126
    %v2130 = vsel %vm138, %v79, 0
    %2132 = vmatprep.subr.mxu0 %v84
    %2133 = vmatpush1.msra.mxu0 %v83
    %2134 = vmatprep.subr.mxu0 0.0
    %2135 = vmatpush1.msra.mxu0 0.0
    %2136 = vmatprep.subr.mxu0 0.0
    %2137 = vmatpush1.msra.mxu0 0.0
    %2138 = vmatprep.subr.mxu0 0.0
    %2139 = vmatpush1.msra.mxu0 0.0
    %2140 = vmatprep.subr.mxu0 0.0
    %2141 = vmatpush1.msra.mxu0 0.0
    %2142 = vmatprep.subr.mxu0 0.0
    %2143 = vmatpush1.msra.mxu0 0.0
    %2144 = vmatprep.subr.mxu0 0.0
    %2145 = vmatpush1.msra.mxu0 0.0
    %2146 = vmatprep.subr.mxu0 0.0
    %2147 = vmatpush1.msra.mxu0 0.0
    %2148 = vmatprep.subr.mxu0 0.0
    %2149 = vmatpush1.msra.mxu0 0.0
    %2150 = vmatprep.subr.mxu0 0.0
    %2151 = vmatpush1.msra.mxu0 0.0
    %2152 = vmatprep.subr.mxu0 0.0
    %2153 = vmatpush1.msra.mxu0 0.0
    %2154 = vmatprep.subr.mxu0 0.0
    %2155 = vmatpush1.msra.mxu0 0.0
    %2156 = vmatprep.subr.mxu0 0.0
    %2157 = vmatpush1.msra.mxu0 0.0
    %2158 = vmatprep.subr.mxu0 0.0
    %2159 = vmatpush1.msra.mxu0 0.0
    %2160 = vmatprep.subr.mxu0 0.0
    %2161 = vmatpush1.msra.mxu0 0.0
    %2162 = vmatprep.subr.mxu0 0.0
    %2163 = vmatpush1.msra.mxu0 0.0
    %2164 = vmatprep.subr.mxu0 0.0
    %2165 = vmatpush1.msra.mxu0 0.0
    %2166 = vmatprep.subr.mxu0 0.0
    %2167 = vmatpush1.msra.mxu0 0.0
    %2168 = vmatprep.subr.mxu0 0.0
    %2169 = vmatpush1.msra.mxu0 0.0
    %2170 = vmatprep.subr.mxu0 0.0
    %2171 = vmatpush1.msra.mxu0 0.0
    %2172 = vmatprep.subr.mxu0 0.0
    %2173 = vmatpush1.msra.mxu0 0.0
    %2174 = vmatprep.subr.mxu0 0.0
    %2175 = vmatpush1.msra.mxu0 0.0
    %2176 = vmatprep.subr.mxu0 0.0
    %2177 = vmatpush1.msra.mxu0 0.0
    %2178 = vmatprep.subr.mxu0 0.0
    %2179 = vmatpush1.msra.mxu0 0.0
    %2180 = vmatprep.subr.mxu0 0.0
    %2181 = vmatpush1.msra.mxu0 0.0
    %2182 = vmatprep.subr.mxu0 0.0
    %2183 = vmatpush1.msra.mxu0 0.0
    %2184 = vmatprep.subr.mxu0 0.0
    %2185 = vmatpush1.msra.mxu0 0.0
    %2186 = vmatprep.subr.mxu0 0.0
    %2187 = vmatpush1.msra.mxu0 0.0
    %2188 = vmatprep.subr.mxu0 0.0
    %2189 = vmatpush1.msra.mxu0 0.0
    %2190 = vmatprep.subr.mxu0 0.0
    %2191 = vmatpush1.msra.mxu0 0.0
    %2192 = vmatprep.subr.mxu0 0.0
    %2193 = vmatpush1.msra.mxu0 0.0
    %2194 = vmatprep.subr.mxu0 0.0
    %2195 = vmatpush1.msra.mxu0 0.0
    %2196 = vmatprep.mubr.f32.mxu0 0.0
    %2197 = vmatmul.mubr.f32.gmra.mrb[0].mxu0 %v2130
    %v2198 = vpop.f32.mrb[0].mxu0
    %v2199 = vadd.f32 %v131, %v2198
    %v2200 = vpop.f32.mrb[0].mxu0
    %v2201 = vadd.f32 %v135, %v2200
    %2202 = vdwg.mxu0
    %2203 = vmatprep.subr.mxu0 %v86
    %2204 = vmatpush1.msra.mxu0 %v85
    %2205 = vmatprep.subr.mxu0 %v88
    %2206 = vmatpush1.msra.mxu0 %v87
    %2207 = vmatprep.subr.mxu0 %v90
    %2208 = vmatpush1.msra.mxu0 %v89
    %2209 = vmatprep.subr.mxu0 %v92
    %2210 = vmatpush1.msra.mxu0 %v91
    %2211 = vmatprep.subr.mxu0 %v94
    %2212 = vmatpush1.msra.mxu0 %v93
    %2213 = vmatprep.subr.mxu0 %v96
    %2214 = vmatpush1.msra.mxu0 %v95
    %2215 = vmatprep.subr.mxu0 %v98
    %2216 = vmatpush1.msra.mxu0 %v97
    %2217 = vmatprep.subr.mxu0 %v100
    %2218 = vmatpush1.msra.mxu0 %v99
    %2219 = vmatprep.subr.mxu0 0.0
    %2220 = vmatpush1.msra.mxu0 0.0
    %2221 = vmatprep.subr.mxu0 0.0
    %2222 = vmatpush1.msra.mxu0 0.0
    %2223 = vmatprep.subr.mxu0 0.0
    %2224 = vmatpush1.msra.mxu0 0.0
    %2225 = vmatprep.subr.mxu0 0.0
    %2226 = vmatpush1.msra.mxu0 0.0
    %2227 = vmatprep.subr.mxu0 0.0
    %2228 = vmatpush1.msra.mxu0 0.0
    %2229 = vmatprep.subr.mxu0 0.0
    %2230 = vmatpush1.msra.mxu0 0.0
    %2231 = vmatprep.subr.mxu0 0.0
    %2232 = vmatpush1.msra.mxu0 0.0
    %2233 = vmatprep.subr.mxu0 0.0
    %2234 = vmatpush1.msra.mxu0 0.0
    %2235 = vmatprep.subr.mxu0 0.0
    %2236 = vmatpush1.msra.mxu0 0.0
    %2237 = vmatprep.subr.mxu0 0.0
    %2238 = vmatpush1.msra.mxu0 0.0
    %2239 = vmatprep.subr.mxu0 0.0
    %2240 = vmatpush1.msra.mxu0 0.0
    %2241 = vmatprep.subr.mxu0 0.0
    %2242 = vmatpush1.msra.mxu0 0.0
    %2243 = vmatprep.subr.mxu0 0.0
    %2244 = vmatpush1.msra.mxu0 0.0
    %2245 = vmatprep.subr.mxu0 0.0
    %2246 = vmatpush1.msra.mxu0 0.0
    %2247 = vmatprep.subr.mxu0 0.0
    %2248 = vmatpush1.msra.mxu0 0.0
    %2249 = vmatprep.subr.mxu0 0.0
    %2250 = vmatpush1.msra.mxu0 0.0
    %2251 = vmatprep.subr.mxu0 0.0
    %2252 = vmatpush1.msra.mxu0 0.0
    %2253 = vmatprep.subr.mxu0 0.0
    %2254 = vmatpush1.msra.mxu0 0.0
    %2255 = vmatprep.subr.mxu0 0.0
    %2256 = vmatpush1.msra.mxu0 0.0
    %2257 = vmatprep.subr.mxu0 0.0
    %2258 = vmatpush1.msra.mxu0 0.0
    %2259 = vmatprep.subr.mxu0 0.0
    %2260 = vmatpush1.msra.mxu0 0.0
    %2261 = vmatprep.subr.mxu0 0.0
    %2262 = vmatpush1.msra.mxu0 0.0
    %2263 = vmatprep.subr.mxu0 0.0
    %2264 = vmatpush1.msra.mxu0 0.0
    %2265 = vmatprep.subr.mxu0 0.0
    %2266 = vmatpush1.msra.mxu0 0.0
    %2267 = vmatprep.mubr.f32.mxu0 0.0
    %2268 = vmatmul.mubr.f32.gmra.mrb[0].mxu0 %v1721
    %v2269 = vpop.f32.mrb[0].mxu0
    %v2270 = vadd.f32 %v217, %v2269
    %v2271 = vpop.f32.mrb[0].mxu0
    %v2272 = vadd.f32 %v221, %v2271
    %2273 = vdwg.mxu0
    %v2274 = vadd.f32 %v2199, %v2270
    %v2275 = vxor.u32 %v2274, 2147483648
    %v2276 = vmul.f32 %v2275, 1.442695
    %v2277 = vpow.pop %v2276
    %v2278 = vadd.f32 %v2277, 1.0
    %v2279 = vrcp.pop %v2278
    %v2280 = vmul.f32 1.0, %v2279
    %v2281 = vmul.f32 %v2280, %v2272
    %v2282 = vadd.f32 %v2201, %v2281
    %v2283 = vtanh.pop %v2282
    %v2284 = vsub.f32 1.0, %v2280
    %2286 = vrot.lane.b32.xlu0 %v2283, 64
    %v2287 = vpop.permute.xlu0 %2286
    %v2289 = vmul.f32 %v2284, %v2287
    %v2290 = vmul.f32 %v2280, %v1643
    %v2291 = vadd.f32 %v2289, %v2290
    %2292 = vrot.lane.b32.xlu0 %v79, 120
    %v2293 = vpop.permute.xlu0 %2292
    %v2294 = vsel %vm322, %v2293, 0
    %2296 = vmatprep.subr.mxu0 0.0
    %2297 = vmatpush1.msra.mxu0 %v327
    %2298 = vmatprep.subr.mxu0 0.0
    %2299 = vmatpush1.msra.mxu0 0.0
    %2300 = vmatprep.subr.mxu0 0.0
    %2301 = vmatpush1.msra.mxu0 0.0
    %2302 = vmatprep.subr.mxu0 0.0
    %2303 = vmatpush1.msra.mxu0 0.0
    %2304 = vmatprep.subr.mxu0 0.0
    %2305 = vmatpush1.msra.mxu0 0.0
    %2306 = vmatprep.subr.mxu0 0.0
    %2307 = vmatpush1.msra.mxu0 0.0
    %2308 = vmatprep.subr.mxu0 0.0
    %2309 = vmatpush1.msra.mxu0 0.0
    %2310 = vmatprep.subr.mxu0 0.0
    %2311 = vmatpush1.msra.mxu0 0.0
    %2312 = vmatprep.subr.mxu0 0.0
    %2313 = vmatpush1.msra.mxu0 0.0
    %2314 = vmatprep.subr.mxu0 0.0
    %2315 = vmatpush1.msra.mxu0 0.0
    %2316 = vmatprep.subr.mxu0 0.0
    %2317 = vmatpush1.msra.mxu0 0.0
    %2318 = vmatprep.subr.mxu0 0.0
    %2319 = vmatpush1.msra.mxu0 0.0
    %2320 = vmatprep.subr.mxu0 0.0
    %2321 = vmatpush1.msra.mxu0 0.0
    %2322 = vmatprep.subr.mxu0 0.0
    %2323 = vmatpush1.msra.mxu0 0.0
    %2324 = vmatprep.subr.mxu0 0.0
    %2325 = vmatpush1.msra.mxu0 0.0
    %2326 = vmatprep.subr.mxu0 0.0
    %2327 = vmatpush1.msra.mxu0 0.0
    %2328 = vmatprep.subr.mxu0 0.0
    %2329 = vmatpush1.msra.mxu0 0.0
    %2330 = vmatprep.subr.mxu0 0.0
    %2331 = vmatpush1.msra.mxu0 0.0
    %2332 = vmatprep.subr.mxu0 0.0
    %2333 = vmatpush1.msra.mxu0 0.0
    %2334 = vmatprep.subr.mxu0 0.0
    %2335 = vmatpush1.msra.mxu0 0.0
    %2336 = vmatprep.subr.mxu0 0.0
    %2337 = vmatpush1.msra.mxu0 0.0
    %2338 = vmatprep.subr.mxu0 0.0
    %2339 = vmatpush1.msra.mxu0 0.0
    %2340 = vmatprep.subr.mxu0 0.0
    %2341 = vmatpush1.msra.mxu0 0.0
    %2342 = vmatprep.subr.mxu0 0.0
    %2343 = vmatpush1.msra.mxu0 0.0
    %2344 = vmatprep.subr.mxu0 0.0
    %2345 = vmatpush1.msra.mxu0 0.0
    %2346 = vmatprep.subr.mxu0 0.0
    %2347 = vmatpush1.msra.mxu0 0.0
    %2348 = vmatprep.subr.mxu0 0.0
    %2349 = vmatpush1.msra.mxu0 0.0
    %2350 = vmatprep.subr.mxu0 0.0
    %2351 = vmatpush1.msra.mxu0 0.0
    %2352 = vmatprep.subr.mxu0 0.0
    %2353 = vmatpush1.msra.mxu0 0.0
    %2354 = vmatprep.subr.mxu0 0.0
    %2355 = vmatpush1.msra.mxu0 0.0
    %2356 = vmatprep.subr.mxu0 0.0
    %2357 = vmatpush1.msra.mxu0 0.0
    %2358 = vmatprep.subr.mxu0 0.0
    %2359 = vmatpush1.msra.mxu0 0.0
    %2360 = vmatprep.mubr.f32.mxu0 0.0
    %2361 = vmatmul.mubr.f32.gmra.mrb[0].mxu0 %v2294
    %v2362 = vpop.f32.mrb[0].mxu0
    %v2363 = vadd.f32 0.0, %v2362
    %v2364 = vpop.f32.mrb[0].mxu0
    %2365 = vdwg.mxu0
    %2367 = vrot.lane.b32.xlu0 %v2291, 64
    %v2368 = vpop.permute.xlu0 %2367
    %v2369 = vsel %vm224, %v2368, 0
    %2371 = vmatprep.subr.mxu0 0.0
    %2372 = vmatpush1.msra.mxu0 %v114
    %2373 = vmatprep.subr.mxu0 0.0
    %2374 = vmatpush1.msra.mxu0 %v115
    %2375 = vmatprep.subr.mxu0 0.0
    %2376 = vmatpush1.msra.mxu0 %v116
    %2377 = vmatprep.subr.mxu0 0.0
    %2378 = vmatpush1.msra.mxu0 %v117
    %2379 = vmatprep.subr.mxu0 0.0
    %2380 = vmatpush1.msra.mxu0 %v118
    %2381 = vmatprep.subr.mxu0 0.0
    %2382 = vmatpush1.msra.mxu0 %v119
    %2383 = vmatprep.subr.mxu0 0.0
    %2384 = vmatpush1.msra.mxu0 %v120
    %2385 = vmatprep.subr.mxu0 0.0
    %2386 = vmatpush1.msra.mxu0 %v121
    %2387 = vmatprep.subr.mxu0 0.0
    %2388 = vmatpush1.msra.mxu0 0.0
    %2389 = vmatprep.subr.mxu0 0.0
    %2390 = vmatpush1.msra.mxu0 0.0
    %2391 = vmatprep.subr.mxu0 0.0
    %2392 = vmatpush1.msra.mxu0 0.0
    %2393 = vmatprep.subr.mxu0 0.0
    %2394 = vmatpush1.msra.mxu0 0.0
    %2395 = vmatprep.subr.mxu0 0.0
    %2396 = vmatpush1.msra.mxu0 0.0
    %2397 = vmatprep.subr.mxu0 0.0
    %2398 = vmatpush1.msra.mxu0 0.0
    %2399 = vmatprep.subr.mxu0 0.0
    %2400 = vmatpush1.msra.mxu0 0.0
    %2401 = vmatprep.subr.mxu0 0.0
    %2402 = vmatpush1.msra.mxu0 0.0
    %2403 = vmatprep.subr.mxu0 0.0
    %2404 = vmatpush1.msra.mxu0 0.0
    %2405 = vmatprep.subr.mxu0 0.0
    %2406 = vmatpush1.msra.mxu0 0.0
    %2407 = vmatprep.subr.mxu0 0.0
    %2408 = vmatpush1.msra.mxu0 0.0
    %2409 = vmatprep.subr.mxu0 0.0
    %2410 = vmatpush1.msra.mxu0 0.0
    %2411 = vmatprep.subr.mxu0 0.0
    %2412 = vmatpush1.msra.mxu0 0.0
    %2413 = vmatprep.subr.mxu0 0.0
    %2414 = vmatpush1.msra.mxu0 0.0
    %2415 = vmatprep.subr.mxu0 0.0
    %2416 = vmatpush1.msra.mxu0 0.0
    %2417 = vmatprep.subr.mxu0 0.0
    %2418 = vmatpush1.msra.mxu0 0.0
    %2419 = vmatprep.subr.mxu0 0.0
    %2420 = vmatpush1.msra.mxu0 0.0
    %2421 = vmatprep.subr.mxu0 0.0
    %2422 = vmatpush1.msra.mxu0 0.0
    %2423 = vmatprep.subr.mxu0 0.0
    %2424 = vmatpush1.msra.mxu0 0.0
    %2425 = vmatprep.subr.mxu0 0.0
    %2426 = vmatpush1.msra.mxu0 0.0
    %2427 = vmatprep.subr.mxu0 0.0
    %2428 = vmatpush1.msra.mxu0 0.0
    %2429 = vmatprep.subr.mxu0 0.0
    %2430 = vmatpush1.msra.mxu0 0.0
    %2431 = vmatprep.subr.mxu0 0.0
    %2432 = vmatpush1.msra.mxu0 0.0
    %2433 = vmatprep.subr.mxu0 0.0
    %2434 = vmatpush1.msra.mxu0 0.0
    %2435 = vmatprep.mubr.f32.mxu0 0.0
    %2436 = vmatmul.mubr.f32.gmra.mrb[0].mxu0 %v2369
    %v2437 = vpop.f32.mrb[0].mxu0
    %v2438 = vadd.f32 %v2363, %v2437
    %v2439 = vpop.f32.mrb[0].mxu0
    %2440 = vdwg.mxu0
    %2441 = vrot.lane.b32.xlu0 %v79, 117
    %v2442 = vpop.permute.xlu0 %2441
    %v2443 = vsel %vm322, %v2442, 0
    %2445 = vmatprep.subr.mxu0 0.0
    %2446 = vmatpush1.msra.mxu0 %v479
    %2447 = vmatprep.subr.mxu0 0.0
    %2448 = vmatpush1.msra.mxu0 0.0
    %2449 = vmatprep.subr.mxu0 0.0
    %2450 = vmatpush1.msra.mxu0 0.0
    %2451 = vmatprep.subr.mxu0 0.0
    %2452 = vmatpush1.msra.mxu0 0.0
    %2453 = vmatprep.subr.mxu0 0.0
    %2454 = vmatpush1.msra.mxu0 0.0
    %2455 = vmatprep.subr.mxu0 0.0
    %2456 = vmatpush1.msra.mxu0 0.0
    %2457 = vmatprep.subr.mxu0 0.0
    %2458 = vmatpush1.msra.mxu0 0.0
    %2459 = vmatprep.subr.mxu0 0.0
    %2460 = vmatpush1.msra.mxu0 0.0
    %2461 = vmatprep.subr.mxu0 0.0
    %2462 = vmatpush1.msra.mxu0 0.0
    %2463 = vmatprep.subr.mxu0 0.0
    %2464 = vmatpush1.msra.mxu0 0.0
    %2465 = vmatprep.subr.mxu0 0.0
    %2466 = vmatpush1.msra.mxu0 0.0
    %2467 = vmatprep.subr.mxu0 0.0
    %2468 = vmatpush1.msra.mxu0 0.0
    %2469 = vmatprep.subr.mxu0 0.0
    %2470 = vmatpush1.msra.mxu0 0.0
    %2471 = vmatprep.subr.mxu0 0.0
    %2472 = vmatpush1.msra.mxu0 0.0
    %2473 = vmatprep.subr.mxu0 0.0
    %2474 = vmatpush1.msra.mxu0 0.0
    %2475 = vmatprep.subr.mxu0 0.0
    %2476 = vmatpush1.msra.mxu0 0.0
    %2477 = vmatprep.subr.mxu0 0.0
    %2478 = vmatpush1.msra.mxu0 0.0
    %2479 = vmatprep.subr.mxu0 0.0
    %2480 = vmatpush1.msra.mxu0 0.0
    %2481 = vmatprep.subr.mxu0 0.0
    %2482 = vmatpush1.msra.mxu0 0.0
    %2483 = vmatprep.subr.mxu0 0.0
    %2484 = vmatpush1.msra.mxu0 0.0
    %2485 = vmatprep.subr.mxu0 0.0
    %2486 = vmatpush1.msra.mxu0 0.0
    %2487 = vmatprep.subr.mxu0 0.0
    %2488 = vmatpush1.msra.mxu0 0.0
    %2489 = vmatprep.subr.mxu0 0.0
    %2490 = vmatpush1.msra.mxu0 0.0
    %2491 = vmatprep.subr.mxu0 0.0
    %2492 = vmatpush1.msra.mxu0 0.0
    %2493 = vmatprep.subr.mxu0 0.0
    %2494 = vmatpush1.msra.mxu0 0.0
    %2495 = vmatprep.subr.mxu0 0.0
    %2496 = vmatpush1.msra.mxu0 0.0
    %2497 = vmatprep.subr.mxu0 0.0
    %2498 = vmatpush1.msra.mxu0 0.0
    %2499 = vmatprep.subr.mxu0 0.0
    %2500 = vmatpush1.msra.mxu0 0.0
    %2501 = vmatprep.subr.mxu0 0.0
    %2502 = vmatpush1.msra.mxu0 0.0
    %2503 = vmatprep.subr.mxu0 0.0
    %2504 = vmatpush1.msra.mxu0 0.0
    %2505 = vmatprep.subr.mxu0 0.0
    %2506 = vmatpush1.msra.mxu0 0.0
    %2507 = vmatprep.subr.mxu0 0.0
    %2508 = vmatpush1.msra.mxu0 0.0
    %2509 = vmatprep.mubr.f32.mxu0 0.0
    %2510 = vmatmul.mubr.f32.gmra.mrb[0].mxu0 %v2443
    %v2511 = vpop.f32.mrb[0].mxu0
    %v2512 = vadd.f32 0.0, %v2511
    %v2513 = vpop.f32.mrb[0].mxu0
    %2514 = vdwg.mxu0
    %v2515 = vadd.f32 %v2438, %v2512
    %v2516 = vadd.f32 %v2515, %v556
    %s2517 = scalar_lea.vmem %s14, 6
    %2518 = vst.msk [vmem:[%s2517] sm:$0x3] %vm559, %v2516
    %2519 = vmatprep.subr.mxu0 0.0
    %2520 = vmatpush1.msra.mxu0 %v562
    %2521 = vmatprep.subr.mxu0 0.0
    %2522 = vmatpush1.msra.mxu0 0.0
    %2523 = vmatprep.subr.mxu0 0.0
    %2524 = vmatpush1.msra.mxu0 0.0
    %2525 = vmatprep.subr.mxu0 0.0
    %2526 = vmatpush1.msra.mxu0 0.0
    %2527 = vmatprep.subr.mxu0 0.0
    %2528 = vmatpush1.msra.mxu0 0.0
    %2529 = vmatprep.subr.mxu0 0.0
    %2530 = vmatpush1.msra.mxu0 0.0
    %2531 = vmatprep.subr.mxu0 0.0
    %2532 = vmatpush1.msra.mxu0 0.0
    %2533 = vmatprep.subr.mxu0 0.0
    %2534 = vmatpush1.msra.mxu0 0.0
    %2535 = vmatprep.subr.mxu0 0.0
    %2536 = vmatpush1.msra.mxu0 0.0
    %2537 = vmatprep.subr.mxu0 0.0
    %2538 = vmatpush1.msra.mxu0 0.0
    %2539 = vmatprep.subr.mxu0 0.0
    %2540 = vmatpush1.msra.mxu0 0.0
    %2541 = vmatprep.subr.mxu0 0.0
    %2542 = vmatpush1.msra.mxu0 0.0
    %2543 = vmatprep.subr.mxu0 0.0
    %2544 = vmatpush1.msra.mxu0 0.0
    %2545 = vmatprep.subr.mxu0 0.0
    %2546 = vmatpush1.msra.mxu0 0.0
    %2547 = vmatprep.subr.mxu0 0.0
    %2548 = vmatpush1.msra.mxu0 0.0
    %2549 = vmatprep.subr.mxu0 0.0
    %2550 = vmatpush1.msra.mxu0 0.0
    %2551 = vmatprep.subr.mxu0 0.0
    %2552 = vmatpush1.msra.mxu0 0.0
    %2553 = vmatprep.subr.mxu0 0.0
    %2554 = vmatpush1.msra.mxu0 0.0
    %2555 = vmatprep.subr.mxu0 0.0
    %2556 = vmatpush1.msra.mxu0 0.0
    %2557 = vmatprep.subr.mxu0 0.0
    %2558 = vmatpush1.msra.mxu0 0.0
    %2559 = vmatprep.subr.mxu0 0.0
    %2560 = vmatpush1.msra.mxu0 0.0
    %2561 = vmatprep.subr.mxu0 0.0
    %2562 = vmatpush1.msra.mxu0 0.0
    %2563 = vmatprep.subr.mxu0 0.0
    %2564 = vmatpush1.msra.mxu0 0.0
    %2565 = vmatprep.subr.mxu0 0.0
    %2566 = vmatpush1.msra.mxu0 0.0
    %2567 = vmatprep.subr.mxu0 0.0
    %2568 = vmatpush1.msra.mxu0 0.0
    %2569 = vmatprep.subr.mxu0 0.0
    %2570 = vmatpush1.msra.mxu0 0.0
    %2571 = vmatprep.subr.mxu0 0.0
    %2572 = vmatpush1.msra.mxu0 0.0
    %2573 = vmatprep.subr.mxu0 0.0
    %2574 = vmatpush1.msra.mxu0 0.0
    %2575 = vmatprep.subr.mxu0 0.0
    %2576 = vmatpush1.msra.mxu0 0.0
    %2577 = vmatprep.subr.mxu0 0.0
    %2578 = vmatpush1.msra.mxu0 0.0
    %2579 = vmatprep.subr.mxu0 0.0
    %2580 = vmatpush1.msra.mxu0 0.0
    %2581 = vmatprep.subr.mxu0 0.0
    %2582 = vmatpush1.msra.mxu0 0.0
    %2583 = vmatprep.mubr.f32.mxu0 0.0
    %2584 = vmatmul.mubr.f32.gmra.mrb[0].mxu0 %v2294
    %v2585 = vpop.f32.mrb[0].mxu0
    %v2586 = vadd.f32 0.0, %v2585
    %v2587 = vpop.f32.mrb[0].mxu0
    %2588 = vdwg.mxu0
    %2589 = vmatprep.subr.mxu0 0.0
    %2590 = vmatpush1.msra.mxu0 %v103
    %2591 = vmatprep.subr.mxu0 0.0
    %2592 = vmatpush1.msra.mxu0 %v104
    %2593 = vmatprep.subr.mxu0 0.0
    %2594 = vmatpush1.msra.mxu0 %v105
    %2595 = vmatprep.subr.mxu0 0.0
    %2596 = vmatpush1.msra.mxu0 %v106
    %2597 = vmatprep.subr.mxu0 0.0
    %2598 = vmatpush1.msra.mxu0 %v107
    %2599 = vmatprep.subr.mxu0 0.0
    %2600 = vmatpush1.msra.mxu0 %v108
    %2601 = vmatprep.subr.mxu0 0.0
    %2602 = vmatpush1.msra.mxu0 %v109
    %2603 = vmatprep.subr.mxu0 0.0
    %2604 = vmatpush1.msra.mxu0 %v110
    %2605 = vmatprep.subr.mxu0 0.0
    %2606 = vmatpush1.msra.mxu0 0.0
    %2607 = vmatprep.subr.mxu0 0.0
    %2608 = vmatpush1.msra.mxu0 0.0
    %2609 = vmatprep.subr.mxu0 0.0
    %2610 = vmatpush1.msra.mxu0 0.0
    %2611 = vmatprep.subr.mxu0 0.0
    %2612 = vmatpush1.msra.mxu0 0.0
    %2613 = vmatprep.subr.mxu0 0.0
    %2614 = vmatpush1.msra.mxu0 0.0
    %2615 = vmatprep.subr.mxu0 0.0
    %2616 = vmatpush1.msra.mxu0 0.0
    %2617 = vmatprep.subr.mxu0 0.0
    %2618 = vmatpush1.msra.mxu0 0.0
    %2619 = vmatprep.subr.mxu0 0.0
    %2620 = vmatpush1.msra.mxu0 0.0
    %2621 = vmatprep.subr.mxu0 0.0
    %2622 = vmatpush1.msra.mxu0 0.0
    %2623 = vmatprep.subr.mxu0 0.0
    %2624 = vmatpush1.msra.mxu0 0.0
    %2625 = vmatprep.subr.mxu0 0.0
    %2626 = vmatpush1.msra.mxu0 0.0
    %2627 = vmatprep.subr.mxu0 0.0
    %2628 = vmatpush1.msra.mxu0 0.0
    %2629 = vmatprep.subr.mxu0 0.0
    %2630 = vmatpush1.msra.mxu0 0.0
    %2631 = vmatprep.subr.mxu0 0.0
    %2632 = vmatpush1.msra.mxu0 0.0
    %2633 = vmatprep.subr.mxu0 0.0
    %2634 = vmatpush1.msra.mxu0 0.0
    %2635 = vmatprep.subr.mxu0 0.0
    %2636 = vmatpush1.msra.mxu0 0.0
    %2637 = vmatprep.subr.mxu0 0.0
    %2638 = vmatpush1.msra.mxu0 0.0
    %2639 = vmatprep.subr.mxu0 0.0
    %2640 = vmatpush1.msra.mxu0 0.0
    %2641 = vmatprep.subr.mxu0 0.0
    %2642 = vmatpush1.msra.mxu0 0.0
    %2643 = vmatprep.subr.mxu0 0.0
    %2644 = vmatpush1.msra.mxu0 0.0
    %2645 = vmatprep.subr.mxu0 0.0
    %2646 = vmatpush1.msra.mxu0 0.0
    %2647 = vmatprep.subr.mxu0 0.0
    %2648 = vmatpush1.msra.mxu0 0.0
    %2649 = vmatprep.subr.mxu0 0.0
    %2650 = vmatpush1.msra.mxu0 0.0
    %2651 = vmatprep.subr.mxu0 0.0
    %2652 = vmatpush1.msra.mxu0 0.0
    %2653 = vmatprep.mubr.f32.mxu0 0.0
    %2654 = vmatmul.mubr.f32.gmra.mrb[0].mxu0 %v2369
    %v2655 = vpop.f32.mrb[0].mxu0
    %v2656 = vadd.f32 %v2586, %v2655
    %v2657 = vpop.f32.mrb[0].mxu0
    %2658 = vdwg.mxu0
    %v2659 = vadd.f32 %v2656, %v708
    %2660 = vset.pattern.permute.xlu0 11
    %2661 = vperm.xlu0 %2660, %v79
    %v2662 = vpop.permute.xlu0 %2661
    %v2664 = vmul.f32 %v2662, %v719
    %v2665 = vadd.f32 %v2659, %v2664
    %v2666 = vsel %vm723, %v2665, -inf
    %2667 = vmax.xlane.f32.xlu0 %v2666
    %v2668 = vpop.xlane.xlu0 %2667
    %v2669 = vsub.f32 %v2665, %v2668
    %v2670 = vmul.f32 %v2669, 1.442695
    %v2671 = vpow.pop %v2670
    %v2672 = vsel %vm723, %v2671, 0.0
    %2673 = vadd.xlane.f32.xlu0 %v2672
    %v2674 = vpop.xlane.xlu0 %2673
    %v2675 = vlog2.pop %v2674
    %v2676 = vmul.f32 %v2675, 0.6931472
    %vm2677 = vcmp.eq.f32.partialorder %v2665, %v2668
    %v2678 = vsel %vm2677, %v126, 5
    %v2679 = vsel %vm723, %v2678, 2147483647
    %v2680 = vand.u32 %v2679, 65535
    %v2681 = vshra.s32 %v2679, 16
    %v2682 = vcvt.s32.f32 %v2680
    %v2683 = vcvt.s32.f32 %v2681
    %2684 = vmin.xlane.f32.xlu0 %v2683
    %v2685 = vpop.xlane.xlu0 %2684
    %vm2686 = vcmp.eq.f32.partialorder %v2683, %v2685
    %v2687 = vsel %vm2686, %v2682, inf
    %2688 = vmin.xlane.f32.xlu0 %v2687
    %v2689 = vpop.xlane.xlu0 %2688
    %v2690 = vcvt.f32.s32 %v2689
    %v2691 = vcvt.f32.s32 %v2685
    %v2692 = vshll.u32 %v2691, 16
    %v2693 = vadd.s32 %v2692, %v2690
    %s2694 = scalar_lea.vmem %s15, 6
    %2695 = vst.msk [vmem:[%s2694] sm:$0x3] %vm559, %v2693
    %v2696 = vsub.f32 0.0, %v2676
    %s2697 = scalar_lea.vmem %s16, 6
    %2698 = vst.msk [vmem:[%s2697] sm:$0x3] %vm559, %v2696
    %2699 = vset.pattern.permute.xlu0 12
    %2700 = vperm.xlu0 %2699, %v79
    %v2701 = vpop.permute.xlu0 %2700
    %v2703 = vmul.f32 %v2701, %v719
    %v2704 = vadd.f32 %v2659, %v2703
    %v2705 = vsel %vm723, %v2704, -inf
    %2706 = vmax.xlane.f32.xlu0 %v2705
    %v2707 = vpop.xlane.xlu0 %2706
    %v2708 = vsub.f32 %v2704, %v2707
    %v2709 = vmul.f32 %v2708, 1.442695
    %v2710 = vpow.pop %v2709
    %v2711 = vsel %vm723, %v2710, 0.0
    %2712 = vadd.xlane.f32.xlu0 %v2711
    %v2713 = vpop.xlane.xlu0 %2712
    %v2714 = vlog2.pop %v2713
    %v2715 = vmul.f32 %v2714, 0.6931472
    %vm2716 = vcmp.eq.f32.partialorder %v2704, %v2707
    %v2717 = vsel %vm2716, %v126, 5
    %v2718 = vsel %vm723, %v2717, 2147483647
    %v2719 = vand.u32 %v2718, 65535
    %v2720 = vshra.s32 %v2718, 16
    %v2721 = vcvt.s32.f32 %v2719
    %v2722 = vcvt.s32.f32 %v2720
    %2723 = vmin.xlane.f32.xlu0 %v2722
    %v2724 = vpop.xlane.xlu0 %2723
    %vm2725 = vcmp.eq.f32.partialorder %v2722, %v2724
    %v2726 = vsel %vm2725, %v2721, inf
    %2727 = vmin.xlane.f32.xlu0 %v2726
    %v2728 = vpop.xlane.xlu0 %2727
    %v2729 = vcvt.f32.s32 %v2728
    %v2730 = vcvt.f32.s32 %v2724
    %v2731 = vshll.u32 %v2730, 16
    %v2732 = vadd.s32 %v2731, %v2729
    %s2733 = scalar_lea.vmem %s15, 18
    %2734 = vst.msk [vmem:[%s2733] sm:$0x3] %vm559, %v2732
    %v2735 = vsub.f32 0.0, %v2715
    %s2736 = scalar_lea.vmem %s16, 18
    %2737 = vst.msk [vmem:[%s2736] sm:$0x3] %vm559, %v2735
    %2738 = vset.pattern.permute.xlu0 13
    %2739 = vperm.xlu0 %2738, %v79
    %v2740 = vpop.permute.xlu0 %2739
    %v2742 = vmul.f32 %v2740, %v719
    %v2743 = vadd.f32 %v2659, %v2742
    %v2744 = vsel %vm723, %v2743, -inf
    %2745 = vmax.xlane.f32.xlu0 %v2744
    %v2746 = vpop.xlane.xlu0 %2745
    %v2747 = vsub.f32 %v2743, %v2746
    %v2748 = vmul.f32 %v2747, 1.442695
    %v2749 = vpow.pop %v2748
    %v2750 = vsel %vm723, %v2749, 0.0
    %2751 = vadd.xlane.f32.xlu0 %v2750
    %v2752 = vpop.xlane.xlu0 %2751
    %v2753 = vlog2.pop %v2752
    %v2754 = vmul.f32 %v2753, 0.6931472
    %vm2755 = vcmp.eq.f32.partialorder %v2743, %v2746
    %v2756 = vsel %vm2755, %v126, 5
    %v2757 = vsel %vm723, %v2756, 2147483647
    %v2758 = vand.u32 %v2757, 65535
    %v2759 = vshra.s32 %v2757, 16
    %v2760 = vcvt.s32.f32 %v2758
    %v2761 = vcvt.s32.f32 %v2759
    %2762 = vmin.xlane.f32.xlu0 %v2761
    %v2763 = vpop.xlane.xlu0 %2762
    %vm2764 = vcmp.eq.f32.partialorder %v2761, %v2763
    %v2765 = vsel %vm2764, %v2760, inf
    %2766 = vmin.xlane.f32.xlu0 %v2765
    %v2767 = vpop.xlane.xlu0 %2766
    %v2768 = vcvt.f32.s32 %v2767
    %v2769 = vcvt.f32.s32 %v2763
    %v2770 = vshll.u32 %v2769, 16
    %v2771 = vadd.s32 %v2770, %v2768
    %s2772 = scalar_lea.vmem %s15, 30
    %2773 = vst.msk [vmem:[%s2772] sm:$0x3] %vm559, %v2771
    %v2774 = vsub.f32 0.0, %v2754
    %s2775 = scalar_lea.vmem %s16, 30
    %2776 = vst.msk [vmem:[%s2775] sm:$0x3] %vm559, %v2774
    %v2778 = vsel %vm138, %v80, 0
    %2780 = vmatprep.subr.mxu0 %v84
    %2781 = vmatpush1.msra.mxu0 %v83
    %2782 = vmatprep.subr.mxu0 0.0
    %2783 = vmatpush1.msra.mxu0 0.0
    %2784 = vmatprep.subr.mxu0 0.0
    %2785 = vmatpush1.msra.mxu0 0.0
    %2786 = vmatprep.subr.mxu0 0.0
    %2787 = vmatpush1.msra.mxu0 0.0
    %2788 = vmatprep.subr.mxu0 0.0
    %2789 = vmatpush1.msra.mxu0 0.0
    %2790 = vmatprep.subr.mxu0 0.0
    %2791 = vmatpush1.msra.mxu0 0.0
    %2792 = vmatprep.subr.mxu0 0.0
    %2793 = vmatpush1.msra.mxu0 0.0
    %2794 = vmatprep.subr.mxu0 0.0
    %2795 = vmatpush1.msra.mxu0 0.0
    %2796 = vmatprep.subr.mxu0 0.0
    %2797 = vmatpush1.msra.mxu0 0.0
    %2798 = vmatprep.subr.mxu0 0.0
    %2799 = vmatpush1.msra.mxu0 0.0
    %2800 = vmatprep.subr.mxu0 0.0
    %2801 = vmatpush1.msra.mxu0 0.0
    %2802 = vmatprep.subr.mxu0 0.0
    %2803 = vmatpush1.msra.mxu0 0.0
    %2804 = vmatprep.subr.mxu0 0.0
    %2805 = vmatpush1.msra.mxu0 0.0
    %2806 = vmatprep.subr.mxu0 0.0
    %2807 = vmatpush1.msra.mxu0 0.0
    %2808 = vmatprep.subr.mxu0 0.0
    %2809 = vmatpush1.msra.mxu0 0.0
    %2810 = vmatprep.subr.mxu0 0.0
    %2811 = vmatpush1.msra.mxu0 0.0
    %2812 = vmatprep.subr.mxu0 0.0
    %2813 = vmatpush1.msra.mxu0 0.0
    %2814 = vmatprep.subr.mxu0 0.0
    %2815 = vmatpush1.msra.mxu0 0.0
    %2816 = vmatprep.subr.mxu0 0.0
    %2817 = vmatpush1.msra.mxu0 0.0
    %2818 = vmatprep.subr.mxu0 0.0
    %2819 = vmatpush1.msra.mxu0 0.0
    %2820 = vmatprep.subr.mxu0 0.0
    %2821 = vmatpush1.msra.mxu0 0.0
    %2822 = vmatprep.subr.mxu0 0.0
    %2823 = vmatpush1.msra.mxu0 0.0
    %2824 = vmatprep.subr.mxu0 0.0
    %2825 = vmatpush1.msra.mxu0 0.0
    %2826 = vmatprep.subr.mxu0 0.0
    %2827 = vmatpush1.msra.mxu0 0.0
    %2828 = vmatprep.subr.mxu0 0.0
    %2829 = vmatpush1.msra.mxu0 0.0
    %2830 = vmatprep.subr.mxu0 0.0
    %2831 = vmatpush1.msra.mxu0 0.0
    %2832 = vmatprep.subr.mxu0 0.0
    %2833 = vmatpush1.msra.mxu0 0.0
    %2834 = vmatprep.subr.mxu0 0.0
    %2835 = vmatpush1.msra.mxu0 0.0
    %2836 = vmatprep.subr.mxu0 0.0
    %2837 = vmatpush1.msra.mxu0 0.0
    %2838 = vmatprep.subr.mxu0 0.0
    %2839 = vmatpush1.msra.mxu0 0.0
    %2840 = vmatprep.subr.mxu0 0.0
    %2841 = vmatpush1.msra.mxu0 0.0
    %2842 = vmatprep.subr.mxu0 0.0
    %2843 = vmatpush1.msra.mxu0 0.0
    %2844 = vmatprep.mubr.f32.mxu0 0.0
    %2845 = vmatmul.mubr.f32.gmra.mrb[0].mxu0 %v2778
    %v2846 = vpop.f32.mrb[0].mxu0
    %v2847 = vadd.f32 %v131, %v2846
    %v2848 = vpop.f32.mrb[0].mxu0
    %v2849 = vadd.f32 %v135, %v2848
    %2850 = vdwg.mxu0
    %2851 = vmatprep.subr.mxu0 %v86
    %2852 = vmatpush1.msra.mxu0 %v85
    %2853 = vmatprep.subr.mxu0 %v88
    %2854 = vmatpush1.msra.mxu0 %v87
    %2855 = vmatprep.subr.mxu0 %v90
    %2856 = vmatpush1.msra.mxu0 %v89
    %2857 = vmatprep.subr.mxu0 %v92
    %2858 = vmatpush1.msra.mxu0 %v91
    %2859 = vmatprep.subr.mxu0 %v94
    %2860 = vmatpush1.msra.mxu0 %v93
    %2861 = vmatprep.subr.mxu0 %v96
    %2862 = vmatpush1.msra.mxu0 %v95
    %2863 = vmatprep.subr.mxu0 %v98
    %2864 = vmatpush1.msra.mxu0 %v97
    %2865 = vmatprep.subr.mxu0 %v100
    %2866 = vmatpush1.msra.mxu0 %v99
    %2867 = vmatprep.subr.mxu0 0.0
    %2868 = vmatpush1.msra.mxu0 0.0
    %2869 = vmatprep.subr.mxu0 0.0
    %2870 = vmatpush1.msra.mxu0 0.0
    %2871 = vmatprep.subr.mxu0 0.0
    %2872 = vmatpush1.msra.mxu0 0.0
    %2873 = vmatprep.subr.mxu0 0.0
    %2874 = vmatpush1.msra.mxu0 0.0
    %2875 = vmatprep.subr.mxu0 0.0
    %2876 = vmatpush1.msra.mxu0 0.0
    %2877 = vmatprep.subr.mxu0 0.0
    %2878 = vmatpush1.msra.mxu0 0.0
    %2879 = vmatprep.subr.mxu0 0.0
    %2880 = vmatpush1.msra.mxu0 0.0
    %2881 = vmatprep.subr.mxu0 0.0
    %2882 = vmatpush1.msra.mxu0 0.0
    %2883 = vmatprep.subr.mxu0 0.0
    %2884 = vmatpush1.msra.mxu0 0.0
    %2885 = vmatprep.subr.mxu0 0.0
    %2886 = vmatpush1.msra.mxu0 0.0
    %2887 = vmatprep.subr.mxu0 0.0
    %2888 = vmatpush1.msra.mxu0 0.0
    %2889 = vmatprep.subr.mxu0 0.0
    %2890 = vmatpush1.msra.mxu0 0.0
    %2891 = vmatprep.subr.mxu0 0.0
    %2892 = vmatpush1.msra.mxu0 0.0
    %2893 = vmatprep.subr.mxu0 0.0
    %2894 = vmatpush1.msra.mxu0 0.0
    %2895 = vmatprep.subr.mxu0 0.0
    %2896 = vmatpush1.msra.mxu0 0.0
    %2897 = vmatprep.subr.mxu0 0.0
    %2898 = vmatpush1.msra.mxu0 0.0
    %2899 = vmatprep.subr.mxu0 0.0
    %2900 = vmatpush1.msra.mxu0 0.0
    %2901 = vmatprep.subr.mxu0 0.0
    %2902 = vmatpush1.msra.mxu0 0.0
    %2903 = vmatprep.subr.mxu0 0.0
    %2904 = vmatpush1.msra.mxu0 0.0
    %2905 = vmatprep.subr.mxu0 0.0
    %2906 = vmatpush1.msra.mxu0 0.0
    %2907 = vmatprep.subr.mxu0 0.0
    %2908 = vmatpush1.msra.mxu0 0.0
    %2909 = vmatprep.subr.mxu0 0.0
    %2910 = vmatpush1.msra.mxu0 0.0
    %2911 = vmatprep.subr.mxu0 0.0
    %2912 = vmatpush1.msra.mxu0 0.0
    %2913 = vmatprep.subr.mxu0 0.0
    %2914 = vmatpush1.msra.mxu0 0.0
    %2915 = vmatprep.mubr.f32.mxu0 0.0
    %2916 = vmatmul.mubr.f32.gmra.mrb[0].mxu0 %v2369
    %v2917 = vpop.f32.mrb[0].mxu0
    %v2918 = vadd.f32 %v217, %v2917
    %v2919 = vpop.f32.mrb[0].mxu0
    %v2920 = vadd.f32 %v221, %v2919
    %2921 = vdwg.mxu0
    %v2922 = vadd.f32 %v2847, %v2918
    %v2923 = vxor.u32 %v2922, 2147483648
    %v2924 = vmul.f32 %v2923, 1.442695
    %v2925 = vpow.pop %v2924
    %v2926 = vadd.f32 %v2925, 1.0
    %v2927 = vrcp.pop %v2926
    %v2928 = vmul.f32 1.0, %v2927
    %v2929 = vmul.f32 %v2928, %v2920
    %v2930 = vadd.f32 %v2849, %v2929
    %v2931 = vtanh.pop %v2930
    %v2932 = vsub.f32 1.0, %v2928
    %2934 = vrot.lane.b32.xlu0 %v2931, 64
    %v2935 = vpop.permute.xlu0 %2934
    %v2937 = vmul.f32 %v2932, %v2935
    %v2938 = vmul.f32 %v2928, %v2291
    %v2939 = vadd.f32 %v2937, %v2938
    %2940 = vrot.lane.b32.xlu0 %v80, 120
    %v2941 = vpop.permute.xlu0 %2940
    %v2942 = vsel %vm322, %v2941, 0
    %2944 = vmatprep.subr.mxu0 0.0
    %2945 = vmatpush1.msra.mxu0 %v327
    %2946 = vmatprep.subr.mxu0 0.0
    %2947 = vmatpush1.msra.mxu0 0.0
    %2948 = vmatprep.subr.mxu0 0.0
    %2949 = vmatpush1.msra.mxu0 0.0
    %2950 = vmatprep.subr.mxu0 0.0
    %2951 = vmatpush1.msra.mxu0 0.0
    %2952 = vmatprep.subr.mxu0 0.0
    %2953 = vmatpush1.msra.mxu0 0.0
    %2954 = vmatprep.subr.mxu0 0.0
    %2955 = vmatpush1.msra.mxu0 0.0
    %2956 = vmatprep.subr.mxu0 0.0
    %2957 = vmatpush1.msra.mxu0 0.0
    %2958 = vmatprep.subr.mxu0 0.0
    %2959 = vmatpush1.msra.mxu0 0.0
    %2960 = vmatprep.subr.mxu0 0.0
    %2961 = vmatpush1.msra.mxu0 0.0
    %2962 = vmatprep.subr.mxu0 0.0
    %2963 = vmatpush1.msra.mxu0 0.0
    %2964 = vmatprep.subr.mxu0 0.0
    %2965 = vmatpush1.msra.mxu0 0.0
    %2966 = vmatprep.subr.mxu0 0.0
    %2967 = vmatpush1.msra.mxu0 0.0
    %2968 = vmatprep.subr.mxu0 0.0
    %2969 = vmatpush1.msra.mxu0 0.0
    %2970 = vmatprep.subr.mxu0 0.0
    %2971 = vmatpush1.msra.mxu0 0.0
    %2972 = vmatprep.subr.mxu0 0.0
    %2973 = vmatpush1.msra.mxu0 0.0
    %2974 = vmatprep.subr.mxu0 0.0
    %2975 = vmatpush1.msra.mxu0 0.0
    %2976 = vmatprep.subr.mxu0 0.0
    %2977 = vmatpush1.msra.mxu0 0.0
    %2978 = vmatprep.subr.mxu0 0.0
    %2979 = vmatpush1.msra.mxu0 0.0
    %2980 = vmatprep.subr.mxu0 0.0
    %2981 = vmatpush1.msra.mxu0 0.0
    %2982 = vmatprep.subr.mxu0 0.0
    %2983 = vmatpush1.msra.mxu0 0.0
    %2984 = vmatprep.subr.mxu0 0.0
    %2985 = vmatpush1.msra.mxu0 0.0
    %2986 = vmatprep.subr.mxu0 0.0
    %2987 = vmatpush1.msra.mxu0 0.0
    %2988 = vmatprep.subr.mxu0 0.0
    %2989 = vmatpush1.msra.mxu0 0.0
    %2990 = vmatprep.subr.mxu0 0.0
    %2991 = vmatpush1.msra.mxu0 0.0
    %2992 = vmatprep.subr.mxu0 0.0
    %2993 = vmatpush1.msra.mxu0 0.0
    %2994 = vmatprep.subr.mxu0 0.0
    %2995 = vmatpush1.msra.mxu0 0.0
    %2996 = vmatprep.subr.mxu0 0.0
    %2997 = vmatpush1.msra.mxu0 0.0
    %2998 = vmatprep.subr.mxu0 0.0
    %2999 = vmatpush1.msra.mxu0 0.0
    %3000 = vmatprep.subr.mxu0 0.0
    %3001 = vmatpush1.msra.mxu0 0.0
    %3002 = vmatprep.subr.mxu0 0.0
    %3003 = vmatpush1.msra.mxu0 0.0
    %3004 = vmatprep.subr.mxu0 0.0
    %3005 = vmatpush1.msra.mxu0 0.0
    %3006 = vmatprep.subr.mxu0 0.0
    %3007 = vmatpush1.msra.mxu0 0.0
    %3008 = vmatprep.mubr.f32.mxu0 0.0
    %3009 = vmatmul.mubr.f32.gmra.mrb[0].mxu0 %v2942
    %v3010 = vpop.f32.mrb[0].mxu0
    %v3011 = vadd.f32 0.0, %v3010
    %v3012 = vpop.f32.mrb[0].mxu0
    %3013 = vdwg.mxu0
    %3015 = vrot.lane.b32.xlu0 %v2939, 64
    %v3016 = vpop.permute.xlu0 %3015
    %v3017 = vsel %vm224, %v3016, 0
    %3019 = vmatprep.subr.mxu0 0.0
    %3020 = vmatpush1.msra.mxu0 %v114
    %3021 = vmatprep.subr.mxu0 0.0
    %3022 = vmatpush1.msra.mxu0 %v115
    %3023 = vmatprep.subr.mxu0 0.0
    %3024 = vmatpush1.msra.mxu0 %v116
    %3025 = vmatprep.subr.mxu0 0.0
    %3026 = vmatpush1.msra.mxu0 %v117
    %3027 = vmatprep.subr.mxu0 0.0
    %3028 = vmatpush1.msra.mxu0 %v118
    %3029 = vmatprep.subr.mxu0 0.0
    %3030 = vmatpush1.msra.mxu0 %v119
    %3031 = vmatprep.subr.mxu0 0.0
    %3032 = vmatpush1.msra.mxu0 %v120
    %3033 = vmatprep.subr.mxu0 0.0
    %3034 = vmatpush1.msra.mxu0 %v121
    %3035 = vmatprep.subr.mxu0 0.0
    %3036 = vmatpush1.msra.mxu0 0.0
    %3037 = vmatprep.subr.mxu0 0.0
    %3038 = vmatpush1.msra.mxu0 0.0
    %3039 = vmatprep.subr.mxu0 0.0
    %3040 = vmatpush1.msra.mxu0 0.0
    %3041 = vmatprep.subr.mxu0 0.0
    %3042 = vmatpush1.msra.mxu0 0.0
    %3043 = vmatprep.subr.mxu0 0.0
    %3044 = vmatpush1.msra.mxu0 0.0
    %3045 = vmatprep.subr.mxu0 0.0
    %3046 = vmatpush1.msra.mxu0 0.0
    %3047 = vmatprep.subr.mxu0 0.0
    %3048 = vmatpush1.msra.mxu0 0.0
    %3049 = vmatprep.subr.mxu0 0.0
    %3050 = vmatpush1.msra.mxu0 0.0
    %3051 = vmatprep.subr.mxu0 0.0
    %3052 = vmatpush1.msra.mxu0 0.0
    %3053 = vmatprep.subr.mxu0 0.0
    %3054 = vmatpush1.msra.mxu0 0.0
    %3055 = vmatprep.subr.mxu0 0.0
    %3056 = vmatpush1.msra.mxu0 0.0
    %3057 = vmatprep.subr.mxu0 0.0
    %3058 = vmatpush1.msra.mxu0 0.0
    %3059 = vmatprep.subr.mxu0 0.0
    %3060 = vmatpush1.msra.mxu0 0.0
    %3061 = vmatprep.subr.mxu0 0.0
    %3062 = vmatpush1.msra.mxu0 0.0
    %3063 = vmatprep.subr.mxu0 0.0
    %3064 = vmatpush1.msra.mxu0 0.0
    %3065 = vmatprep.subr.mxu0 0.0
    %3066 = vmatpush1.msra.mxu0 0.0
    %3067 = vmatprep.subr.mxu0 0.0
    %3068 = vmatpush1.msra.mxu0 0.0
    %3069 = vmatprep.subr.mxu0 0.0
    %3070 = vmatpush1.msra.mxu0 0.0
    %3071 = vmatprep.subr.mxu0 0.0
    %3072 = vmatpush1.msra.mxu0 0.0
    %3073 = vmatprep.subr.mxu0 0.0
    %3074 = vmatpush1.msra.mxu0 0.0
    %3075 = vmatprep.subr.mxu0 0.0
    %3076 = vmatpush1.msra.mxu0 0.0
    %3077 = vmatprep.subr.mxu0 0.0
    %3078 = vmatpush1.msra.mxu0 0.0
    %3079 = vmatprep.subr.mxu0 0.0
    %3080 = vmatpush1.msra.mxu0 0.0
    %3081 = vmatprep.subr.mxu0 0.0
    %3082 = vmatpush1.msra.mxu0 0.0
    %3083 = vmatprep.mubr.f32.mxu0 0.0
    %3084 = vmatmul.mubr.f32.gmra.mrb[0].mxu0 %v3017
    %v3085 = vpop.f32.mrb[0].mxu0
    %v3086 = vadd.f32 %v3011, %v3085
    %v3087 = vpop.f32.mrb[0].mxu0
    %3088 = vdwg.mxu0
    %3089 = vrot.lane.b32.xlu0 %v80, 117
    %v3090 = vpop.permute.xlu0 %3089
    %v3091 = vsel %vm322, %v3090, 0
    %3093 = vmatprep.subr.mxu0 0.0
    %3094 = vmatpush1.msra.mxu0 %v479
    %3095 = vmatprep.subr.mxu0 0.0
    %3096 = vmatpush1.msra.mxu0 0.0
    %3097 = vmatprep.subr.mxu0 0.0
    %3098 = vmatpush1.msra.mxu0 0.0
    %3099 = vmatprep.subr.mxu0 0.0
    %3100 = vmatpush1.msra.mxu0 0.0
    %3101 = vmatprep.subr.mxu0 0.0
    %3102 = vmatpush1.msra.mxu0 0.0
    %3103 = vmatprep.subr.mxu0 0.0
    %3104 = vmatpush1.msra.mxu0 0.0
    %3105 = vmatprep.subr.mxu0 0.0
    %3106 = vmatpush1.msra.mxu0 0.0
    %3107 = vmatprep.subr.mxu0 0.0
    %3108 = vmatpush1.msra.mxu0 0.0
    %3109 = vmatprep.subr.mxu0 0.0
    %3110 = vmatpush1.msra.mxu0 0.0
    %3111 = vmatprep.subr.mxu0 0.0
    %3112 = vmatpush1.msra.mxu0 0.0
    %3113 = vmatprep.subr.mxu0 0.0
    %3114 = vmatpush1.msra.mxu0 0.0
    %3115 = vmatprep.subr.mxu0 0.0
    %3116 = vmatpush1.msra.mxu0 0.0
    %3117 = vmatprep.subr.mxu0 0.0
    %3118 = vmatpush1.msra.mxu0 0.0
    %3119 = vmatprep.subr.mxu0 0.0
    %3120 = vmatpush1.msra.mxu0 0.0
    %3121 = vmatprep.subr.mxu0 0.0
    %3122 = vmatpush1.msra.mxu0 0.0
    %3123 = vmatprep.subr.mxu0 0.0
    %3124 = vmatpush1.msra.mxu0 0.0
    %3125 = vmatprep.subr.mxu0 0.0
    %3126 = vmatpush1.msra.mxu0 0.0
    %3127 = vmatprep.subr.mxu0 0.0
    %3128 = vmatpush1.msra.mxu0 0.0
    %3129 = vmatprep.subr.mxu0 0.0
    %3130 = vmatpush1.msra.mxu0 0.0
    %3131 = vmatprep.subr.mxu0 0.0
    %3132 = vmatpush1.msra.mxu0 0.0
    %3133 = vmatprep.subr.mxu0 0.0
    %3134 = vmatpush1.msra.mxu0 0.0
    %3135 = vmatprep.subr.mxu0 0.0
    %3136 = vmatpush1.msra.mxu0 0.0
    %3137 = vmatprep.subr.mxu0 0.0
    %3138 = vmatpush1.msra.mxu0 0.0
    %3139 = vmatprep.subr.mxu0 0.0
    %3140 = vmatpush1.msra.mxu0 0.0
    %3141 = vmatprep.subr.mxu0 0.0
    %3142 = vmatpush1.msra.mxu0 0.0
    %3143 = vmatprep.subr.mxu0 0.0
    %3144 = vmatpush1.msra.mxu0 0.0
    %3145 = vmatprep.subr.mxu0 0.0
    %3146 = vmatpush1.msra.mxu0 0.0
    %3147 = vmatprep.subr.mxu0 0.0
    %3148 = vmatpush1.msra.mxu0 0.0
    %3149 = vmatprep.subr.mxu0 0.0
    %3150 = vmatpush1.msra.mxu0 0.0
    %3151 = vmatprep.subr.mxu0 0.0
    %3152 = vmatpush1.msra.mxu0 0.0
    %3153 = vmatprep.subr.mxu0 0.0
    %3154 = vmatpush1.msra.mxu0 0.0
    %3155 = vmatprep.subr.mxu0 0.0
    %3156 = vmatpush1.msra.mxu0 0.0
    %3157 = vmatprep.mubr.f32.mxu0 0.0
    %3158 = vmatmul.mubr.f32.gmra.mrb[0].mxu0 %v3091
    %v3159 = vpop.f32.mrb[0].mxu0
    %v3160 = vadd.f32 0.0, %v3159
    %v3161 = vpop.f32.mrb[0].mxu0
    %3162 = vdwg.mxu0
    %v3163 = vadd.f32 %v3086, %v3160
    %v3164 = vadd.f32 %v3163, %v556
    %s3165 = scalar_lea.vmem %s14, 8
    %3166 = vst.msk [vmem:[%s3165] sm:$0x3] %vm559, %v3164
    %3167 = vmatprep.subr.mxu0 0.0
    %3168 = vmatpush1.msra.mxu0 %v562
    %3169 = vmatprep.subr.mxu0 0.0
    %3170 = vmatpush1.msra.mxu0 0.0
    %3171 = vmatprep.subr.mxu0 0.0
    %3172 = vmatpush1.msra.mxu0 0.0
    %3173 = vmatprep.subr.mxu0 0.0
    %3174 = vmatpush1.msra.mxu0 0.0
    %3175 = vmatprep.subr.mxu0 0.0
    %3176 = vmatpush1.msra.mxu0 0.0
    %3177 = vmatprep.subr.mxu0 0.0
    %3178 = vmatpush1.msra.mxu0 0.0
    %3179 = vmatprep.subr.mxu0 0.0
    %3180 = vmatpush1.msra.mxu0 0.0
    %3181 = vmatprep.subr.mxu0 0.0
    %3182 = vmatpush1.msra.mxu0 0.0
    %3183 = vmatprep.subr.mxu0 0.0
    %3184 = vmatpush1.msra.mxu0 0.0
    %3185 = vmatprep.subr.mxu0 0.0
    %3186 = vmatpush1.msra.mxu0 0.0
    %3187 = vmatprep.subr.mxu0 0.0
    %3188 = vmatpush1.msra.mxu0 0.0
    %3189 = vmatprep.subr.mxu0 0.0
    %3190 = vmatpush1.msra.mxu0 0.0
    %3191 = vmatprep.subr.mxu0 0.0
    %3192 = vmatpush1.msra.mxu0 0.0
    %3193 = vmatprep.subr.mxu0 0.0
    %3194 = vmatpush1.msra.mxu0 0.0
    %3195 = vmatprep.subr.mxu0 0.0
    %3196 = vmatpush1.msra.mxu0 0.0
    %3197 = vmatprep.subr.mxu0 0.0
    %3198 = vmatpush1.msra.mxu0 0.0
    %3199 = vmatprep.subr.mxu0 0.0
    %3200 = vmatpush1.msra.mxu0 0.0
    %3201 = vmatprep.subr.mxu0 0.0
    %3202 = vmatpush1.msra.mxu0 0.0
    %3203 = vmatprep.subr.mxu0 0.0
    %3204 = vmatpush1.msra.mxu0 0.0
    %3205 = vmatprep.subr.mxu0 0.0
    %3206 = vmatpush1.msra.mxu0 0.0
    %3207 = vmatprep.subr.mxu0 0.0
    %3208 = vmatpush1.msra.mxu0 0.0
    %3209 = vmatprep.subr.mxu0 0.0
    %3210 = vmatpush1.msra.mxu0 0.0
    %3211 = vmatprep.subr.mxu0 0.0
    %3212 = vmatpush1.msra.mxu0 0.0
    %3213 = vmatprep.subr.mxu0 0.0
    %3214 = vmatpush1.msra.mxu0 0.0
    %3215 = vmatprep.subr.mxu0 0.0
    %3216 = vmatpush1.msra.mxu0 0.0
    %3217 = vmatprep.subr.mxu0 0.0
    %3218 = vmatpush1.msra.mxu0 0.0
    %3219 = vmatprep.subr.mxu0 0.0
    %3220 = vmatpush1.msra.mxu0 0.0
    %3221 = vmatprep.subr.mxu0 0.0
    %3222 = vmatpush1.msra.mxu0 0.0
    %3223 = vmatprep.subr.mxu0 0.0
    %3224 = vmatpush1.msra.mxu0 0.0
    %3225 = vmatprep.subr.mxu0 0.0
    %3226 = vmatpush1.msra.mxu0 0.0
    %3227 = vmatprep.subr.mxu0 0.0
    %3228 = vmatpush1.msra.mxu0 0.0
    %3229 = vmatprep.subr.mxu0 0.0
    %3230 = vmatpush1.msra.mxu0 0.0
    %3231 = vmatprep.mubr.f32.mxu0 0.0
    %3232 = vmatmul.mubr.f32.gmra.mrb[0].mxu0 %v2942
    %v3233 = vpop.f32.mrb[0].mxu0
    %v3234 = vadd.f32 0.0, %v3233
    %v3235 = vpop.f32.mrb[0].mxu0
    %3236 = vdwg.mxu0
    %3237 = vmatprep.subr.mxu0 0.0
    %3238 = vmatpush1.msra.mxu0 %v103
    %3239 = vmatprep.subr.mxu0 0.0
    %3240 = vmatpush1.msra.mxu0 %v104
    %3241 = vmatprep.subr.mxu0 0.0
    %3242 = vmatpush1.msra.mxu0 %v105
    %3243 = vmatprep.subr.mxu0 0.0
    %3244 = vmatpush1.msra.mxu0 %v106
    %3245 = vmatprep.subr.mxu0 0.0
    %3246 = vmatpush1.msra.mxu0 %v107
    %3247 = vmatprep.subr.mxu0 0.0
    %3248 = vmatpush1.msra.mxu0 %v108
    %3249 = vmatprep.subr.mxu0 0.0
    %3250 = vmatpush1.msra.mxu0 %v109
    %3251 = vmatprep.subr.mxu0 0.0
    %3252 = vmatpush1.msra.mxu0 %v110
    %3253 = vmatprep.subr.mxu0 0.0
    %3254 = vmatpush1.msra.mxu0 0.0
    %3255 = vmatprep.subr.mxu0 0.0
    %3256 = vmatpush1.msra.mxu0 0.0
    %3257 = vmatprep.subr.mxu0 0.0
    %3258 = vmatpush1.msra.mxu0 0.0
    %3259 = vmatprep.subr.mxu0 0.0
    %3260 = vmatpush1.msra.mxu0 0.0
    %3261 = vmatprep.subr.mxu0 0.0
    %3262 = vmatpush1.msra.mxu0 0.0
    %3263 = vmatprep.subr.mxu0 0.0
    %3264 = vmatpush1.msra.mxu0 0.0
    %3265 = vmatprep.subr.mxu0 0.0
    %3266 = vmatpush1.msra.mxu0 0.0
    %3267 = vmatprep.subr.mxu0 0.0
    %3268 = vmatpush1.msra.mxu0 0.0
    %3269 = vmatprep.subr.mxu0 0.0
    %3270 = vmatpush1.msra.mxu0 0.0
    %3271 = vmatprep.subr.mxu0 0.0
    %3272 = vmatpush1.msra.mxu0 0.0
    %3273 = vmatprep.subr.mxu0 0.0
    %3274 = vmatpush1.msra.mxu0 0.0
    %3275 = vmatprep.subr.mxu0 0.0
    %3276 = vmatpush1.msra.mxu0 0.0
    %3277 = vmatprep.subr.mxu0 0.0
    %3278 = vmatpush1.msra.mxu0 0.0
    %3279 = vmatprep.subr.mxu0 0.0
    %3280 = vmatpush1.msra.mxu0 0.0
    %3281 = vmatprep.subr.mxu0 0.0
    %3282 = vmatpush1.msra.mxu0 0.0
    %3283 = vmatprep.subr.mxu0 0.0
    %3284 = vmatpush1.msra.mxu0 0.0
    %3285 = vmatprep.subr.mxu0 0.0
    %3286 = vmatpush1.msra.mxu0 0.0
    %3287 = vmatprep.subr.mxu0 0.0
    %3288 = vmatpush1.msra.mxu0 0.0
    %3289 = vmatprep.subr.mxu0 0.0
    %3290 = vmatpush1.msra.mxu0 0.0
    %3291 = vmatprep.subr.mxu0 0.0
    %3292 = vmatpush1.msra.mxu0 0.0
    %3293 = vmatprep.subr.mxu0 0.0
    %3294 = vmatpush1.msra.mxu0 0.0
    %3295 = vmatprep.subr.mxu0 0.0
    %3296 = vmatpush1.msra.mxu0 0.0
    %3297 = vmatprep.subr.mxu0 0.0
    %3298 = vmatpush1.msra.mxu0 0.0
    %3299 = vmatprep.subr.mxu0 0.0
    %3300 = vmatpush1.msra.mxu0 0.0
    %3301 = vmatprep.mubr.f32.mxu0 0.0
    %3302 = vmatmul.mubr.f32.gmra.mrb[0].mxu0 %v3017
    %v3303 = vpop.f32.mrb[0].mxu0
    %v3304 = vadd.f32 %v3234, %v3303
    %v3305 = vpop.f32.mrb[0].mxu0
    %3306 = vdwg.mxu0
    %v3307 = vadd.f32 %v3304, %v708
    %3308 = vset.pattern.permute.xlu0 11
    %3309 = vperm.xlu0 %3308, %v80
    %v3310 = vpop.permute.xlu0 %3309
    %v3312 = vmul.f32 %v3310, %v719
    %v3313 = vadd.f32 %v3307, %v3312
    %v3314 = vsel %vm723, %v3313, -inf
    %3315 = vmax.xlane.f32.xlu0 %v3314
    %v3316 = vpop.xlane.xlu0 %3315
    %v3317 = vsub.f32 %v3313, %v3316
    %v3318 = vmul.f32 %v3317, 1.442695
    %v3319 = vpow.pop %v3318
    %v3320 = vsel %vm723, %v3319, 0.0
    %3321 = vadd.xlane.f32.xlu0 %v3320
    %v3322 = vpop.xlane.xlu0 %3321
    %v3323 = vlog2.pop %v3322
    %v3324 = vmul.f32 %v3323, 0.6931472
    %vm3325 = vcmp.eq.f32.partialorder %v3313, %v3316
    %v3326 = vsel %vm3325, %v126, 5
    %v3327 = vsel %vm723, %v3326, 2147483647
    %v3328 = vand.u32 %v3327, 65535
    %v3329 = vshra.s32 %v3327, 16
    %v3330 = vcvt.s32.f32 %v3328
    %v3331 = vcvt.s32.f32 %v3329
    %3332 = vmin.xlane.f32.xlu0 %v3331
    %v3333 = vpop.xlane.xlu0 %3332
    %vm3334 = vcmp.eq.f32.partialorder %v3331, %v3333
    %v3335 = vsel %vm3334, %v3330, inf
    %3336 = vmin.xlane.f32.xlu0 %v3335
    %v3337 = vpop.xlane.xlu0 %3336
    %v3338 = vcvt.f32.s32 %v3337
    %v3339 = vcvt.f32.s32 %v3333
    %v3340 = vshll.u32 %v3339, 16
    %v3341 = vadd.s32 %v3340, %v3338
    %s3342 = scalar_lea.vmem %s15, 8
    %3343 = vst.msk [vmem:[%s3342] sm:$0x3] %vm559, %v3341
    %v3344 = vsub.f32 0.0, %v3324
    %s3345 = scalar_lea.vmem %s16, 8
    %3346 = vst.msk [vmem:[%s3345] sm:$0x3] %vm559, %v3344
    %3347 = vset.pattern.permute.xlu0 12
    %3348 = vperm.xlu0 %3347, %v80
    %v3349 = vpop.permute.xlu0 %3348
    %v3351 = vmul.f32 %v3349, %v719
    %v3352 = vadd.f32 %v3307, %v3351
    %v3353 = vsel %vm723, %v3352, -inf
    %3354 = vmax.xlane.f32.xlu0 %v3353
    %v3355 = vpop.xlane.xlu0 %3354
    %v3356 = vsub.f32 %v3352, %v3355
    %v3357 = vmul.f32 %v3356, 1.442695
    %v3358 = vpow.pop %v3357
    %v3359 = vsel %vm723, %v3358, 0.0
    %3360 = vadd.xlane.f32.xlu0 %v3359
    %v3361 = vpop.xlane.xlu0 %3360
    %v3362 = vlog2.pop %v3361
    %v3363 = vmul.f32 %v3362, 0.6931472
    %vm3364 = vcmp.eq.f32.partialorder %v3352, %v3355
    %v3365 = vsel %vm3364, %v126, 5
    %v3366 = vsel %vm723, %v3365, 2147483647
    %v3367 = vand.u32 %v3366, 65535
    %v3368 = vshra.s32 %v3366, 16
    %v3369 = vcvt.s32.f32 %v3367
    %v3370 = vcvt.s32.f32 %v3368
    %3371 = vmin.xlane.f32.xlu0 %v3370
    %v3372 = vpop.xlane.xlu0 %3371
    %vm3373 = vcmp.eq.f32.partialorder %v3370, %v3372
    %v3374 = vsel %vm3373, %v3369, inf
    %3375 = vmin.xlane.f32.xlu0 %v3374
    %v3376 = vpop.xlane.xlu0 %3375
    %v3377 = vcvt.f32.s32 %v3376
    %v3378 = vcvt.f32.s32 %v3372
    %v3379 = vshll.u32 %v3378, 16
    %v3380 = vadd.s32 %v3379, %v3377
    %s3381 = scalar_lea.vmem %s15, 20
    %3382 = vst.msk [vmem:[%s3381] sm:$0x3] %vm559, %v3380
    %v3383 = vsub.f32 0.0, %v3363
    %s3384 = scalar_lea.vmem %s16, 20
    %3385 = vst.msk [vmem:[%s3384] sm:$0x3] %vm559, %v3383
    %3386 = vset.pattern.permute.xlu0 13
    %3387 = vperm.xlu0 %3386, %v80
    %v3388 = vpop.permute.xlu0 %3387
    %v3390 = vmul.f32 %v3388, %v719
    %v3391 = vadd.f32 %v3307, %v3390
    %v3392 = vsel %vm723, %v3391, -inf
    %3393 = vmax.xlane.f32.xlu0 %v3392
    %v3394 = vpop.xlane.xlu0 %3393
    %v3395 = vsub.f32 %v3391, %v3394
    %v3396 = vmul.f32 %v3395, 1.442695
    %v3397 = vpow.pop %v3396
    %v3398 = vsel %vm723, %v3397, 0.0
    %3399 = vadd.xlane.f32.xlu0 %v3398
    %v3400 = vpop.xlane.xlu0 %3399
    %v3401 = vlog2.pop %v3400
    %v3402 = vmul.f32 %v3401, 0.6931472
    %vm3403 = vcmp.eq.f32.partialorder %v3391, %v3394
    %v3404 = vsel %vm3403, %v126, 5
    %v3405 = vsel %vm723, %v3404, 2147483647
    %v3406 = vand.u32 %v3405, 65535
    %v3407 = vshra.s32 %v3405, 16
    %v3408 = vcvt.s32.f32 %v3406
    %v3409 = vcvt.s32.f32 %v3407
    %3410 = vmin.xlane.f32.xlu0 %v3409
    %v3411 = vpop.xlane.xlu0 %3410
    %vm3412 = vcmp.eq.f32.partialorder %v3409, %v3411
    %v3413 = vsel %vm3412, %v3408, inf
    %3414 = vmin.xlane.f32.xlu0 %v3413
    %v3415 = vpop.xlane.xlu0 %3414
    %v3416 = vcvt.f32.s32 %v3415
    %v3417 = vcvt.f32.s32 %v3411
    %v3418 = vshll.u32 %v3417, 16
    %v3419 = vadd.s32 %v3418, %v3416
    %s3420 = scalar_lea.vmem %s15, 32
    %3421 = vst.msk [vmem:[%s3420] sm:$0x3] %vm559, %v3419
    %v3422 = vsub.f32 0.0, %v3402
    %s3423 = scalar_lea.vmem %s16, 32
    %3424 = vst.msk [vmem:[%s3423] sm:$0x3] %vm559, %v3422
    %v3426 = vsel %vm138, %v81, 0
    %3428 = vmatprep.subr.mxu0 %v84
    %3429 = vmatpush1.msra.mxu0 %v83
    %3430 = vmatprep.subr.mxu0 0.0
    %3431 = vmatpush1.msra.mxu0 0.0
    %3432 = vmatprep.subr.mxu0 0.0
    %3433 = vmatpush1.msra.mxu0 0.0
    %3434 = vmatprep.subr.mxu0 0.0
    %3435 = vmatpush1.msra.mxu0 0.0
    %3436 = vmatprep.subr.mxu0 0.0
    %3437 = vmatpush1.msra.mxu0 0.0
    %3438 = vmatprep.subr.mxu0 0.0
    %3439 = vmatpush1.msra.mxu0 0.0
    %3440 = vmatprep.subr.mxu0 0.0
    %3441 = vmatpush1.msra.mxu0 0.0
    %3442 = vmatprep.subr.mxu0 0.0
    %3443 = vmatpush1.msra.mxu0 0.0
    %3444 = vmatprep.subr.mxu0 0.0
    %3445 = vmatpush1.msra.mxu0 0.0
    %3446 = vmatprep.subr.mxu0 0.0
    %3447 = vmatpush1.msra.mxu0 0.0
    %3448 = vmatprep.subr.mxu0 0.0
    %3449 = vmatpush1.msra.mxu0 0.0
    %3450 = vmatprep.subr.mxu0 0.0
    %3451 = vmatpush1.msra.mxu0 0.0
    %3452 = vmatprep.subr.mxu0 0.0
    %3453 = vmatpush1.msra.mxu0 0.0
    %3454 = vmatprep.subr.mxu0 0.0
    %3455 = vmatpush1.msra.mxu0 0.0
    %3456 = vmatprep.subr.mxu0 0.0
    %3457 = vmatpush1.msra.mxu0 0.0
    %3458 = vmatprep.subr.mxu0 0.0
    %3459 = vmatpush1.msra.mxu0 0.0
    %3460 = vmatprep.subr.mxu0 0.0
    %3461 = vmatpush1.msra.mxu0 0.0
    %3462 = vmatprep.subr.mxu0 0.0
    %3463 = vmatpush1.msra.mxu0 0.0
    %3464 = vmatprep.subr.mxu0 0.0
    %3465 = vmatpush1.msra.mxu0 0.0
    %3466 = vmatprep.subr.mxu0 0.0
    %3467 = vmatpush1.msra.mxu0 0.0
    %3468 = vmatprep.subr.mxu0 0.0
    %3469 = vmatpush1.msra.mxu0 0.0
    %3470 = vmatprep.subr.mxu0 0.0
    %3471 = vmatpush1.msra.mxu0 0.0
    %3472 = vmatprep.subr.mxu0 0.0
    %3473 = vmatpush1.msra.mxu0 0.0
    %3474 = vmatprep.subr.mxu0 0.0
    %3475 = vmatpush1.msra.mxu0 0.0
    %3476 = vmatprep.subr.mxu0 0.0
    %3477 = vmatpush1.msra.mxu0 0.0
    %3478 = vmatprep.subr.mxu0 0.0
    %3479 = vmatpush1.msra.mxu0 0.0
    %3480 = vmatprep.subr.mxu0 0.0
    %3481 = vmatpush1.msra.mxu0 0.0
    %3482 = vmatprep.subr.mxu0 0.0
    %3483 = vmatpush1.msra.mxu0 0.0
    %3484 = vmatprep.subr.mxu0 0.0
    %3485 = vmatpush1.msra.mxu0 0.0
    %3486 = vmatprep.subr.mxu0 0.0
    %3487 = vmatpush1.msra.mxu0 0.0
    %3488 = vmatprep.subr.mxu0 0.0
    %3489 = vmatpush1.msra.mxu0 0.0
    %3490 = vmatprep.subr.mxu0 0.0
    %3491 = vmatpush1.msra.mxu0 0.0
    %3492 = vmatprep.mubr.f32.mxu0 0.0
    %3493 = vmatmul.mubr.f32.gmra.mrb[0].mxu0 %v3426
    %v3494 = vpop.f32.mrb[0].mxu0
    %v3495 = vadd.f32 %v131, %v3494
    %v3496 = vpop.f32.mrb[0].mxu0
    %v3497 = vadd.f32 %v135, %v3496
    %3498 = vdwg.mxu0
    %3499 = vmatprep.subr.mxu0 %v86
    %3500 = vmatpush1.msra.mxu0 %v85
    %3501 = vmatprep.subr.mxu0 %v88
    %3502 = vmatpush1.msra.mxu0 %v87
    %3503 = vmatprep.subr.mxu0 %v90
    %3504 = vmatpush1.msra.mxu0 %v89
    %3505 = vmatprep.subr.mxu0 %v92
    %3506 = vmatpush1.msra.mxu0 %v91
    %3507 = vmatprep.subr.mxu0 %v94
    %3508 = vmatpush1.msra.mxu0 %v93
    %3509 = vmatprep.subr.mxu0 %v96
    %3510 = vmatpush1.msra.mxu0 %v95
    %3511 = vmatprep.subr.mxu0 %v98
    %3512 = vmatpush1.msra.mxu0 %v97
    %3513 = vmatprep.subr.mxu0 %v100
    %3514 = vmatpush1.msra.mxu0 %v99
    %3515 = vmatprep.subr.mxu0 0.0
    %3516 = vmatpush1.msra.mxu0 0.0
    %3517 = vmatprep.subr.mxu0 0.0
    %3518 = vmatpush1.msra.mxu0 0.0
    %3519 = vmatprep.subr.mxu0 0.0
    %3520 = vmatpush1.msra.mxu0 0.0
    %3521 = vmatprep.subr.mxu0 0.0
    %3522 = vmatpush1.msra.mxu0 0.0
    %3523 = vmatprep.subr.mxu0 0.0
    %3524 = vmatpush1.msra.mxu0 0.0
    %3525 = vmatprep.subr.mxu0 0.0
    %3526 = vmatpush1.msra.mxu0 0.0
    %3527 = vmatprep.subr.mxu0 0.0
    %3528 = vmatpush1.msra.mxu0 0.0
    %3529 = vmatprep.subr.mxu0 0.0
    %3530 = vmatpush1.msra.mxu0 0.0
    %3531 = vmatprep.subr.mxu0 0.0
    %3532 = vmatpush1.msra.mxu0 0.0
    %3533 = vmatprep.subr.mxu0 0.0
    %3534 = vmatpush1.msra.mxu0 0.0
    %3535 = vmatprep.subr.mxu0 0.0
    %3536 = vmatpush1.msra.mxu0 0.0
    %3537 = vmatprep.subr.mxu0 0.0
    %3538 = vmatpush1.msra.mxu0 0.0
    %3539 = vmatprep.subr.mxu0 0.0
    %3540 = vmatpush1.msra.mxu0 0.0
    %3541 = vmatprep.subr.mxu0 0.0
    %3542 = vmatpush1.msra.mxu0 0.0
    %3543 = vmatprep.subr.mxu0 0.0
    %3544 = vmatpush1.msra.mxu0 0.0
    %3545 = vmatprep.subr.mxu0 0.0
    %3546 = vmatpush1.msra.mxu0 0.0
    %3547 = vmatprep.subr.mxu0 0.0
    %3548 = vmatpush1.msra.mxu0 0.0
    %3549 = vmatprep.subr.mxu0 0.0
    %3550 = vmatpush1.msra.mxu0 0.0
    %3551 = vmatprep.subr.mxu0 0.0
    %3552 = vmatpush1.msra.mxu0 0.0
    %3553 = vmatprep.subr.mxu0 0.0
    %3554 = vmatpush1.msra.mxu0 0.0
    %3555 = vmatprep.subr.mxu0 0.0
    %3556 = vmatpush1.msra.mxu0 0.0
    %3557 = vmatprep.subr.mxu0 0.0
    %3558 = vmatpush1.msra.mxu0 0.0
    %3559 = vmatprep.subr.mxu0 0.0
    %3560 = vmatpush1.msra.mxu0 0.0
    %3561 = vmatprep.subr.mxu0 0.0
    %3562 = vmatpush1.msra.mxu0 0.0
    %3563 = vmatprep.mubr.f32.mxu0 0.0
    %3564 = vmatmul.mubr.f32.gmra.mrb[0].mxu0 %v3017
    %v3565 = vpop.f32.mrb[0].mxu0
    %v3566 = vadd.f32 %v217, %v3565
    %v3567 = vpop.f32.mrb[0].mxu0
    %v3568 = vadd.f32 %v221, %v3567
    %3569 = vdwg.mxu0
    %v3570 = vadd.f32 %v3495, %v3566
    %v3571 = vxor.u32 %v3570, 2147483648
    %v3572 = vmul.f32 %v3571, 1.442695
    %v3573 = vpow.pop %v3572
    %v3574 = vadd.f32 %v3573, 1.0
    %v3575 = vrcp.pop %v3574
    %v3576 = vmul.f32 1.0, %v3575
    %v3577 = vmul.f32 %v3576, %v3568
    %v3578 = vadd.f32 %v3497, %v3577
    %v3579 = vtanh.pop %v3578
    %v3580 = vsub.f32 1.0, %v3576
    %3582 = vrot.lane.b32.xlu0 %v3579, 64
    %v3583 = vpop.permute.xlu0 %3582
    %v3585 = vmul.f32 %v3580, %v3583
    %v3586 = vmul.f32 %v3576, %v2939
    %v3587 = vadd.f32 %v3585, %v3586
    %3588 = vrot.lane.b32.xlu0 %v81, 120
    %v3589 = vpop.permute.xlu0 %3588
    %v3590 = vsel %vm322, %v3589, 0
    %3592 = vmatprep.subr.mxu0 0.0
    %3593 = vmatpush1.msra.mxu0 %v327
    %3594 = vmatprep.subr.mxu0 0.0
    %3595 = vmatpush1.msra.mxu0 0.0
    %3596 = vmatprep.subr.mxu0 0.0
    %3597 = vmatpush1.msra.mxu0 0.0
    %3598 = vmatprep.subr.mxu0 0.0
    %3599 = vmatpush1.msra.mxu0 0.0
    %3600 = vmatprep.subr.mxu0 0.0
    %3601 = vmatpush1.msra.mxu0 0.0
    %3602 = vmatprep.subr.mxu0 0.0
    %3603 = vmatpush1.msra.mxu0 0.0
    %3604 = vmatprep.subr.mxu0 0.0
    %3605 = vmatpush1.msra.mxu0 0.0
    %3606 = vmatprep.subr.mxu0 0.0
    %3607 = vmatpush1.msra.mxu0 0.0
    %3608 = vmatprep.subr.mxu0 0.0
    %3609 = vmatpush1.msra.mxu0 0.0
    %3610 = vmatprep.subr.mxu0 0.0
    %3611 = vmatpush1.msra.mxu0 0.0
    %3612 = vmatprep.subr.mxu0 0.0
    %3613 = vmatpush1.msra.mxu0 0.0
    %3614 = vmatprep.subr.mxu0 0.0
    %3615 = vmatpush1.msra.mxu0 0.0
    %3616 = vmatprep.subr.mxu0 0.0
    %3617 = vmatpush1.msra.mxu0 0.0
    %3618 = vmatprep.subr.mxu0 0.0
    %3619 = vmatpush1.msra.mxu0 0.0
    %3620 = vmatprep.subr.mxu0 0.0
    %3621 = vmatpush1.msra.mxu0 0.0
    %3622 = vmatprep.subr.mxu0 0.0
    %3623 = vmatpush1.msra.mxu0 0.0
    %3624 = vmatprep.subr.mxu0 0.0
    %3625 = vmatpush1.msra.mxu0 0.0
    %3626 = vmatprep.subr.mxu0 0.0
    %3627 = vmatpush1.msra.mxu0 0.0
    %3628 = vmatprep.subr.mxu0 0.0
    %3629 = vmatpush1.msra.mxu0 0.0
    %3630 = vmatprep.subr.mxu0 0.0
    %3631 = vmatpush1.msra.mxu0 0.0
    %3632 = vmatprep.subr.mxu0 0.0
    %3633 = vmatpush1.msra.mxu0 0.0
    %3634 = vmatprep.subr.mxu0 0.0
    %3635 = vmatpush1.msra.mxu0 0.0
    %3636 = vmatprep.subr.mxu0 0.0
    %3637 = vmatpush1.msra.mxu0 0.0
    %3638 = vmatprep.subr.mxu0 0.0
    %3639 = vmatpush1.msra.mxu0 0.0
    %3640 = vmatprep.subr.mxu0 0.0
    %3641 = vmatpush1.msra.mxu0 0.0
    %3642 = vmatprep.subr.mxu0 0.0
    %3643 = vmatpush1.msra.mxu0 0.0
    %3644 = vmatprep.subr.mxu0 0.0
    %3645 = vmatpush1.msra.mxu0 0.0
    %3646 = vmatprep.subr.mxu0 0.0
    %3647 = vmatpush1.msra.mxu0 0.0
    %3648 = vmatprep.subr.mxu0 0.0
    %3649 = vmatpush1.msra.mxu0 0.0
    %3650 = vmatprep.subr.mxu0 0.0
    %3651 = vmatpush1.msra.mxu0 0.0
    %3652 = vmatprep.subr.mxu0 0.0
    %3653 = vmatpush1.msra.mxu0 0.0
    %3654 = vmatprep.subr.mxu0 0.0
    %3655 = vmatpush1.msra.mxu0 0.0
    %3656 = vmatprep.mubr.f32.mxu0 0.0
    %3657 = vmatmul.mubr.f32.gmra.mrb[0].mxu0 %v3590
    %v3658 = vpop.f32.mrb[0].mxu0
    %v3659 = vadd.f32 0.0, %v3658
    %v3660 = vpop.f32.mrb[0].mxu0
    %3661 = vdwg.mxu0
    %3663 = vrot.lane.b32.xlu0 %v3587, 64
    %v3664 = vpop.permute.xlu0 %3663
    %v3665 = vsel %vm224, %v3664, 0
    %3667 = vmatprep.subr.mxu0 0.0
    %3668 = vmatpush1.msra.mxu0 %v114
    %3669 = vmatprep.subr.mxu0 0.0
    %3670 = vmatpush1.msra.mxu0 %v115
    %3671 = vmatprep.subr.mxu0 0.0
    %3672 = vmatpush1.msra.mxu0 %v116
    %3673 = vmatprep.subr.mxu0 0.0
    %3674 = vmatpush1.msra.mxu0 %v117
    %3675 = vmatprep.subr.mxu0 0.0
    %3676 = vmatpush1.msra.mxu0 %v118
    %3677 = vmatprep.subr.mxu0 0.0
    %3678 = vmatpush1.msra.mxu0 %v119
    %3679 = vmatprep.subr.mxu0 0.0
    %3680 = vmatpush1.msra.mxu0 %v120
    %3681 = vmatprep.subr.mxu0 0.0
    %3682 = vmatpush1.msra.mxu0 %v121
    %3683 = vmatprep.subr.mxu0 0.0
    %3684 = vmatpush1.msra.mxu0 0.0
    %3685 = vmatprep.subr.mxu0 0.0
    %3686 = vmatpush1.msra.mxu0 0.0
    %3687 = vmatprep.subr.mxu0 0.0
    %3688 = vmatpush1.msra.mxu0 0.0
    %3689 = vmatprep.subr.mxu0 0.0
    %3690 = vmatpush1.msra.mxu0 0.0
    %3691 = vmatprep.subr.mxu0 0.0
    %3692 = vmatpush1.msra.mxu0 0.0
    %3693 = vmatprep.subr.mxu0 0.0
    %3694 = vmatpush1.msra.mxu0 0.0
    %3695 = vmatprep.subr.mxu0 0.0
    %3696 = vmatpush1.msra.mxu0 0.0
    %3697 = vmatprep.subr.mxu0 0.0
    %3698 = vmatpush1.msra.mxu0 0.0
    %3699 = vmatprep.subr.mxu0 0.0
    %3700 = vmatpush1.msra.mxu0 0.0
    %3701 = vmatprep.subr.mxu0 0.0
    %3702 = vmatpush1.msra.mxu0 0.0
    %3703 = vmatprep.subr.mxu0 0.0
    %3704 = vmatpush1.msra.mxu0 0.0
    %3705 = vmatprep.subr.mxu0 0.0
    %3706 = vmatpush1.msra.mxu0 0.0
    %3707 = vmatprep.subr.mxu0 0.0
    %3708 = vmatpush1.msra.mxu0 0.0
    %3709 = vmatprep.subr.mxu0 0.0
    %3710 = vmatpush1.msra.mxu0 0.0
    %3711 = vmatprep.subr.mxu0 0.0
    %3712 = vmatpush1.msra.mxu0 0.0
    %3713 = vmatprep.subr.mxu0 0.0
    %3714 = vmatpush1.msra.mxu0 0.0
    %3715 = vmatprep.subr.mxu0 0.0
    %3716 = vmatpush1.msra.mxu0 0.0
    %3717 = vmatprep.subr.mxu0 0.0
    %3718 = vmatpush1.msra.mxu0 0.0
    %3719 = vmatprep.subr.mxu0 0.0
    %3720 = vmatpush1.msra.mxu0 0.0
    %3721 = vmatprep.subr.mxu0 0.0
    %3722 = vmatpush1.msra.mxu0 0.0
    %3723 = vmatprep.subr.mxu0 0.0
    %3724 = vmatpush1.msra.mxu0 0.0
    %3725 = vmatprep.subr.mxu0 0.0
    %3726 = vmatpush1.msra.mxu0 0.0
    %3727 = vmatprep.subr.mxu0 0.0
    %3728 = vmatpush1.msra.mxu0 0.0
    %3729 = vmatprep.subr.mxu0 0.0
    %3730 = vmatpush1.msra.mxu0 0.0
    %3731 = vmatprep.mubr.f32.mxu0 0.0
    %3732 = vmatmul.mubr.f32.gmra.mrb[0].mxu0 %v3665
    %v3733 = vpop.f32.mrb[0].mxu0
    %v3734 = vadd.f32 %v3659, %v3733
    %v3735 = vpop.f32.mrb[0].mxu0
    %3736 = vdwg.mxu0
    %3737 = vrot.lane.b32.xlu0 %v81, 117
    %v3738 = vpop.permute.xlu0 %3737
    %v3739 = vsel %vm322, %v3738, 0
    %3741 = vmatprep.subr.mxu0 0.0
    %3742 = vmatpush1.msra.mxu0 %v479
    %3743 = vmatprep.subr.mxu0 0.0
    %3744 = vmatpush1.msra.mxu0 0.0
    %3745 = vmatprep.subr.mxu0 0.0
    %3746 = vmatpush1.msra.mxu0 0.0
    %3747 = vmatprep.subr.mxu0 0.0
    %3748 = vmatpush1.msra.mxu0 0.0
    %3749 = vmatprep.subr.mxu0 0.0
    %3750 = vmatpush1.msra.mxu0 0.0
    %3751 = vmatprep.subr.mxu0 0.0
    %3752 = vmatpush1.msra.mxu0 0.0
    %3753 = vmatprep.subr.mxu0 0.0
    %3754 = vmatpush1.msra.mxu0 0.0
    %3755 = vmatprep.subr.mxu0 0.0
    %3756 = vmatpush1.msra.mxu0 0.0
    %3757 = vmatprep.subr.mxu0 0.0
    %3758 = vmatpush1.msra.mxu0 0.0
    %3759 = vmatprep.subr.mxu0 0.0
    %3760 = vmatpush1.msra.mxu0 0.0
    %3761 = vmatprep.subr.mxu0 0.0
    %3762 = vmatpush1.msra.mxu0 0.0
    %3763 = vmatprep.subr.mxu0 0.0
    %3764 = vmatpush1.msra.mxu0 0.0
    %3765 = vmatprep.subr.mxu0 0.0
    %3766 = vmatpush1.msra.mxu0 0.0
    %3767 = vmatprep.subr.mxu0 0.0
    %3768 = vmatpush1.msra.mxu0 0.0
    %3769 = vmatprep.subr.mxu0 0.0
    %3770 = vmatpush1.msra.mxu0 0.0
    %3771 = vmatprep.subr.mxu0 0.0
    %3772 = vmatpush1.msra.mxu0 0.0
    %3773 = vmatprep.subr.mxu0 0.0
    %3774 = vmatpush1.msra.mxu0 0.0
    %3775 = vmatprep.subr.mxu0 0.0
    %3776 = vmatpush1.msra.mxu0 0.0
    %3777 = vmatprep.subr.mxu0 0.0
    %3778 = vmatpush1.msra.mxu0 0.0
    %3779 = vmatprep.subr.mxu0 0.0
    %3780 = vmatpush1.msra.mxu0 0.0
    %3781 = vmatprep.subr.mxu0 0.0
    %3782 = vmatpush1.msra.mxu0 0.0
    %3783 = vmatprep.subr.mxu0 0.0
    %3784 = vmatpush1.msra.mxu0 0.0
    %3785 = vmatprep.subr.mxu0 0.0
    %3786 = vmatpush1.msra.mxu0 0.0
    %3787 = vmatprep.subr.mxu0 0.0
    %3788 = vmatpush1.msra.mxu0 0.0
    %3789 = vmatprep.subr.mxu0 0.0
    %3790 = vmatpush1.msra.mxu0 0.0
    %3791 = vmatprep.subr.mxu0 0.0
    %3792 = vmatpush1.msra.mxu0 0.0
    %3793 = vmatprep.subr.mxu0 0.0
    %3794 = vmatpush1.msra.mxu0 0.0
    %3795 = vmatprep.subr.mxu0 0.0
    %3796 = vmatpush1.msra.mxu0 0.0
    %3797 = vmatprep.subr.mxu0 0.0
    %3798 = vmatpush1.msra.mxu0 0.0
    %3799 = vmatprep.subr.mxu0 0.0
    %3800 = vmatpush1.msra.mxu0 0.0
    %3801 = vmatprep.subr.mxu0 0.0
    %3802 = vmatpush1.msra.mxu0 0.0
    %3803 = vmatprep.subr.mxu0 0.0
    %3804 = vmatpush1.msra.mxu0 0.0
    %3805 = vmatprep.mubr.f32.mxu0 0.0
    %3806 = vmatmul.mubr.f32.gmra.mrb[0].mxu0 %v3739
    %v3807 = vpop.f32.mrb[0].mxu0
    %v3808 = vadd.f32 0.0, %v3807
    %v3809 = vpop.f32.mrb[0].mxu0
    %3810 = vdwg.mxu0
    %v3811 = vadd.f32 %v3734, %v3808
    %v3812 = vadd.f32 %v3811, %v556
    %s3813 = scalar_lea.vmem %s14, 10
    %3814 = vst.msk [vmem:[%s3813] sm:$0x3] %vm559, %v3812
    %3815 = vmatprep.subr.mxu0 0.0
    %3816 = vmatpush1.msra.mxu0 %v562
    %3817 = vmatprep.subr.mxu0 0.0
    %3818 = vmatpush1.msra.mxu0 0.0
    %3819 = vmatprep.subr.mxu0 0.0
    %3820 = vmatpush1.msra.mxu0 0.0
    %3821 = vmatprep.subr.mxu0 0.0
    %3822 = vmatpush1.msra.mxu0 0.0
    %3823 = vmatprep.subr.mxu0 0.0
    %3824 = vmatpush1.msra.mxu0 0.0
    %3825 = vmatprep.subr.mxu0 0.0
    %3826 = vmatpush1.msra.mxu0 0.0
    %3827 = vmatprep.subr.mxu0 0.0
    %3828 = vmatpush1.msra.mxu0 0.0
    %3829 = vmatprep.subr.mxu0 0.0
    %3830 = vmatpush1.msra.mxu0 0.0
    %3831 = vmatprep.subr.mxu0 0.0
    %3832 = vmatpush1.msra.mxu0 0.0
    %3833 = vmatprep.subr.mxu0 0.0
    %3834 = vmatpush1.msra.mxu0 0.0
    %3835 = vmatprep.subr.mxu0 0.0
    %3836 = vmatpush1.msra.mxu0 0.0
    %3837 = vmatprep.subr.mxu0 0.0
    %3838 = vmatpush1.msra.mxu0 0.0
    %3839 = vmatprep.subr.mxu0 0.0
    %3840 = vmatpush1.msra.mxu0 0.0
    %3841 = vmatprep.subr.mxu0 0.0
    %3842 = vmatpush1.msra.mxu0 0.0
    %3843 = vmatprep.subr.mxu0 0.0
    %3844 = vmatpush1.msra.mxu0 0.0
    %3845 = vmatprep.subr.mxu0 0.0
    %3846 = vmatpush1.msra.mxu0 0.0
    %3847 = vmatprep.subr.mxu0 0.0
    %3848 = vmatpush1.msra.mxu0 0.0
    %3849 = vmatprep.subr.mxu0 0.0
    %3850 = vmatpush1.msra.mxu0 0.0
    %3851 = vmatprep.subr.mxu0 0.0
    %3852 = vmatpush1.msra.mxu0 0.0
    %3853 = vmatprep.subr.mxu0 0.0
    %3854 = vmatpush1.msra.mxu0 0.0
    %3855 = vmatprep.subr.mxu0 0.0
    %3856 = vmatpush1.msra.mxu0 0.0
    %3857 = vmatprep.subr.mxu0 0.0
    %3858 = vmatpush1.msra.mxu0 0.0
    %3859 = vmatprep.subr.mxu0 0.0
    %3860 = vmatpush1.msra.mxu0 0.0
    %3861 = vmatprep.subr.mxu0 0.0
    %3862 = vmatpush1.msra.mxu0 0.0
    %3863 = vmatprep.subr.mxu0 0.0
    %3864 = vmatpush1.msra.mxu0 0.0
    %3865 = vmatprep.subr.mxu0 0.0
    %3866 = vmatpush1.msra.mxu0 0.0
    %3867 = vmatprep.subr.mxu0 0.0
    %3868 = vmatpush1.msra.mxu0 0.0
    %3869 = vmatprep.subr.mxu0 0.0
    %3870 = vmatpush1.msra.mxu0 0.0
    %3871 = vmatprep.subr.mxu0 0.0
    %3872 = vmatpush1.msra.mxu0 0.0
    %3873 = vmatprep.subr.mxu0 0.0
    %3874 = vmatpush1.msra.mxu0 0.0
    %3875 = vmatprep.subr.mxu0 0.0
    %3876 = vmatpush1.msra.mxu0 0.0
    %3877 = vmatprep.subr.mxu0 0.0
    %3878 = vmatpush1.msra.mxu0 0.0
    %3879 = vmatprep.mubr.f32.mxu0 0.0
    %3880 = vmatmul.mubr.f32.gmra.mrb[0].mxu0 %v3590
    %v3881 = vpop.f32.mrb[0].mxu0
    %v3882 = vadd.f32 0.0, %v3881
    %v3883 = vpop.f32.mrb[0].mxu0
    %3884 = vdwg.mxu0
    %3885 = vmatprep.subr.mxu0 0.0
    %3886 = vmatpush1.msra.mxu0 %v103
    %3887 = vmatprep.subr.mxu0 0.0
    %3888 = vmatpush1.msra.mxu0 %v104
    %3889 = vmatprep.subr.mxu0 0.0
    %3890 = vmatpush1.msra.mxu0 %v105
    %3891 = vmatprep.subr.mxu0 0.0
    %3892 = vmatpush1.msra.mxu0 %v106
    %3893 = vmatprep.subr.mxu0 0.0
    %3894 = vmatpush1.msra.mxu0 %v107
    %3895 = vmatprep.subr.mxu0 0.0
    %3896 = vmatpush1.msra.mxu0 %v108
    %3897 = vmatprep.subr.mxu0 0.0
    %3898 = vmatpush1.msra.mxu0 %v109
    %3899 = vmatprep.subr.mxu0 0.0
    %3900 = vmatpush1.msra.mxu0 %v110
    %3901 = vmatprep.subr.mxu0 0.0
    %3902 = vmatpush1.msra.mxu0 0.0
    %3903 = vmatprep.subr.mxu0 0.0
    %3904 = vmatpush1.msra.mxu0 0.0
    %3905 = vmatprep.subr.mxu0 0.0
    %3906 = vmatpush1.msra.mxu0 0.0
    %3907 = vmatprep.subr.mxu0 0.0
    %3908 = vmatpush1.msra.mxu0 0.0
    %3909 = vmatprep.subr.mxu0 0.0
    %3910 = vmatpush1.msra.mxu0 0.0
    %3911 = vmatprep.subr.mxu0 0.0
    %3912 = vmatpush1.msra.mxu0 0.0
    %3913 = vmatprep.subr.mxu0 0.0
    %3914 = vmatpush1.msra.mxu0 0.0
    %3915 = vmatprep.subr.mxu0 0.0
    %3916 = vmatpush1.msra.mxu0 0.0
    %3917 = vmatprep.subr.mxu0 0.0
    %3918 = vmatpush1.msra.mxu0 0.0
    %3919 = vmatprep.subr.mxu0 0.0
    %3920 = vmatpush1.msra.mxu0 0.0
    %3921 = vmatprep.subr.mxu0 0.0
    %3922 = vmatpush1.msra.mxu0 0.0
    %3923 = vmatprep.subr.mxu0 0.0
    %3924 = vmatpush1.msra.mxu0 0.0
    %3925 = vmatprep.subr.mxu0 0.0
    %3926 = vmatpush1.msra.mxu0 0.0
    %3927 = vmatprep.subr.mxu0 0.0
    %3928 = vmatpush1.msra.mxu0 0.0
    %3929 = vmatprep.subr.mxu0 0.0
    %3930 = vmatpush1.msra.mxu0 0.0
    %3931 = vmatprep.subr.mxu0 0.0
    %3932 = vmatpush1.msra.mxu0 0.0
    %3933 = vmatprep.subr.mxu0 0.0
    %3934 = vmatpush1.msra.mxu0 0.0
    %3935 = vmatprep.subr.mxu0 0.0
    %3936 = vmatpush1.msra.mxu0 0.0
    %3937 = vmatprep.subr.mxu0 0.0
    %3938 = vmatpush1.msra.mxu0 0.0
    %3939 = vmatprep.subr.mxu0 0.0
    %3940 = vmatpush1.msra.mxu0 0.0
    %3941 = vmatprep.subr.mxu0 0.0
    %3942 = vmatpush1.msra.mxu0 0.0
    %3943 = vmatprep.subr.mxu0 0.0
    %3944 = vmatpush1.msra.mxu0 0.0
    %3945 = vmatprep.subr.mxu0 0.0
    %3946 = vmatpush1.msra.mxu0 0.0
    %3947 = vmatprep.subr.mxu0 0.0
    %3948 = vmatpush1.msra.mxu0 0.0
    %3949 = vmatprep.mubr.f32.mxu0 0.0
    %3950 = vmatmul.mubr.f32.gmra.mrb[0].mxu0 %v3665
    %v3951 = vpop.f32.mrb[0].mxu0
    %v3952 = vadd.f32 %v3882, %v3951
    %v3953 = vpop.f32.mrb[0].mxu0
    %3954 = vdwg.mxu0
    %v3955 = vadd.f32 %v3952, %v708
    %3956 = vset.pattern.permute.xlu0 11
    %3957 = vperm.xlu0 %3956, %v81
    %v3958 = vpop.permute.xlu0 %3957
    %v3960 = vmul.f32 %v3958, %v719
    %v3961 = vadd.f32 %v3955, %v3960
    %v3962 = vsel %vm723, %v3961, -inf
    %3963 = vmax.xlane.f32.xlu0 %v3962
    %v3964 = vpop.xlane.xlu0 %3963
    %v3965 = vsub.f32 %v3961, %v3964
    %v3966 = vmul.f32 %v3965, 1.442695
    %v3967 = vpow.pop %v3966
    %v3968 = vsel %vm723, %v3967, 0.0
    %3969 = vadd.xlane.f32.xlu0 %v3968
    %v3970 = vpop.xlane.xlu0 %3969
    %v3971 = vlog2.pop %v3970
    %v3972 = vmul.f32 %v3971, 0.6931472
    %vm3973 = vcmp.eq.f32.partialorder %v3961, %v3964
    %v3974 = vsel %vm3973, %v126, 5
    %v3975 = vsel %vm723, %v3974, 2147483647
    %v3976 = vand.u32 %v3975, 65535
    %v3977 = vshra.s32 %v3975, 16
    %v3978 = vcvt.s32.f32 %v3976
    %v3979 = vcvt.s32.f32 %v3977
    %3980 = vmin.xlane.f32.xlu0 %v3979
    %v3981 = vpop.xlane.xlu0 %3980
    %vm3982 = vcmp.eq.f32.partialorder %v3979, %v3981
    %v3983 = vsel %vm3982, %v3978, inf
    %3984 = vmin.xlane.f32.xlu0 %v3983
    %v3985 = vpop.xlane.xlu0 %3984
    %v3986 = vcvt.f32.s32 %v3985
    %v3987 = vcvt.f32.s32 %v3981
    %v3988 = vshll.u32 %v3987, 16
    %v3989 = vadd.s32 %v3988, %v3986
    %s3990 = scalar_lea.vmem %s15, 10
    %3991 = vst.msk [vmem:[%s3990] sm:$0x3] %vm559, %v3989
    %v3992 = vsub.f32 0.0, %v3972
    %s3993 = scalar_lea.vmem %s16, 10
    %3994 = vst.msk [vmem:[%s3993] sm:$0x3] %vm559, %v3992
    %3995 = vset.pattern.permute.xlu0 12
    %3996 = vperm.xlu0 %3995, %v81
    %v3997 = vpop.permute.xlu0 %3996
    %v3999 = vmul.f32 %v3997, %v719
    %v4000 = vadd.f32 %v3955, %v3999
    %v4001 = vsel %vm723, %v4000, -inf
    %4002 = vmax.xlane.f32.xlu0 %v4001
    %v4003 = vpop.xlane.xlu0 %4002
    %v4004 = vsub.f32 %v4000, %v4003
    %v4005 = vmul.f32 %v4004, 1.442695
    %v4006 = vpow.pop %v4005
    %v4007 = vsel %vm723, %v4006, 0.0
    %4008 = vadd.xlane.f32.xlu0 %v4007
    %v4009 = vpop.xlane.xlu0 %4008
    %v4010 = vlog2.pop %v4009
    %v4011 = vmul.f32 %v4010, 0.6931472
    %vm4012 = vcmp.eq.f32.partialorder %v4000, %v4003
    %v4013 = vsel %vm4012, %v126, 5
    %v4014 = vsel %vm723, %v4013, 2147483647
    %v4015 = vand.u32 %v4014, 65535
    %v4016 = vshra.s32 %v4014, 16
    %v4017 = vcvt.s32.f32 %v4015
    %v4018 = vcvt.s32.f32 %v4016
    %4019 = vmin.xlane.f32.xlu0 %v4018
    %v4020 = vpop.xlane.xlu0 %4019
    %vm4021 = vcmp.eq.f32.partialorder %v4018, %v4020
    %v4022 = vsel %vm4021, %v4017, inf
    %4023 = vmin.xlane.f32.xlu0 %v4022
    %v4024 = vpop.xlane.xlu0 %4023
    %v4025 = vcvt.f32.s32 %v4024
    %v4026 = vcvt.f32.s32 %v4020
    %v4027 = vshll.u32 %v4026, 16
    %v4028 = vadd.s32 %v4027, %v4025
    %s4029 = scalar_lea.vmem %s15, 22
    %4030 = vst.msk [vmem:[%s4029] sm:$0x3] %vm559, %v4028
    %v4031 = vsub.f32 0.0, %v4011
    %s4032 = scalar_lea.vmem %s16, 22
    %4033 = vst.msk [vmem:[%s4032] sm:$0x3] %vm559, %v4031
    %4034 = vset.pattern.permute.xlu0 13
    %4035 = vperm.xlu0 %4034, %v81
    %v4036 = vpop.permute.xlu0 %4035
    %v4038 = vmul.f32 %v4036, %v719
    %v4039 = vadd.f32 %v3955, %v4038
    %v4040 = vsel %vm723, %v4039, -inf
    %4041 = vmax.xlane.f32.xlu0 %v4040
    %v4042 = vpop.xlane.xlu0 %4041
    %v4043 = vsub.f32 %v4039, %v4042
    %v4044 = vmul.f32 %v4043, 1.442695
    %v4045 = vpow.pop %v4044
    %v4046 = vsel %vm723, %v4045, 0.0
    %4047 = vadd.xlane.f32.xlu0 %v4046
    %v4048 = vpop.xlane.xlu0 %4047
    %v4049 = vlog2.pop %v4048
    %v4050 = vmul.f32 %v4049, 0.6931472
    %vm4051 = vcmp.eq.f32.partialorder %v4039, %v4042
    %v4052 = vsel %vm4051, %v126, 5
    %v4053 = vsel %vm723, %v4052, 2147483647
    %v4054 = vand.u32 %v4053, 65535
    %v4055 = vshra.s32 %v4053, 16
    %v4056 = vcvt.s32.f32 %v4054
    %v4057 = vcvt.s32.f32 %v4055
    %4058 = vmin.xlane.f32.xlu0 %v4057
    %v4059 = vpop.xlane.xlu0 %4058
    %vm4060 = vcmp.eq.f32.partialorder %v4057, %v4059
    %v4061 = vsel %vm4060, %v4056, inf
    %4062 = vmin.xlane.f32.xlu0 %v4061
    %v4063 = vpop.xlane.xlu0 %4062
    %v4064 = vcvt.f32.s32 %v4063
    %v4065 = vcvt.f32.s32 %v4059
    %v4066 = vshll.u32 %v4065, 16
    %v4067 = vadd.s32 %v4066, %v4064
    %s4068 = scalar_lea.vmem %s15, 34
    %4069 = vst.msk [vmem:[%s4068] sm:$0x3] %vm559, %v4067
    %v4070 = vsub.f32 0.0, %v4050
    %s4071 = scalar_lea.vmem %s16, 34
    %4072 = vst.msk [vmem:[%s4071] sm:$0x3] %vm559, %v4070
    // Predicated region
    $region66: #{policy_act.1} parent=1 // pred_check
      _
    $region67: #{policy_act.1} parent=1 // pred_check_branch
      %4074 = sbr.rel (0) target = $region69
    $region68: #{policy_act.1} parent=1 // pred_region
      _
    $region69: #{policy_act.1} parent=1 // pred_fallthru
      _
    // Predicated region
    $region70: #{policy_act.1} parent=1 // pred_check
      _
    $region71: #{policy_act.1} parent=1 // pred_check_branch
      %4076 = sbr.rel (0) target = $region73
    $region72: #{policy_act.1} parent=1 // pred_region
      _
    $region73: #{policy_act.1} parent=1 // pred_fallthru
      _
    // Predicated region
    $region74: #{policy_act.1} parent=1 // pred_check
      _
    $region75: #{policy_act.1} parent=1 // pred_check_branch
      %4078 = sbr.rel (0) target = $region77
    $region76: #{policy_act.1} parent=1 // pred_region
      _
    $region77: #{policy_act.1} parent=1 // pred_fallthru
      _
    // Predicated region
    $region78: #{policy_act.1} parent=1 // pred_check
      _
    $region79: #{policy_act.1} parent=1 // pred_check_branch
      %4080 = sbr.rel (0) target = $region81
    $region80: #{policy_act.1} parent=1 // pred_region
      _
    $region81: #{policy_act.1} parent=1 // pred_fallthru
      _
    // Predicated region
    $region82: #{policy_act.1} parent=1 // pred_check
      _
    $region83: #{policy_act.1} parent=1 // pred_check_branch
      %4082 = sbr.rel (0) target = $region85
    $region84: #{policy_act.1} parent=1 // pred_region
      _
    $region85: #{policy_act.1} parent=1 // pred_fallthru
      _
    // Predicated region
    $region86: #{policy_act.1} parent=1 // pred_check
      _
    $region87: #{policy_act.1} parent=1 // pred_check_branch
      %4084 = sbr.rel (0) target = $region89
    $region88: #{policy_act.1} parent=1 // pred_region
      _
    $region89: #{policy_act.1} parent=1 // pred_fallthru
      _
    %4085 = vsyncpa [#allocation4], 1
    %4086 = vsyncpa [#allocation6], 1

</llo_original>
